<compile_context>
chip_gen: v7x
topology: tpu7x:2x2x1
jax: 0.10.0
libtpu: 0.0.40
codegen_flags: <defaults>
</compile_context>

<pallas_src>
import functools

import jax
import jax.numpy as jnp
from jax.experimental import pallas as pl
from jax.experimental.pallas import tpu as pltpu

NEG_SLOPE = 0.01  # nn.LeakyReLU() default negative_slope


def _leaky_relu(x):
    # Exactly LeakyReLU for 0 < slope < 1; mul+max (2 VPU ops) vs cmp+sel+mul.
    return jnp.maximum(x, NEG_SLOPE * x)


def parallel_decoder_kernel(latent_ref, w1_ref, w2_ref, b2_ref, w3_ref, b3_ref,
                            out_ref):
    """One grid step = one tile of T wavelength bins (bins on lanes).

    latent_ref : (B, D0+1)     latent with a trailing ones column (bias fold)
    w1_ref     : (D0+1, D1*T)  column = e*T + t; last row holds b1 (f32 or bf16)
    w2_ref     : (D1*D2, T)    row = e*D2 + f   (flattened: no 10->16 pad)
    b2_ref     : (D2, T)
    w3_ref     : (D2, T)
    b3_ref     : (1, T)
    out_ref    : (B, T)
    """
    d2, T = b2_ref.shape
    d1 = w2_ref.shape[0] // d2

    # ---- Layer 1: single lane-dense MXU matmul (bias folded into K) ---------
    x = latent_ref[...].astype(w1_ref.dtype)                    # (B, D0+1)
    h1 = jnp.dot(x, w1_ref[...], preferred_element_type=jnp.float32)
    h1 = _leaky_relu(h1)                                        # (B, D1*T)

    # ---- Layer 2: per-bin D1 -> D2 as lane-parallel VPU FMAs ----------------
    # Accumulators are seeded with the bias row; weight rows are loaded
    # directly from the refs (one vld each) and broadcast in the FMA.
    acc = [b2_ref[f:f + 1, :] for f in range(d2)]               # (1, T) rows
    for e in range(d1):                                         # unrolled, D1=10
        h1_e = h1[:, e * T:(e + 1) * T]                         # (B, T) lane slice
        for f in range(d2):
            r = e * d2 + f
            acc[f] = acc[f] + h1_e * w2_ref[r:r + 1, :]
    h2 = [_leaky_relu(a) for a in acc]                          # (B, T) each

    # ---- Layer 3: per-bin D2 -> 1; bias seeds the result --------------------
    y = b3_ref[...]                                             # (1, T)
    for f in range(d2):
        y = y + h2[f] * w3_ref[f:f + 1, :]
    out_ref[...] = y.astype(out_ref.dtype)                      # (B, T)


def _prelayout_params(params, n_bins, bin_tile, w1_dtype):
    """Re-lay-out grouped-Conv1d parameters so bins sit on the lane axis,
    layer 1 becomes one 2-D matmul with the bias folded in, and W2 is a flat
    2-D slab.  One-time transform (cache the result in real use)."""
    w1, b1, w2, b2, w3, b3 = params
    T = bin_tile
    nblk = n_bins // T
    d1, d0 = w1.shape[1], w1.shape[2]
    d2 = w2.shape[1]

    # w1p[k, i*D1*T + e*T + t] = w1[i*T + t, e, k]; extra row k = D0 holds b1.
    w1core = (jnp.transpose(w1, (2, 1, 0))          # (D0, D1, n_bins)
                 .reshape(d0, d1, nblk, T)
                 .transpose(0, 2, 1, 3)             # (D0, nblk, D1, T)
                 .reshape(d0, nblk * d1 * T))
    b1row = (b1.T                                   # (D1, n_bins)
                .reshape(d1, nblk, T)
                .transpose(1, 0, 2)                 # (nblk, D1, T)
                .reshape(1, nblk * d1 * T))
    w1p = jnp.concatenate([w1core, b1row], axis=0).astype(w1_dtype)  # (D0+1, .)

    # Flattened W2: row = e*D2 + f (kills the 10->16 sublane padding per e).
    w2p = jnp.transpose(w2, (2, 1, 0)).reshape(d1 * d2, n_bins)
    b2p = b2.T                                      # (D2, n_bins)
    w3p = w3.reshape(n_bins, d2).T                  # (D2, n_bins)
    b3p = b3.reshape(1, n_bins)                     # (1, n_bins)
    return w1p, w2p, b2p, w3p, b3p


def _default_bin_tile(n_bins):
    """Lane-dense tile choice: one tile on single-TC parts (v5e/v6e) to avoid
    per-grid-step overhead; >=2 tiles on v7x so dimension_semantics=('parallel',)
    feeds both TensorCores."""
    try:
        kind = jax.devices()[0].device_kind.lower()
    except Exception:  # pragma: no cover - defensive
        kind = ""
    two_tensorcores = "v7" in kind

    def lane_dense(t):
        return t >= 128 and t % 128 == 0 and n_bins % t == 0

    tile = n_bins
    if two_tensorcores and lane_dense(n_bins // 2):
        tile = n_bins // 2
    # Cap tile width so per-tile live state stays modest; bigger buys nothing.
    while tile > 1024 and lane_dense(tile // 2):
        tile //= 2
    return tile


def parallel_decoder_pallas(latent, params, *, n_bins, bin_tile=None,
                            w1_dtype=jnp.bfloat16):
    """latent: (B, D0) float32. Returns (B, n_bins) (matches torch.squeeze).

    w1_dtype: storage dtype of the layer-1 weight slab (MXU operand).  bf16
    halves the dominant HBM->VMEM traffic; accumulation is always f32.  Layer
    2/3 weights stay f32 (VPU path; v5e has no bf16 VALU)."""
    B, D0 = latent.shape
    w1, b1, w2, b2, w3, b3 = params
    D1, D2 = w1.shape[1], w2.shape[1]

    if bin_tile is None:
        bin_tile = _default_bin_tile(n_bins)
    assert n_bins % bin_tile == 0
    # Lane-dense tiles: a multiple of 128, or the whole (full-dim) bin axis.
    assert bin_tile % 128 == 0 or bin_tile == n_bins

    T = bin_tile
    nblk = n_bins // T
    w1p, w2p, b2p, w3p, b3p = _prelayout_params(params, n_bins, T, w1_dtype)

    # Fold b1 into the matmul: append a ones column to the latent (K: D0 -> D0+1).
    x_aug = jnp.concatenate(
        [latent, jnp.ones((B, 1), latent.dtype)], axis=1).astype(w1_dtype)

    out = pl.pallas_call(
        parallel_decoder_kernel,
        out_shape=jax.ShapeDtypeStruct((B, n_bins), jnp.float32),
        grid_spec=pltpu.PrefetchScalarGridSpec(
            num_scalar_prefetch=0,
            grid=(nblk,),
            in_specs=[
                pl.BlockSpec((B, D0 + 1), lambda i: (0, 0)),        # latent (shared)
                pl.BlockSpec((D0 + 1, D1 * T), lambda i: (0, i)),   # W1 slab (+b1 row)
                pl.BlockSpec((D1 * D2, T), lambda i: (0, i)),       # W2 (flat)
                pl.BlockSpec((D2, T), lambda i: (0, i)),            # b2
                pl.BlockSpec((D2, T), lambda i: (0, i)),            # w3
                pl.BlockSpec((1, T), lambda i: (0, i)),             # b3
            ],
            out_specs=pl.BlockSpec((B, T), lambda i: (0, i)),       # lane-dense output
        ),
        compiler_params=pltpu.CompilerParams(
            dimension_semantics=("parallel",)),
    )(x_aug, w1p, w2p, b2p, w3p, b3p)
    return out


def parallel_decoder_ref(latent, params):
    """Pure-JAX reference (mirrors the PyTorch grouped 1x1-conv MLP stack)."""
    w1, b1, w2, b2, w3, b3 = params

    def lrelu(x):
        return jnp.where(x >= 0, x, NEG_SLOPE * x)

    x = latent.astype(jnp.float32)
    h = jnp.einsum('bd,ned->nbe', x, w1) + b1[:, None, :]
    h = lrelu(h)
    h = jnp.einsum('nbe,nfe->nbf', h, w2) + b2[:, None, :]
    h = lrelu(h)
    y = jnp.einsum('nbf,ngf->nbg', h, w3) + b3[:, None, :]
    return y[:, :, 0].T  # (B, n_bins)


def init_params(key, structure, n_bins):
    """Deterministic init; shapes follow grouped Conv1d(kernel_size=1, groups=n_bins):
    per-bin weight (D_out, D_in) stored as (n_bins, D_out, D_in)."""
    d0, d1, d2, d3 = structure
    ks = jax.random.split(key, 6)

    def uni(k, shape, fan_in):
        bound = 1.0 / jnp.sqrt(jnp.float32(fan_in))
        return jax.random.uniform(k, shape, jnp.float32, -bound, bound)

    w1 = uni(ks[0], (n_bins, d1, d0), d0)
    b1 = uni(ks[1], (n_bins, d1), d0)
    w2 = uni(ks[2], (n_bins, d2, d1), d1)
    b2 = uni(ks[3], (n_bins, d2), d1)
    w3 = uni(ks[4], (n_bins, d3, d2), d2)
    b3 = uni(ks[5], (n_bins, d3), d2)
    return (w1, b1, w2, b2, w3, b3)


if __name__ == "__main__":
    # Module-consistent small shapes; n_bins=256 keeps the bin/lane axis dense
    # (the auto tile picker uses 1 tile on v5e/v6e, 2 tiles on v7x).
    structure = [22, 10, 10, 1]
    n_bins = 256
    batch = 8

    key = jax.random.PRNGKey(0)
    k_lat, k_par = jax.random.split(key)
    latent = jax.random.normal(k_lat, (batch, structure[0]), jnp.float32)
    params = init_params(k_par, structure, n_bins)
    ref = parallel_decoder_ref(latent, params)

    # --- f32 weight slab, auto tile (per-chip default grid) ------------------
    # Tolerance note: layer 1 uses the MXU at default matmul precision and the
    # bias is folded into the contraction, so (on chips where default f32 dots
    # truncate operands to bf16) b1 sees one bf16 rounding the einsum reference
    # does not; everything else is f32-exact.
    fn_f32 = jax.jit(functools.partial(parallel_decoder_pallas, n_bins=n_bins,
                                       w1_dtype=jnp.float32))
    out_f32 = jax.block_until_ready(fn_f32(latent, params))
    assert out_f32.shape == (batch, n_bins), out_f32.shape
    assert jnp.allclose(out_f32, ref, rtol=5e-3, atol=5e-3), \
        f"f32 path max err {jnp.max(jnp.abs(out_f32 - ref))}"

    # --- bf16 weight slab (perf default), explicit 2-tile grid ---------------
    # Tight structural check: compare against the reference evaluated with the
    # layer-1 inputs rounded to bf16 (exactly what the kernel's MXU operands
    # see); layers 2/3 are f32 in both, so this validates all layout/indexing.
    fn_bf16 = jax.jit(functools.partial(parallel_decoder_pallas, n_bins=n_bins,
                                        bin_tile=128))
    out_bf16 = jax.block_until_ready(fn_bf16(latent, params))
    assert out_bf16.shape == (batch, n_bins), out_bf16.shape

    w1, b1, w2, b2, w3, b3 = params
    params_trunc = (w1.astype(jnp.bfloat16).astype(jnp.float32),
                    b1.astype(jnp.bfloat16).astype(jnp.float32),
                    w2, b2, w3, b3)
    latent_trunc = latent.astype(jnp.bfloat16).astype(jnp.float32)
    ref_trunc = parallel_decoder_ref(latent_trunc, params_trunc)
    assert jnp.allclose(out_bf16, ref_trunc, rtol=1e-4, atol=1e-4), \
        f"bf16 path max err {jnp.max(jnp.abs(out_bf16 - ref_trunc))}"

    print("KERNEL_OK")
</pallas_src>

<mosaic_0001>
module attributes {stable_mosaic.version = 11 : i64} {
  func.func @parallel_decoder_kernel(%arg0: i32, %arg1: memref<8x23xf32, #tpu.memory_space<vmem>>, %arg2: memref<23x2560xf32, #tpu.memory_space<vmem>>, %arg3: memref<100x256xf32, #tpu.memory_space<vmem>>, %arg4: memref<10x256xf32, #tpu.memory_space<vmem>>, %arg5: memref<10x256xf32, #tpu.memory_space<vmem>>, %arg6: memref<1x256xf32, #tpu.memory_space<vmem>>, %arg7: memref<8x256xf32, #tpu.memory_space<vmem>>) attributes {dimension_semantics = [#tpu.dimension_semantics<parallel>], iteration_bounds = array<i64: 1>, scalar_prefetch = 0 : i64, scratch_operands = 0 : i64, tpu.core_type = #tpu.core_type<tc>, window_params = [{pipeline_mode = #tpu.pipeline_mode<synchronous>, transform_indices = @transform_0, window_bounds = array<i64: 8, 23>}, {transform_indices = @transform_1, window_bounds = array<i64: 23, 2560>}, {transform_indices = @transform_2, window_bounds = array<i64: 100, 256>}, {transform_indices = @transform_3, window_bounds = array<i64: 10, 256>}, {transform_indices = @transform_4, window_bounds = array<i64: 10, 256>}, {transform_indices = @transform_5, window_bounds = array<i64: 1, 256>}, {transform_indices = @transform_6, window_bounds = array<i64: 8, 256>}]} {
    %c0 = arith.constant 0 : index
    %c0_0 = arith.constant 0 : index
    %0 = vector.load %arg1[%c0, %c0_0] : memref<8x23xf32, #tpu.memory_space<vmem>>, vector<8x23xf32>
    %c0_1 = arith.constant 0 : index
    %c0_2 = arith.constant 0 : index
    %1 = vector.load %arg2[%c0_1, %c0_2] : memref<23x2560xf32, #tpu.memory_space<vmem>>, vector<23x2560xf32>
    %cst = arith.constant dense<0.000000e+00> : vector<8x2560xf32>
    %2 = tpu.matmul %0, %1, %cst {dimension_numbers = #tpu.dot_dimension_numbers<[1], [0], [0], [1], [0, 0, 1, 1], [], []>} : vector<8x23xf32>, vector<23x2560xf32>, vector<8x2560xf32> -> vector<8x2560xf32>
    %cst_3 = arith.constant 0.00999999977 : f32
    %3 = vector.broadcast %cst_3 : f32 to vector<8x2560xf32>
    %4 = arith.mulf %3, %2 : vector<8x2560xf32>
    %5 = arith.maximumf %2, %4 : vector<8x2560xf32>
    %c0_4 = arith.constant 0 : index
    %c0_5 = arith.constant 0 : index
    %6 = vector.load %arg4[%c0_4, %c0_5] : memref<10x256xf32, #tpu.memory_space<vmem>>, vector<1x256xf32>
    %c1 = arith.constant 1 : index
    %c0_6 = arith.constant 0 : index
    %7 = vector.load %arg4[%c1, %c0_6] : memref<10x256xf32, #tpu.memory_space<vmem>>, vector<1x256xf32>
    %c2 = arith.constant 2 : index
    %c0_7 = arith.constant 0 : index
    %8 = vector.load %arg4[%c2, %c0_7] : memref<10x256xf32, #tpu.memory_space<vmem>>, vector<1x256xf32>
    %c3 = arith.constant 3 : index
    %c0_8 = arith.constant 0 : index
    %9 = vector.load %arg4[%c3, %c0_8] : memref<10x256xf32, #tpu.memory_space<vmem>>, vector<1x256xf32>
    %c4 = arith.constant 4 : index
    %c0_9 = arith.constant 0 : index
    %10 = vector.load %arg4[%c4, %c0_9] : memref<10x256xf32, #tpu.memory_space<vmem>>, vector<1x256xf32>
    %c5 = arith.constant 5 : index
    %c0_10 = arith.constant 0 : index
    %11 = vector.load %arg4[%c5, %c0_10] : memref<10x256xf32, #tpu.memory_space<vmem>>, vector<1x256xf32>
    %c6 = arith.constant 6 : index
    %c0_11 = arith.constant 0 : index
    %12 = vector.load %arg4[%c6, %c0_11] : memref<10x256xf32, #tpu.memory_space<vmem>>, vector<1x256xf32>
    %c7 = arith.constant 7 : index
    %c0_12 = arith.constant 0 : index
    %13 = vector.load %arg4[%c7, %c0_12] : memref<10x256xf32, #tpu.memory_space<vmem>>, vector<1x256xf32>
    %c8 = arith.constant 8 : index
    %c0_13 = arith.constant 0 : index
    %14 = vector.load %arg4[%c8, %c0_13] : memref<10x256xf32, #tpu.memory_space<vmem>>, vector<1x256xf32>
    %c9 = arith.constant 9 : index
    %c0_14 = arith.constant 0 : index
    %15 = vector.load %arg4[%c9, %c0_14] : memref<10x256xf32, #tpu.memory_space<vmem>>, vector<1x256xf32>
    %16 = vector.extract_strided_slice %5 {offsets = [0, 0], sizes = [8, 256], strides = [1, 1]} : vector<8x2560xf32> to vector<8x256xf32>
    %c0_15 = arith.constant 0 : index
    %c0_16 = arith.constant 0 : index
    %17 = vector.load %arg3[%c0_15, %c0_16] : memref<100x256xf32, #tpu.memory_space<vmem>>, vector<1x256xf32>
    %18 = vector.broadcast %17 : vector<1x256xf32> to vector<8x256xf32>
    %19 = arith.mulf %16, %18 : vector<8x256xf32>
    %20 = vector.broadcast %6 : vector<1x256xf32> to vector<8x256xf32>
    %21 = arith.addf %20, %19 : vector<8x256xf32>
    %c1_17 = arith.constant 1 : index
    %c0_18 = arith.constant 0 : index
    %22 = vector.load %arg3[%c1_17, %c0_18] : memref<100x256xf32, #tpu.memory_space<vmem>>, vector<1x256xf32>
    %23 = vector.broadcast %22 : vector<1x256xf32> to vector<8x256xf32>
    %24 = arith.mulf %16, %23 : vector<8x256xf32>
    %25 = vector.broadcast %7 : vector<1x256xf32> to vector<8x256xf32>
    %26 = arith.addf %25, %24 : vector<8x256xf32>
    %c2_19 = arith.constant 2 : index
    %c0_20 = arith.constant 0 : index
    %27 = vector.load %arg3[%c2_19, %c0_20] : memref<100x256xf32, #tpu.memory_space<vmem>>, vector<1x256xf32>
    %28 = vector.broadcast %27 : vector<1x256xf32> to vector<8x256xf32>
    %29 = arith.mulf %16, %28 : vector<8x256xf32>
    %30 = vector.broadcast %8 : vector<1x256xf32> to vector<8x256xf32>
    %31 = arith.addf %30, %29 : vector<8x256xf32>
    %c3_21 = arith.constant 3 : index
    %c0_22 = arith.constant 0 : index
    %32 = vector.load %arg3[%c3_21, %c0_22] : memref<100x256xf32, #tpu.memory_space<vmem>>, vector<1x256xf32>
    %33 = vector.broadcast %32 : vector<1x256xf32> to vector<8x256xf32>
    %34 = arith.mulf %16, %33 : vector<8x256xf32>
    %35 = vector.broadcast %9 : vector<1x256xf32> to vector<8x256xf32>
    %36 = arith.addf %35, %34 : vector<8x256xf32>
    %c4_23 = arith.constant 4 : index
    %c0_24 = arith.constant 0 : index
    %37 = vector.load %arg3[%c4_23, %c0_24] : memref<100x256xf32, #tpu.memory_space<vmem>>, vector<1x256xf32>
    %38 = vector.broadcast %37 : vector<1x256xf32> to vector<8x256xf32>
    %39 = arith.mulf %16, %38 : vector<8x256xf32>
    %40 = vector.broadcast %10 : vector<1x256xf32> to vector<8x256xf32>
    %41 = arith.addf %40, %39 : vector<8x256xf32>
    %c5_25 = arith.constant 5 : index
    %c0_26 = arith.constant 0 : index
    %42 = vector.load %arg3[%c5_25, %c0_26] : memref<100x256xf32, #tpu.memory_space<vmem>>, vector<1x256xf32>
    %43 = vector.broadcast %42 : vector<1x256xf32> to vector<8x256xf32>
    %44 = arith.mulf %16, %43 : vector<8x256xf32>
    %45 = vector.broadcast %11 : vector<1x256xf32> to vector<8x256xf32>
    %46 = arith.addf %45, %44 : vector<8x256xf32>
    %c6_27 = arith.constant 6 : index
    %c0_28 = arith.constant 0 : index
    %47 = vector.load %arg3[%c6_27, %c0_28] : memref<100x256xf32, #tpu.memory_space<vmem>>, vector<1x256xf32>
    %48 = vector.broadcast %47 : vector<1x256xf32> to vector<8x256xf32>
    %49 = arith.mulf %16, %48 : vector<8x256xf32>
    %50 = vector.broadcast %12 : vector<1x256xf32> to vector<8x256xf32>
    %51 = arith.addf %50, %49 : vector<8x256xf32>
    %c7_29 = arith.constant 7 : index
    %c0_30 = arith.constant 0 : index
    %52 = vector.load %arg3[%c7_29, %c0_30] : memref<100x256xf32, #tpu.memory_space<vmem>>, vector<1x256xf32>
    %53 = vector.broadcast %52 : vector<1x256xf32> to vector<8x256xf32>
    %54 = arith.mulf %16, %53 : vector<8x256xf32>
    %55 = vector.broadcast %13 : vector<1x256xf32> to vector<8x256xf32>
    %56 = arith.addf %55, %54 : vector<8x256xf32>
    %c8_31 = arith.constant 8 : index
    %c0_32 = arith.constant 0 : index
    %57 = vector.load %arg3[%c8_31, %c0_32] : memref<100x256xf32, #tpu.memory_space<vmem>>, vector<1x256xf32>
    %58 = vector.broadcast %57 : vector<1x256xf32> to vector<8x256xf32>
    %59 = arith.mulf %16, %58 : vector<8x256xf32>
    %60 = vector.broadcast %14 : vector<1x256xf32> to vector<8x256xf32>
    %61 = arith.addf %60, %59 : vector<8x256xf32>
    %c9_33 = arith.constant 9 : index
    %c0_34 = arith.constant 0 : index
    %62 = vector.load %arg3[%c9_33, %c0_34] : memref<100x256xf32, #tpu.memory_space<vmem>>, vector<1x256xf32>
    %63 = vector.broadcast %62 : vector<1x256xf32> to vector<8x256xf32>
    %64 = arith.mulf %16, %63 : vector<8x256xf32>
    %65 = vector.broadcast %15 : vector<1x256xf32> to vector<8x256xf32>
    %66 = arith.addf %65, %64 : vector<8x256xf32>
    %67 = vector.extract_strided_slice %5 {offsets = [0, 256], sizes = [8, 256], strides = [1, 1]} : vector<8x2560xf32> to vector<8x256xf32>
    %c10 = arith.constant 10 : index
    %c0_35 = arith.constant 0 : index
    %68 = vector.load %arg3[%c10, %c0_35] : memref<100x256xf32, #tpu.memory_space<vmem>>, vector<1x256xf32>
    %69 = vector.broadcast %68 : vector<1x256xf32> to vector<8x256xf32>
    %70 = arith.mulf %67, %69 : vector<8x256xf32>
    %71 = arith.addf %21, %70 : vector<8x256xf32>
    %c11 = arith.constant 11 : index
    %c0_36 = arith.constant 0 : index
    %72 = vector.load %arg3[%c11, %c0_36] : memref<100x256xf32, #tpu.memory_space<vmem>>, vector<1x256xf32>
    %73 = vector.broadcast %72 : vector<1x256xf32> to vector<8x256xf32>
    %74 = arith.mulf %67, %73 : vector<8x256xf32>
    %75 = arith.addf %26, %74 : vector<8x256xf32>
    %c12 = arith.constant 12 : index
    %c0_37 = arith.constant 0 : index
    %76 = vector.load %arg3[%c12, %c0_37] : memref<100x256xf32, #tpu.memory_space<vmem>>, vector<1x256xf32>
    %77 = vector.broadcast %76 : vector<1x256xf32> to vector<8x256xf32>
    %78 = arith.mulf %67, %77 : vector<8x256xf32>
    %79 = arith.addf %31, %78 : vector<8x256xf32>
    %c13 = arith.constant 13 : index
    %c0_38 = arith.constant 0 : index
    %80 = vector.load %arg3[%c13, %c0_38] : memref<100x256xf32, #tpu.memory_space<vmem>>, vector<1x256xf32>
    %81 = vector.broadcast %80 : vector<1x256xf32> to vector<8x256xf32>
    %82 = arith.mulf %67, %81 : vector<8x256xf32>
    %83 = arith.addf %36, %82 : vector<8x256xf32>
    %c14 = arith.constant 14 : index
    %c0_39 = arith.constant 0 : index
    %84 = vector.load %arg3[%c14, %c0_39] : memref<100x256xf32, #tpu.memory_space<vmem>>, vector<1x256xf32>
    %85 = vector.broadcast %84 : vector<1x256xf32> to vector<8x256xf32>
    %86 = arith.mulf %67, %85 : vector<8x256xf32>
    %87 = arith.addf %41, %86 : vector<8x256xf32>
    %c15 = arith.constant 15 : index
    %c0_40 = arith.constant 0 : index
    %88 = vector.load %arg3[%c15, %c0_40] : memref<100x256xf32, #tpu.memory_space<vmem>>, vector<1x256xf32>
    %89 = vector.broadcast %88 : vector<1x256xf32> to vector<8x256xf32>
    %90 = arith.mulf %67, %89 : vector<8x256xf32>
    %91 = arith.addf %46, %90 : vector<8x256xf32>
    %c16 = arith.constant 16 : index
    %c0_41 = arith.constant 0 : index
    %92 = vector.load %arg3[%c16, %c0_41] : memref<100x256xf32, #tpu.memory_space<vmem>>, vector<1x256xf32>
    %93 = vector.broadcast %92 : vector<1x256xf32> to vector<8x256xf32>
    %94 = arith.mulf %67, %93 : vector<8x256xf32>
    %95 = arith.addf %51, %94 : vector<8x256xf32>
    %c17 = arith.constant 17 : index
    %c0_42 = arith.constant 0 : index
    %96 = vector.load %arg3[%c17, %c0_42] : memref<100x256xf32, #tpu.memory_space<vmem>>, vector<1x256xf32>
    %97 = vector.broadcast %96 : vector<1x256xf32> to vector<8x256xf32>
    %98 = arith.mulf %67, %97 : vector<8x256xf32>
    %99 = arith.addf %56, %98 : vector<8x256xf32>
    %c18 = arith.constant 18 : index
    %c0_43 = arith.constant 0 : index
    %100 = vector.load %arg3[%c18, %c0_43] : memref<100x256xf32, #tpu.memory_space<vmem>>, vector<1x256xf32>
    %101 = vector.broadcast %100 : vector<1x256xf32> to vector<8x256xf32>
    %102 = arith.mulf %67, %101 : vector<8x256xf32>
    %103 = arith.addf %61, %102 : vector<8x256xf32>
    %c19 = arith.constant 19 : index
    %c0_44 = arith.constant 0 : index
    %104 = vector.load %arg3[%c19, %c0_44] : memref<100x256xf32, #tpu.memory_space<vmem>>, vector<1x256xf32>
    %105 = vector.broadcast %104 : vector<1x256xf32> to vector<8x256xf32>
    %106 = arith.mulf %67, %105 : vector<8x256xf32>
    %107 = arith.addf %66, %106 : vector<8x256xf32>
    %108 = vector.extract_strided_slice %5 {offsets = [0, 512], sizes = [8, 256], strides = [1, 1]} : vector<8x2560xf32> to vector<8x256xf32>
    %c20 = arith.constant 20 : index
    %c0_45 = arith.constant 0 : index
    %109 = vector.load %arg3[%c20, %c0_45] : memref<100x256xf32, #tpu.memory_space<vmem>>, vector<1x256xf32>
    %110 = vector.broadcast %109 : vector<1x256xf32> to vector<8x256xf32>
    %111 = arith.mulf %108, %110 : vector<8x256xf32>
    %112 = arith.addf %71, %111 : vector<8x256xf32>
    %c21 = arith.constant 21 : index
    %c0_46 = arith.constant 0 : index
    %113 = vector.load %arg3[%c21, %c0_46] : memref<100x256xf32, #tpu.memory_space<vmem>>, vector<1x256xf32>
    %114 = vector.broadcast %113 : vector<1x256xf32> to vector<8x256xf32>
    %115 = arith.mulf %108, %114 : vector<8x256xf32>
    %116 = arith.addf %75, %115 : vector<8x256xf32>
    %c22 = arith.constant 22 : index
    %c0_47 = arith.constant 0 : index
    %117 = vector.load %arg3[%c22, %c0_47] : memref<100x256xf32, #tpu.memory_space<vmem>>, vector<1x256xf32>
    %118 = vector.broadcast %117 : vector<1x256xf32> to vector<8x256xf32>
    %119 = arith.mulf %108, %118 : vector<8x256xf32>
    %120 = arith.addf %79, %119 : vector<8x256xf32>
    %c23 = arith.constant 23 : index
    %c0_48 = arith.constant 0 : index
    %121 = vector.load %arg3[%c23, %c0_48] : memref<100x256xf32, #tpu.memory_space<vmem>>, vector<1x256xf32>
    %122 = vector.broadcast %121 : vector<1x256xf32> to vector<8x256xf32>
    %123 = arith.mulf %108, %122 : vector<8x256xf32>
    %124 = arith.addf %83, %123 : vector<8x256xf32>
    %c24 = arith.constant 24 : index
    %c0_49 = arith.constant 0 : index
    %125 = vector.load %arg3[%c24, %c0_49] : memref<100x256xf32, #tpu.memory_space<vmem>>, vector<1x256xf32>
    %126 = vector.broadcast %125 : vector<1x256xf32> to vector<8x256xf32>
    %127 = arith.mulf %108, %126 : vector<8x256xf32>
    %128 = arith.addf %87, %127 : vector<8x256xf32>
    %c25 = arith.constant 25 : index
    %c0_50 = arith.constant 0 : index
    %129 = vector.load %arg3[%c25, %c0_50] : memref<100x256xf32, #tpu.memory_space<vmem>>, vector<1x256xf32>
    %130 = vector.broadcast %129 : vector<1x256xf32> to vector<8x256xf32>
    %131 = arith.mulf %108, %130 : vector<8x256xf32>
    %132 = arith.addf %91, %131 : vector<8x256xf32>
    %c26 = arith.constant 26 : index
    %c0_51 = arith.constant 0 : index
    %133 = vector.load %arg3[%c26, %c0_51] : memref<100x256xf32, #tpu.memory_space<vmem>>, vector<1x256xf32>
    %134 = vector.broadcast %133 : vector<1x256xf32> to vector<8x256xf32>
    %135 = arith.mulf %108, %134 : vector<8x256xf32>
    %136 = arith.addf %95, %135 : vector<8x256xf32>
    %c27 = arith.constant 27 : index
    %c0_52 = arith.constant 0 : index
    %137 = vector.load %arg3[%c27, %c0_52] : memref<100x256xf32, #tpu.memory_space<vmem>>, vector<1x256xf32>
    %138 = vector.broadcast %137 : vector<1x256xf32> to vector<8x256xf32>
    %139 = arith.mulf %108, %138 : vector<8x256xf32>
    %140 = arith.addf %99, %139 : vector<8x256xf32>
    %c28 = arith.constant 28 : index
    %c0_53 = arith.constant 0 : index
    %141 = vector.load %arg3[%c28, %c0_53] : memref<100x256xf32, #tpu.memory_space<vmem>>, vector<1x256xf32>
    %142 = vector.broadcast %141 : vector<1x256xf32> to vector<8x256xf32>
    %143 = arith.mulf %108, %142 : vector<8x256xf32>
    %144 = arith.addf %103, %143 : vector<8x256xf32>
    %c29 = arith.constant 29 : index
    %c0_54 = arith.constant 0 : index
    %145 = vector.load %arg3[%c29, %c0_54] : memref<100x256xf32, #tpu.memory_space<vmem>>, vector<1x256xf32>
    %146 = vector.broadcast %145 : vector<1x256xf32> to vector<8x256xf32>
    %147 = arith.mulf %108, %146 : vector<8x256xf32>
    %148 = arith.addf %107, %147 : vector<8x256xf32>
    %149 = vector.extract_strided_slice %5 {offsets = [0, 768], sizes = [8, 256], strides = [1, 1]} : vector<8x2560xf32> to vector<8x256xf32>
    %c30 = arith.constant 30 : index
    %c0_55 = arith.constant 0 : index
    %150 = vector.load %arg3[%c30, %c0_55] : memref<100x256xf32, #tpu.memory_space<vmem>>, vector<1x256xf32>
    %151 = vector.broadcast %150 : vector<1x256xf32> to vector<8x256xf32>
    %152 = arith.mulf %149, %151 : vector<8x256xf32>
    %153 = arith.addf %112, %152 : vector<8x256xf32>
    %c31 = arith.constant 31 : index
    %c0_56 = arith.constant 0 : index
    %154 = vector.load %arg3[%c31, %c0_56] : memref<100x256xf32, #tpu.memory_space<vmem>>, vector<1x256xf32>
    %155 = vector.broadcast %154 : vector<1x256xf32> to vector<8x256xf32>
    %156 = arith.mulf %149, %155 : vector<8x256xf32>
    %157 = arith.addf %116, %156 : vector<8x256xf32>
    %c32 = arith.constant 32 : index
    %c0_57 = arith.constant 0 : index
    %158 = vector.load %arg3[%c32, %c0_57] : memref<100x256xf32, #tpu.memory_space<vmem>>, vector<1x256xf32>
    %159 = vector.broadcast %158 : vector<1x256xf32> to vector<8x256xf32>
    %160 = arith.mulf %149, %159 : vector<8x256xf32>
    %161 = arith.addf %120, %160 : vector<8x256xf32>
    %c33 = arith.constant 33 : index
    %c0_58 = arith.constant 0 : index
    %162 = vector.load %arg3[%c33, %c0_58] : memref<100x256xf32, #tpu.memory_space<vmem>>, vector<1x256xf32>
    %163 = vector.broadcast %162 : vector<1x256xf32> to vector<8x256xf32>
    %164 = arith.mulf %149, %163 : vector<8x256xf32>
    %165 = arith.addf %124, %164 : vector<8x256xf32>
    %c34 = arith.constant 34 : index
    %c0_59 = arith.constant 0 : index
    %166 = vector.load %arg3[%c34, %c0_59] : memref<100x256xf32, #tpu.memory_space<vmem>>, vector<1x256xf32>
    %167 = vector.broadcast %166 : vector<1x256xf32> to vector<8x256xf32>
    %168 = arith.mulf %149, %167 : vector<8x256xf32>
    %169 = arith.addf %128, %168 : vector<8x256xf32>
    %c35 = arith.constant 35 : index
    %c0_60 = arith.constant 0 : index
    %170 = vector.load %arg3[%c35, %c0_60] : memref<100x256xf32, #tpu.memory_space<vmem>>, vector<1x256xf32>
    %171 = vector.broadcast %170 : vector<1x256xf32> to vector<8x256xf32>
    %172 = arith.mulf %149, %171 : vector<8x256xf32>
    %173 = arith.addf %132, %172 : vector<8x256xf32>
    %c36 = arith.constant 36 : index
    %c0_61 = arith.constant 0 : index
    %174 = vector.load %arg3[%c36, %c0_61] : memref<100x256xf32, #tpu.memory_space<vmem>>, vector<1x256xf32>
    %175 = vector.broadcast %174 : vector<1x256xf32> to vector<8x256xf32>
    %176 = arith.mulf %149, %175 : vector<8x256xf32>
    %177 = arith.addf %136, %176 : vector<8x256xf32>
    %c37 = arith.constant 37 : index
    %c0_62 = arith.constant 0 : index
    %178 = vector.load %arg3[%c37, %c0_62] : memref<100x256xf32, #tpu.memory_space<vmem>>, vector<1x256xf32>
    %179 = vector.broadcast %178 : vector<1x256xf32> to vector<8x256xf32>
    %180 = arith.mulf %149, %179 : vector<8x256xf32>
    %181 = arith.addf %140, %180 : vector<8x256xf32>
    %c38 = arith.constant 38 : index
    %c0_63 = arith.constant 0 : index
    %182 = vector.load %arg3[%c38, %c0_63] : memref<100x256xf32, #tpu.memory_space<vmem>>, vector<1x256xf32>
    %183 = vector.broadcast %182 : vector<1x256xf32> to vector<8x256xf32>
    %184 = arith.mulf %149, %183 : vector<8x256xf32>
    %185 = arith.addf %144, %184 : vector<8x256xf32>
    %c39 = arith.constant 39 : index
    %c0_64 = arith.constant 0 : index
    %186 = vector.load %arg3[%c39, %c0_64] : memref<100x256xf32, #tpu.memory_space<vmem>>, vector<1x256xf32>
    %187 = vector.broadcast %186 : vector<1x256xf32> to vector<8x256xf32>
    %188 = arith.mulf %149, %187 : vector<8x256xf32>
    %189 = arith.addf %148, %188 : vector<8x256xf32>
    %190 = vector.extract_strided_slice %5 {offsets = [0, 1024], sizes = [8, 256], strides = [1, 1]} : vector<8x2560xf32> to vector<8x256xf32>
    %c40 = arith.constant 40 : index
    %c0_65 = arith.constant 0 : index
    %191 = vector.load %arg3[%c40, %c0_65] : memref<100x256xf32, #tpu.memory_space<vmem>>, vector<1x256xf32>
    %192 = vector.broadcast %191 : vector<1x256xf32> to vector<8x256xf32>
    %193 = arith.mulf %190, %192 : vector<8x256xf32>
    %194 = arith.addf %153, %193 : vector<8x256xf32>
    %c41 = arith.constant 41 : index
    %c0_66 = arith.constant 0 : index
    %195 = vector.load %arg3[%c41, %c0_66] : memref<100x256xf32, #tpu.memory_space<vmem>>, vector<1x256xf32>
    %196 = vector.broadcast %195 : vector<1x256xf32> to vector<8x256xf32>
    %197 = arith.mulf %190, %196 : vector<8x256xf32>
    %198 = arith.addf %157, %197 : vector<8x256xf32>
    %c42 = arith.constant 42 : index
    %c0_67 = arith.constant 0 : index
    %199 = vector.load %arg3[%c42, %c0_67] : memref<100x256xf32, #tpu.memory_space<vmem>>, vector<1x256xf32>
    %200 = vector.broadcast %199 : vector<1x256xf32> to vector<8x256xf32>
    %201 = arith.mulf %190, %200 : vector<8x256xf32>
    %202 = arith.addf %161, %201 : vector<8x256xf32>
    %c43 = arith.constant 43 : index
    %c0_68 = arith.constant 0 : index
    %203 = vector.load %arg3[%c43, %c0_68] : memref<100x256xf32, #tpu.memory_space<vmem>>, vector<1x256xf32>
    %204 = vector.broadcast %203 : vector<1x256xf32> to vector<8x256xf32>
    %205 = arith.mulf %190, %204 : vector<8x256xf32>
    %206 = arith.addf %165, %205 : vector<8x256xf32>
    %c44 = arith.constant 44 : index
    %c0_69 = arith.constant 0 : index
    %207 = vector.load %arg3[%c44, %c0_69] : memref<100x256xf32, #tpu.memory_space<vmem>>, vector<1x256xf32>
    %208 = vector.broadcast %207 : vector<1x256xf32> to vector<8x256xf32>
    %209 = arith.mulf %190, %208 : vector<8x256xf32>
    %210 = arith.addf %169, %209 : vector<8x256xf32>
    %c45 = arith.constant 45 : index
    %c0_70 = arith.constant 0 : index
    %211 = vector.load %arg3[%c45, %c0_70] : memref<100x256xf32, #tpu.memory_space<vmem>>, vector<1x256xf32>
    %212 = vector.broadcast %211 : vector<1x256xf32> to vector<8x256xf32>
    %213 = arith.mulf %190, %212 : vector<8x256xf32>
    %214 = arith.addf %173, %213 : vector<8x256xf32>
    %c46 = arith.constant 46 : index
    %c0_71 = arith.constant 0 : index
    %215 = vector.load %arg3[%c46, %c0_71] : memref<100x256xf32, #tpu.memory_space<vmem>>, vector<1x256xf32>
    %216 = vector.broadcast %215 : vector<1x256xf32> to vector<8x256xf32>
    %217 = arith.mulf %190, %216 : vector<8x256xf32>
    %218 = arith.addf %177, %217 : vector<8x256xf32>
    %c47 = arith.constant 47 : index
    %c0_72 = arith.constant 0 : index
    %219 = vector.load %arg3[%c47, %c0_72] : memref<100x256xf32, #tpu.memory_space<vmem>>, vector<1x256xf32>
    %220 = vector.broadcast %219 : vector<1x256xf32> to vector<8x256xf32>
    %221 = arith.mulf %190, %220 : vector<8x256xf32>
    %222 = arith.addf %181, %221 : vector<8x256xf32>
    %c48 = arith.constant 48 : index
    %c0_73 = arith.constant 0 : index
    %223 = vector.load %arg3[%c48, %c0_73] : memref<100x256xf32, #tpu.memory_space<vmem>>, vector<1x256xf32>
    %224 = vector.broadcast %223 : vector<1x256xf32> to vector<8x256xf32>
    %225 = arith.mulf %190, %224 : vector<8x256xf32>
    %226 = arith.addf %185, %225 : vector<8x256xf32>
    %c49 = arith.constant 49 : index
    %c0_74 = arith.constant 0 : index
    %227 = vector.load %arg3[%c49, %c0_74] : memref<100x256xf32, #tpu.memory_space<vmem>>, vector<1x256xf32>
    %228 = vector.broadcast %227 : vector<1x256xf32> to vector<8x256xf32>
    %229 = arith.mulf %190, %228 : vector<8x256xf32>
    %230 = arith.addf %189, %229 : vector<8x256xf32>
    %231 = vector.extract_strided_slice %5 {offsets = [0, 1280], sizes = [8, 256], strides = [1, 1]} : vector<8x2560xf32> to vector<8x256xf32>
    %c50 = arith.constant 50 : index
    %c0_75 = arith.constant 0 : index
    %232 = vector.load %arg3[%c50, %c0_75] : memref<100x256xf32, #tpu.memory_space<vmem>>, vector<1x256xf32>
    %233 = vector.broadcast %232 : vector<1x256xf32> to vector<8x256xf32>
    %234 = arith.mulf %231, %233 : vector<8x256xf32>
    %235 = arith.addf %194, %234 : vector<8x256xf32>
    %c51 = arith.constant 51 : index
    %c0_76 = arith.constant 0 : index
    %236 = vector.load %arg3[%c51, %c0_76] : memref<100x256xf32, #tpu.memory_space<vmem>>, vector<1x256xf32>
    %237 = vector.broadcast %236 : vector<1x256xf32> to vector<8x256xf32>
    %238 = arith.mulf %231, %237 : vector<8x256xf32>
    %239 = arith.addf %198, %238 : vector<8x256xf32>
    %c52 = arith.constant 52 : index
    %c0_77 = arith.constant 0 : index
    %240 = vector.load %arg3[%c52, %c0_77] : memref<100x256xf32, #tpu.memory_space<vmem>>, vector<1x256xf32>
    %241 = vector.broadcast %240 : vector<1x256xf32> to vector<8x256xf32>
    %242 = arith.mulf %231, %241 : vector<8x256xf32>
    %243 = arith.addf %202, %242 : vector<8x256xf32>
    %c53 = arith.constant 53 : index
    %c0_78 = arith.constant 0 : index
    %244 = vector.load %arg3[%c53, %c0_78] : memref<100x256xf32, #tpu.memory_space<vmem>>, vector<1x256xf32>
    %245 = vector.broadcast %244 : vector<1x256xf32> to vector<8x256xf32>
    %246 = arith.mulf %231, %245 : vector<8x256xf32>
    %247 = arith.addf %206, %246 : vector<8x256xf32>
    %c54 = arith.constant 54 : index
    %c0_79 = arith.constant 0 : index
    %248 = vector.load %arg3[%c54, %c0_79] : memref<100x256xf32, #tpu.memory_space<vmem>>, vector<1x256xf32>
    %249 = vector.broadcast %248 : vector<1x256xf32> to vector<8x256xf32>
    %250 = arith.mulf %231, %249 : vector<8x256xf32>
    %251 = arith.addf %210, %250 : vector<8x256xf32>
    %c55 = arith.constant 55 : index
    %c0_80 = arith.constant 0 : index
    %252 = vector.load %arg3[%c55, %c0_80] : memref<100x256xf32, #tpu.memory_space<vmem>>, vector<1x256xf32>
    %253 = vector.broadcast %252 : vector<1x256xf32> to vector<8x256xf32>
    %254 = arith.mulf %231, %253 : vector<8x256xf32>
    %255 = arith.addf %214, %254 : vector<8x256xf32>
    %c56 = arith.constant 56 : index
    %c0_81 = arith.constant 0 : index
    %256 = vector.load %arg3[%c56, %c0_81] : memref<100x256xf32, #tpu.memory_space<vmem>>, vector<1x256xf32>
    %257 = vector.broadcast %256 : vector<1x256xf32> to vector<8x256xf32>
    %258 = arith.mulf %231, %257 : vector<8x256xf32>
    %259 = arith.addf %218, %258 : vector<8x256xf32>
    %c57 = arith.constant 57 : index
    %c0_82 = arith.constant 0 : index
    %260 = vector.load %arg3[%c57, %c0_82] : memref<100x256xf32, #tpu.memory_space<vmem>>, vector<1x256xf32>
    %261 = vector.broadcast %260 : vector<1x256xf32> to vector<8x256xf32>
    %262 = arith.mulf %231, %261 : vector<8x256xf32>
    %263 = arith.addf %222, %262 : vector<8x256xf32>
    %c58 = arith.constant 58 : index
    %c0_83 = arith.constant 0 : index
    %264 = vector.load %arg3[%c58, %c0_83] : memref<100x256xf32, #tpu.memory_space<vmem>>, vector<1x256xf32>
    %265 = vector.broadcast %264 : vector<1x256xf32> to vector<8x256xf32>
    %266 = arith.mulf %231, %265 : vector<8x256xf32>
    %267 = arith.addf %226, %266 : vector<8x256xf32>
    %c59 = arith.constant 59 : index
    %c0_84 = arith.constant 0 : index
    %268 = vector.load %arg3[%c59, %c0_84] : memref<100x256xf32, #tpu.memory_space<vmem>>, vector<1x256xf32>
    %269 = vector.broadcast %268 : vector<1x256xf32> to vector<8x256xf32>
    %270 = arith.mulf %231, %269 : vector<8x256xf32>
    %271 = arith.addf %230, %270 : vector<8x256xf32>
    %272 = vector.extract_strided_slice %5 {offsets = [0, 1536], sizes = [8, 256], strides = [1, 1]} : vector<8x2560xf32> to vector<8x256xf32>
    %c60 = arith.constant 60 : index
    %c0_85 = arith.constant 0 : index
    %273 = vector.load %arg3[%c60, %c0_85] : memref<100x256xf32, #tpu.memory_space<vmem>>, vector<1x256xf32>
    %274 = vector.broadcast %273 : vector<1x256xf32> to vector<8x256xf32>
    %275 = arith.mulf %272, %274 : vector<8x256xf32>
    %276 = arith.addf %235, %275 : vector<8x256xf32>
    %c61 = arith.constant 61 : index
    %c0_86 = arith.constant 0 : index
    %277 = vector.load %arg3[%c61, %c0_86] : memref<100x256xf32, #tpu.memory_space<vmem>>, vector<1x256xf32>
    %278 = vector.broadcast %277 : vector<1x256xf32> to vector<8x256xf32>
    %279 = arith.mulf %272, %278 : vector<8x256xf32>
    %280 = arith.addf %239, %279 : vector<8x256xf32>
    %c62 = arith.constant 62 : index
    %c0_87 = arith.constant 0 : index
    %281 = vector.load %arg3[%c62, %c0_87] : memref<100x256xf32, #tpu.memory_space<vmem>>, vector<1x256xf32>
    %282 = vector.broadcast %281 : vector<1x256xf32> to vector<8x256xf32>
    %283 = arith.mulf %272, %282 : vector<8x256xf32>
    %284 = arith.addf %243, %283 : vector<8x256xf32>
    %c63 = arith.constant 63 : index
    %c0_88 = arith.constant 0 : index
    %285 = vector.load %arg3[%c63, %c0_88] : memref<100x256xf32, #tpu.memory_space<vmem>>, vector<1x256xf32>
    %286 = vector.broadcast %285 : vector<1x256xf32> to vector<8x256xf32>
    %287 = arith.mulf %272, %286 : vector<8x256xf32>
    %288 = arith.addf %247, %287 : vector<8x256xf32>
    %c64 = arith.constant 64 : index
    %c0_89 = arith.constant 0 : index
    %289 = vector.load %arg3[%c64, %c0_89] : memref<100x256xf32, #tpu.memory_space<vmem>>, vector<1x256xf32>
    %290 = vector.broadcast %289 : vector<1x256xf32> to vector<8x256xf32>
    %291 = arith.mulf %272, %290 : vector<8x256xf32>
    %292 = arith.addf %251, %291 : vector<8x256xf32>
    %c65 = arith.constant 65 : index
    %c0_90 = arith.constant 0 : index
    %293 = vector.load %arg3[%c65, %c0_90] : memref<100x256xf32, #tpu.memory_space<vmem>>, vector<1x256xf32>
    %294 = vector.broadcast %293 : vector<1x256xf32> to vector<8x256xf32>
    %295 = arith.mulf %272, %294 : vector<8x256xf32>
    %296 = arith.addf %255, %295 : vector<8x256xf32>
    %c66 = arith.constant 66 : index
    %c0_91 = arith.constant 0 : index
    %297 = vector.load %arg3[%c66, %c0_91] : memref<100x256xf32, #tpu.memory_space<vmem>>, vector<1x256xf32>
    %298 = vector.broadcast %297 : vector<1x256xf32> to vector<8x256xf32>
    %299 = arith.mulf %272, %298 : vector<8x256xf32>
    %300 = arith.addf %259, %299 : vector<8x256xf32>
    %c67 = arith.constant 67 : index
    %c0_92 = arith.constant 0 : index
    %301 = vector.load %arg3[%c67, %c0_92] : memref<100x256xf32, #tpu.memory_space<vmem>>, vector<1x256xf32>
    %302 = vector.broadcast %301 : vector<1x256xf32> to vector<8x256xf32>
    %303 = arith.mulf %272, %302 : vector<8x256xf32>
    %304 = arith.addf %263, %303 : vector<8x256xf32>
    %c68 = arith.constant 68 : index
    %c0_93 = arith.constant 0 : index
    %305 = vector.load %arg3[%c68, %c0_93] : memref<100x256xf32, #tpu.memory_space<vmem>>, vector<1x256xf32>
    %306 = vector.broadcast %305 : vector<1x256xf32> to vector<8x256xf32>
    %307 = arith.mulf %272, %306 : vector<8x256xf32>
    %308 = arith.addf %267, %307 : vector<8x256xf32>
    %c69 = arith.constant 69 : index
    %c0_94 = arith.constant 0 : index
    %309 = vector.load %arg3[%c69, %c0_94] : memref<100x256xf32, #tpu.memory_space<vmem>>, vector<1x256xf32>
    %310 = vector.broadcast %309 : vector<1x256xf32> to vector<8x256xf32>
    %311 = arith.mulf %272, %310 : vector<8x256xf32>
    %312 = arith.addf %271, %311 : vector<8x256xf32>
    %313 = vector.extract_strided_slice %5 {offsets = [0, 1792], sizes = [8, 256], strides = [1, 1]} : vector<8x2560xf32> to vector<8x256xf32>
    %c70 = arith.constant 70 : index
    %c0_95 = arith.constant 0 : index
    %314 = vector.load %arg3[%c70, %c0_95] : memref<100x256xf32, #tpu.memory_space<vmem>>, vector<1x256xf32>
    %315 = vector.broadcast %314 : vector<1x256xf32> to vector<8x256xf32>
    %316 = arith.mulf %313, %315 : vector<8x256xf32>
    %317 = arith.addf %276, %316 : vector<8x256xf32>
    %c71 = arith.constant 71 : index
    %c0_96 = arith.constant 0 : index
    %318 = vector.load %arg3[%c71, %c0_96] : memref<100x256xf32, #tpu.memory_space<vmem>>, vector<1x256xf32>
    %319 = vector.broadcast %318 : vector<1x256xf32> to vector<8x256xf32>
    %320 = arith.mulf %313, %319 : vector<8x256xf32>
    %321 = arith.addf %280, %320 : vector<8x256xf32>
    %c72 = arith.constant 72 : index
    %c0_97 = arith.constant 0 : index
    %322 = vector.load %arg3[%c72, %c0_97] : memref<100x256xf32, #tpu.memory_space<vmem>>, vector<1x256xf32>
    %323 = vector.broadcast %322 : vector<1x256xf32> to vector<8x256xf32>
    %324 = arith.mulf %313, %323 : vector<8x256xf32>
    %325 = arith.addf %284, %324 : vector<8x256xf32>
    %c73 = arith.constant 73 : index
    %c0_98 = arith.constant 0 : index
    %326 = vector.load %arg3[%c73, %c0_98] : memref<100x256xf32, #tpu.memory_space<vmem>>, vector<1x256xf32>
    %327 = vector.broadcast %326 : vector<1x256xf32> to vector<8x256xf32>
    %328 = arith.mulf %313, %327 : vector<8x256xf32>
    %329 = arith.addf %288, %328 : vector<8x256xf32>
    %c74 = arith.constant 74 : index
    %c0_99 = arith.constant 0 : index
    %330 = vector.load %arg3[%c74, %c0_99] : memref<100x256xf32, #tpu.memory_space<vmem>>, vector<1x256xf32>
    %331 = vector.broadcast %330 : vector<1x256xf32> to vector<8x256xf32>
    %332 = arith.mulf %313, %331 : vector<8x256xf32>
    %333 = arith.addf %292, %332 : vector<8x256xf32>
    %c75 = arith.constant 75 : index
    %c0_100 = arith.constant 0 : index
    %334 = vector.load %arg3[%c75, %c0_100] : memref<100x256xf32, #tpu.memory_space<vmem>>, vector<1x256xf32>
    %335 = vector.broadcast %334 : vector<1x256xf32> to vector<8x256xf32>
    %336 = arith.mulf %313, %335 : vector<8x256xf32>
    %337 = arith.addf %296, %336 : vector<8x256xf32>
    %c76 = arith.constant 76 : index
    %c0_101 = arith.constant 0 : index
    %338 = vector.load %arg3[%c76, %c0_101] : memref<100x256xf32, #tpu.memory_space<vmem>>, vector<1x256xf32>
    %339 = vector.broadcast %338 : vector<1x256xf32> to vector<8x256xf32>
    %340 = arith.mulf %313, %339 : vector<8x256xf32>
    %341 = arith.addf %300, %340 : vector<8x256xf32>
    %c77 = arith.constant 77 : index
    %c0_102 = arith.constant 0 : index
    %342 = vector.load %arg3[%c77, %c0_102] : memref<100x256xf32, #tpu.memory_space<vmem>>, vector<1x256xf32>
    %343 = vector.broadcast %342 : vector<1x256xf32> to vector<8x256xf32>
    %344 = arith.mulf %313, %343 : vector<8x256xf32>
    %345 = arith.addf %304, %344 : vector<8x256xf32>
    %c78 = arith.constant 78 : index
    %c0_103 = arith.constant 0 : index
    %346 = vector.load %arg3[%c78, %c0_103] : memref<100x256xf32, #tpu.memory_space<vmem>>, vector<1x256xf32>
    %347 = vector.broadcast %346 : vector<1x256xf32> to vector<8x256xf32>
    %348 = arith.mulf %313, %347 : vector<8x256xf32>
    %349 = arith.addf %308, %348 : vector<8x256xf32>
    %c79 = arith.constant 79 : index
    %c0_104 = arith.constant 0 : index
    %350 = vector.load %arg3[%c79, %c0_104] : memref<100x256xf32, #tpu.memory_space<vmem>>, vector<1x256xf32>
    %351 = vector.broadcast %350 : vector<1x256xf32> to vector<8x256xf32>
    %352 = arith.mulf %313, %351 : vector<8x256xf32>
    %353 = arith.addf %312, %352 : vector<8x256xf32>
    %354 = vector.extract_strided_slice %5 {offsets = [0, 2048], sizes = [8, 256], strides = [1, 1]} : vector<8x2560xf32> to vector<8x256xf32>
    %c80 = arith.constant 80 : index
    %c0_105 = arith.constant 0 : index
    %355 = vector.load %arg3[%c80, %c0_105] : memref<100x256xf32, #tpu.memory_space<vmem>>, vector<1x256xf32>
    %356 = vector.broadcast %355 : vector<1x256xf32> to vector<8x256xf32>
    %357 = arith.mulf %354, %356 : vector<8x256xf32>
    %358 = arith.addf %317, %357 : vector<8x256xf32>
    %c81 = arith.constant 81 : index
    %c0_106 = arith.constant 0 : index
    %359 = vector.load %arg3[%c81, %c0_106] : memref<100x256xf32, #tpu.memory_space<vmem>>, vector<1x256xf32>
    %360 = vector.broadcast %359 : vector<1x256xf32> to vector<8x256xf32>
    %361 = arith.mulf %354, %360 : vector<8x256xf32>
    %362 = arith.addf %321, %361 : vector<8x256xf32>
    %c82 = arith.constant 82 : index
    %c0_107 = arith.constant 0 : index
    %363 = vector.load %arg3[%c82, %c0_107] : memref<100x256xf32, #tpu.memory_space<vmem>>, vector<1x256xf32>
    %364 = vector.broadcast %363 : vector<1x256xf32> to vector<8x256xf32>
    %365 = arith.mulf %354, %364 : vector<8x256xf32>
    %366 = arith.addf %325, %365 : vector<8x256xf32>
    %c83 = arith.constant 83 : index
    %c0_108 = arith.constant 0 : index
    %367 = vector.load %arg3[%c83, %c0_108] : memref<100x256xf32, #tpu.memory_space<vmem>>, vector<1x256xf32>
    %368 = vector.broadcast %367 : vector<1x256xf32> to vector<8x256xf32>
    %369 = arith.mulf %354, %368 : vector<8x256xf32>
    %370 = arith.addf %329, %369 : vector<8x256xf32>
    %c84 = arith.constant 84 : index
    %c0_109 = arith.constant 0 : index
    %371 = vector.load %arg3[%c84, %c0_109] : memref<100x256xf32, #tpu.memory_space<vmem>>, vector<1x256xf32>
    %372 = vector.broadcast %371 : vector<1x256xf32> to vector<8x256xf32>
    %373 = arith.mulf %354, %372 : vector<8x256xf32>
    %374 = arith.addf %333, %373 : vector<8x256xf32>
    %c85 = arith.constant 85 : index
    %c0_110 = arith.constant 0 : index
    %375 = vector.load %arg3[%c85, %c0_110] : memref<100x256xf32, #tpu.memory_space<vmem>>, vector<1x256xf32>
    %376 = vector.broadcast %375 : vector<1x256xf32> to vector<8x256xf32>
    %377 = arith.mulf %354, %376 : vector<8x256xf32>
    %378 = arith.addf %337, %377 : vector<8x256xf32>
    %c86 = arith.constant 86 : index
    %c0_111 = arith.constant 0 : index
    %379 = vector.load %arg3[%c86, %c0_111] : memref<100x256xf32, #tpu.memory_space<vmem>>, vector<1x256xf32>
    %380 = vector.broadcast %379 : vector<1x256xf32> to vector<8x256xf32>
    %381 = arith.mulf %354, %380 : vector<8x256xf32>
    %382 = arith.addf %341, %381 : vector<8x256xf32>
    %c87 = arith.constant 87 : index
    %c0_112 = arith.constant 0 : index
    %383 = vector.load %arg3[%c87, %c0_112] : memref<100x256xf32, #tpu.memory_space<vmem>>, vector<1x256xf32>
    %384 = vector.broadcast %383 : vector<1x256xf32> to vector<8x256xf32>
    %385 = arith.mulf %354, %384 : vector<8x256xf32>
    %386 = arith.addf %345, %385 : vector<8x256xf32>
    %c88 = arith.constant 88 : index
    %c0_113 = arith.constant 0 : index
    %387 = vector.load %arg3[%c88, %c0_113] : memref<100x256xf32, #tpu.memory_space<vmem>>, vector<1x256xf32>
    %388 = vector.broadcast %387 : vector<1x256xf32> to vector<8x256xf32>
    %389 = arith.mulf %354, %388 : vector<8x256xf32>
    %390 = arith.addf %349, %389 : vector<8x256xf32>
    %c89 = arith.constant 89 : index
    %c0_114 = arith.constant 0 : index
    %391 = vector.load %arg3[%c89, %c0_114] : memref<100x256xf32, #tpu.memory_space<vmem>>, vector<1x256xf32>
    %392 = vector.broadcast %391 : vector<1x256xf32> to vector<8x256xf32>
    %393 = arith.mulf %354, %392 : vector<8x256xf32>
    %394 = arith.addf %353, %393 : vector<8x256xf32>
    %395 = vector.extract_strided_slice %5 {offsets = [0, 2304], sizes = [8, 256], strides = [1, 1]} : vector<8x2560xf32> to vector<8x256xf32>
    %c90 = arith.constant 90 : index
    %c0_115 = arith.constant 0 : index
    %396 = vector.load %arg3[%c90, %c0_115] : memref<100x256xf32, #tpu.memory_space<vmem>>, vector<1x256xf32>
    %397 = vector.broadcast %396 : vector<1x256xf32> to vector<8x256xf32>
    %398 = arith.mulf %395, %397 : vector<8x256xf32>
    %399 = arith.addf %358, %398 : vector<8x256xf32>
    %c91 = arith.constant 91 : index
    %c0_116 = arith.constant 0 : index
    %400 = vector.load %arg3[%c91, %c0_116] : memref<100x256xf32, #tpu.memory_space<vmem>>, vector<1x256xf32>
    %401 = vector.broadcast %400 : vector<1x256xf32> to vector<8x256xf32>
    %402 = arith.mulf %395, %401 : vector<8x256xf32>
    %403 = arith.addf %362, %402 : vector<8x256xf32>
    %c92 = arith.constant 92 : index
    %c0_117 = arith.constant 0 : index
    %404 = vector.load %arg3[%c92, %c0_117] : memref<100x256xf32, #tpu.memory_space<vmem>>, vector<1x256xf32>
    %405 = vector.broadcast %404 : vector<1x256xf32> to vector<8x256xf32>
    %406 = arith.mulf %395, %405 : vector<8x256xf32>
    %407 = arith.addf %366, %406 : vector<8x256xf32>
    %c93 = arith.constant 93 : index
    %c0_118 = arith.constant 0 : index
    %408 = vector.load %arg3[%c93, %c0_118] : memref<100x256xf32, #tpu.memory_space<vmem>>, vector<1x256xf32>
    %409 = vector.broadcast %408 : vector<1x256xf32> to vector<8x256xf32>
    %410 = arith.mulf %395, %409 : vector<8x256xf32>
    %411 = arith.addf %370, %410 : vector<8x256xf32>
    %c94 = arith.constant 94 : index
    %c0_119 = arith.constant 0 : index
    %412 = vector.load %arg3[%c94, %c0_119] : memref<100x256xf32, #tpu.memory_space<vmem>>, vector<1x256xf32>
    %413 = vector.broadcast %412 : vector<1x256xf32> to vector<8x256xf32>
    %414 = arith.mulf %395, %413 : vector<8x256xf32>
    %415 = arith.addf %374, %414 : vector<8x256xf32>
    %c95 = arith.constant 95 : index
    %c0_120 = arith.constant 0 : index
    %416 = vector.load %arg3[%c95, %c0_120] : memref<100x256xf32, #tpu.memory_space<vmem>>, vector<1x256xf32>
    %417 = vector.broadcast %416 : vector<1x256xf32> to vector<8x256xf32>
    %418 = arith.mulf %395, %417 : vector<8x256xf32>
    %419 = arith.addf %378, %418 : vector<8x256xf32>
    %c96 = arith.constant 96 : index
    %c0_121 = arith.constant 0 : index
    %420 = vector.load %arg3[%c96, %c0_121] : memref<100x256xf32, #tpu.memory_space<vmem>>, vector<1x256xf32>
    %421 = vector.broadcast %420 : vector<1x256xf32> to vector<8x256xf32>
    %422 = arith.mulf %395, %421 : vector<8x256xf32>
    %423 = arith.addf %382, %422 : vector<8x256xf32>
    %c97 = arith.constant 97 : index
    %c0_122 = arith.constant 0 : index
    %424 = vector.load %arg3[%c97, %c0_122] : memref<100x256xf32, #tpu.memory_space<vmem>>, vector<1x256xf32>
    %425 = vector.broadcast %424 : vector<1x256xf32> to vector<8x256xf32>
    %426 = arith.mulf %395, %425 : vector<8x256xf32>
    %427 = arith.addf %386, %426 : vector<8x256xf32>
    %c98 = arith.constant 98 : index
    %c0_123 = arith.constant 0 : index
    %428 = vector.load %arg3[%c98, %c0_123] : memref<100x256xf32, #tpu.memory_space<vmem>>, vector<1x256xf32>
    %429 = vector.broadcast %428 : vector<1x256xf32> to vector<8x256xf32>
    %430 = arith.mulf %395, %429 : vector<8x256xf32>
    %431 = arith.addf %390, %430 : vector<8x256xf32>
    %c99 = arith.constant 99 : index
    %c0_124 = arith.constant 0 : index
    %432 = vector.load %arg3[%c99, %c0_124] : memref<100x256xf32, #tpu.memory_space<vmem>>, vector<1x256xf32>
    %433 = vector.broadcast %432 : vector<1x256xf32> to vector<8x256xf32>
    %434 = arith.mulf %395, %433 : vector<8x256xf32>
    %435 = arith.addf %394, %434 : vector<8x256xf32>
    %cst_125 = arith.constant 0.00999999977 : f32
    %436 = vector.broadcast %cst_125 : f32 to vector<8x256xf32>
    %437 = arith.mulf %436, %399 : vector<8x256xf32>
    %438 = arith.maximumf %399, %437 : vector<8x256xf32>
    %cst_126 = arith.constant 0.00999999977 : f32
    %439 = vector.broadcast %cst_126 : f32 to vector<8x256xf32>
    %440 = arith.mulf %439, %403 : vector<8x256xf32>
    %441 = arith.maximumf %403, %440 : vector<8x256xf32>
    %cst_127 = arith.constant 0.00999999977 : f32
    %442 = vector.broadcast %cst_127 : f32 to vector<8x256xf32>
    %443 = arith.mulf %442, %407 : vector<8x256xf32>
    %444 = arith.maximumf %407, %443 : vector<8x256xf32>
    %cst_128 = arith.constant 0.00999999977 : f32
    %445 = vector.broadcast %cst_128 : f32 to vector<8x256xf32>
    %446 = arith.mulf %445, %411 : vector<8x256xf32>
    %447 = arith.maximumf %411, %446 : vector<8x256xf32>
    %cst_129 = arith.constant 0.00999999977 : f32
    %448 = vector.broadcast %cst_129 : f32 to vector<8x256xf32>
    %449 = arith.mulf %448, %415 : vector<8x256xf32>
    %450 = arith.maximumf %415, %449 : vector<8x256xf32>
    %cst_130 = arith.constant 0.00999999977 : f32
    %451 = vector.broadcast %cst_130 : f32 to vector<8x256xf32>
    %452 = arith.mulf %451, %419 : vector<8x256xf32>
    %453 = arith.maximumf %419, %452 : vector<8x256xf32>
    %cst_131 = arith.constant 0.00999999977 : f32
    %454 = vector.broadcast %cst_131 : f32 to vector<8x256xf32>
    %455 = arith.mulf %454, %423 : vector<8x256xf32>
    %456 = arith.maximumf %423, %455 : vector<8x256xf32>
    %cst_132 = arith.constant 0.00999999977 : f32
    %457 = vector.broadcast %cst_132 : f32 to vector<8x256xf32>
    %458 = arith.mulf %457, %427 : vector<8x256xf32>
    %459 = arith.maximumf %427, %458 : vector<8x256xf32>
    %cst_133 = arith.constant 0.00999999977 : f32
    %460 = vector.broadcast %cst_133 : f32 to vector<8x256xf32>
    %461 = arith.mulf %460, %431 : vector<8x256xf32>
    %462 = arith.maximumf %431, %461 : vector<8x256xf32>
    %cst_134 = arith.constant 0.00999999977 : f32
    %463 = vector.broadcast %cst_134 : f32 to vector<8x256xf32>
    %464 = arith.mulf %463, %435 : vector<8x256xf32>
    %465 = arith.maximumf %435, %464 : vector<8x256xf32>
    %c0_135 = arith.constant 0 : index
    %c0_136 = arith.constant 0 : index
    %466 = vector.load %arg6[%c0_135, %c0_136] : memref<1x256xf32, #tpu.memory_space<vmem>>, vector<1x256xf32>
    %c0_137 = arith.constant 0 : index
    %c0_138 = arith.constant 0 : index
    %467 = vector.load %arg5[%c0_137, %c0_138] : memref<10x256xf32, #tpu.memory_space<vmem>>, vector<1x256xf32>
    %468 = vector.broadcast %467 : vector<1x256xf32> to vector<8x256xf32>
    %469 = arith.mulf %438, %468 : vector<8x256xf32>
    %470 = vector.broadcast %466 : vector<1x256xf32> to vector<8x256xf32>
    %471 = arith.addf %470, %469 : vector<8x256xf32>
    %c1_139 = arith.constant 1 : index
    %c0_140 = arith.constant 0 : index
    %472 = vector.load %arg5[%c1_139, %c0_140] : memref<10x256xf32, #tpu.memory_space<vmem>>, vector<1x256xf32>
    %473 = vector.broadcast %472 : vector<1x256xf32> to vector<8x256xf32>
    %474 = arith.mulf %441, %473 : vector<8x256xf32>
    %475 = arith.addf %471, %474 : vector<8x256xf32>
    %c2_141 = arith.constant 2 : index
    %c0_142 = arith.constant 0 : index
    %476 = vector.load %arg5[%c2_141, %c0_142] : memref<10x256xf32, #tpu.memory_space<vmem>>, vector<1x256xf32>
    %477 = vector.broadcast %476 : vector<1x256xf32> to vector<8x256xf32>
    %478 = arith.mulf %444, %477 : vector<8x256xf32>
    %479 = arith.addf %475, %478 : vector<8x256xf32>
    %c3_143 = arith.constant 3 : index
    %c0_144 = arith.constant 0 : index
    %480 = vector.load %arg5[%c3_143, %c0_144] : memref<10x256xf32, #tpu.memory_space<vmem>>, vector<1x256xf32>
    %481 = vector.broadcast %480 : vector<1x256xf32> to vector<8x256xf32>
    %482 = arith.mulf %447, %481 : vector<8x256xf32>
    %483 = arith.addf %479, %482 : vector<8x256xf32>
    %c4_145 = arith.constant 4 : index
    %c0_146 = arith.constant 0 : index
    %484 = vector.load %arg5[%c4_145, %c0_146] : memref<10x256xf32, #tpu.memory_space<vmem>>, vector<1x256xf32>
    %485 = vector.broadcast %484 : vector<1x256xf32> to vector<8x256xf32>
    %486 = arith.mulf %450, %485 : vector<8x256xf32>
    %487 = arith.addf %483, %486 : vector<8x256xf32>
    %c5_147 = arith.constant 5 : index
    %c0_148 = arith.constant 0 : index
    %488 = vector.load %arg5[%c5_147, %c0_148] : memref<10x256xf32, #tpu.memory_space<vmem>>, vector<1x256xf32>
    %489 = vector.broadcast %488 : vector<1x256xf32> to vector<8x256xf32>
    %490 = arith.mulf %453, %489 : vector<8x256xf32>
    %491 = arith.addf %487, %490 : vector<8x256xf32>
    %c6_149 = arith.constant 6 : index
    %c0_150 = arith.constant 0 : index
    %492 = vector.load %arg5[%c6_149, %c0_150] : memref<10x256xf32, #tpu.memory_space<vmem>>, vector<1x256xf32>
    %493 = vector.broadcast %492 : vector<1x256xf32> to vector<8x256xf32>
    %494 = arith.mulf %456, %493 : vector<8x256xf32>
    %495 = arith.addf %491, %494 : vector<8x256xf32>
    %c7_151 = arith.constant 7 : index
    %c0_152 = arith.constant 0 : index
    %496 = vector.load %arg5[%c7_151, %c0_152] : memref<10x256xf32, #tpu.memory_space<vmem>>, vector<1x256xf32>
    %497 = vector.broadcast %496 : vector<1x256xf32> to vector<8x256xf32>
    %498 = arith.mulf %459, %497 : vector<8x256xf32>
    %499 = arith.addf %495, %498 : vector<8x256xf32>
    %c8_153 = arith.constant 8 : index
    %c0_154 = arith.constant 0 : index
    %500 = vector.load %arg5[%c8_153, %c0_154] : memref<10x256xf32, #tpu.memory_space<vmem>>, vector<1x256xf32>
    %501 = vector.broadcast %500 : vector<1x256xf32> to vector<8x256xf32>
    %502 = arith.mulf %462, %501 : vector<8x256xf32>
    %503 = arith.addf %499, %502 : vector<8x256xf32>
    %c9_155 = arith.constant 9 : index
    %c0_156 = arith.constant 0 : index
    %504 = vector.load %arg5[%c9_155, %c0_156] : memref<10x256xf32, #tpu.memory_space<vmem>>, vector<1x256xf32>
    %505 = vector.broadcast %504 : vector<1x256xf32> to vector<8x256xf32>
    %506 = arith.mulf %465, %505 : vector<8x256xf32>
    %507 = arith.addf %503, %506 : vector<8x256xf32>
    %c0_157 = arith.constant 0 : index
    %c0_158 = arith.constant 0 : index
    %508 = vector.load %arg7[%c0_157, %c0_158] : memref<8x256xf32, #tpu.memory_space<vmem>>, vector<8x256xf32>
    tpu.vector_store %arg7[%c0_157, %c0_158], %507 {strides = array<i32>} : memref<8x256xf32, #tpu.memory_space<vmem>>, vector<8x256xf32>,
    return
  }
  func.func @transform_0(%arg0: i32) -> (i32, i32) {
    %c0_i32 = arith.constant 0 : i32
    %c0_i32_0 = arith.constant 0 : i32
    %c0_i32_1 = arith.constant 0 : i32
    return %c0_i32, %c0_i32_0 : i32, i32
  }
  func.func @transform_1(%arg0: i32) -> (i32, i32) {
    %c0_i32 = arith.constant 0 : i32
    %c0_i32_0 = arith.constant 0 : i32
    return %c0_i32, %arg0 : i32, i32
  }
  func.func @transform_2(%arg0: i32) -> (i32, i32) {
    %c0_i32 = arith.constant 0 : i32
    %c0_i32_0 = arith.constant 0 : i32
    return %c0_i32, %arg0 : i32, i32
  }
  func.func @transform_3(%arg0: i32) -> (i32, i32) {
    %c0_i32 = arith.constant 0 : i32
    %c0_i32_0 = arith.constant 0 : i32
    return %c0_i32, %arg0 : i32, i32
  }
  func.func @transform_4(%arg0: i32) -> (i32, i32) {
    %c0_i32 = arith.constant 0 : i32
    %c0_i32_0 = arith.constant 0 : i32
    return %c0_i32, %arg0 : i32, i32
  }
  func.func @transform_5(%arg0: i32) -> (i32, i32) {
    %c0_i32 = arith.constant 0 : i32
    %c0_i32_0 = arith.constant 0 : i32
    return %c0_i32, %arg0 : i32, i32
  }
  func.func @transform_6(%arg0: i32) -> (i32, i32) {
    %c0_i32 = arith.constant 0 : i32
    %c0_i32_0 = arith.constant 0 : i32
    return %c0_i32, %arg0 : i32, i32
  }
}

</mosaic_0001>

<llo_original>
// kernel: parallel_decoder_pallas.1
$region0: #{parallel_decoder_pallas.1}
  #allocation0 [shape = 'u32[]', space=smem, size = 0x4, offset = 0x4, fixed_abs, tag = 'smem constant byte address 0x4 - core index']
  #allocation1 [shape = 'u32[144,128]{1,0:T(1,128)}', space=vmem, size = 0x12000, scoped, tag = 'internal scratch']
  %s0 = inlined_call_operand.vmem [shape: f32[8,23], index: 0, kind: input, shape index: {}]
  %s1 = inlined_call_operand.vmem [shape: f32[23,2560], index: 1, kind: input, shape index: {}]
  %s2 = inlined_call_operand.vmem [shape: f32[100,256], index: 2, kind: input, shape index: {}]
  %s3 = inlined_call_operand.vmem [shape: f32[10,256], index: 3, kind: input, shape index: {}]
  %s4 = inlined_call_operand.vmem [shape: f32[10,256], index: 4, kind: input, shape index: {}]
  %s5 = inlined_call_operand.vmem [shape: f32[1,256], index: 5, kind: input, shape index: {}]
  %s6 = inlined_call_operand.hbm [shape: f32[8,256], index: 6, kind: output, shape index: {}]
  %s7 = sld [smem:[#allocation0]]
  $region34: #{parallel_decoder_pallas.1} parent=0
    _
  %s9 = ssub.s32 1, %s7
  %s10 = scalar_select 0, %s9, %s7
  $region1: #{parallel_decoder_pallas.1} parent=0
    #allocation2 [shape = 'u8[8192]{0}', space=vmem, size = 0x2000, scoped, tag = 'output window, operand 0, single buffered']
    #allocation3 [shape = 's32[1]{0}', space=sflag, size = 0x4, scoped, tag = 'scoped memory for parallel_decoder_pallas.1']
    %11 = vsyncpa [#allocation3], 0
    // Predicated region
    $region2: #{parallel_decoder_pallas.1} parent=1 // pred_check
      _
    $region3: #{parallel_decoder_pallas.1} parent=1 // pred_check_branch
      %13 = sbr.rel (0) target = $region5
    $region4: #{parallel_decoder_pallas.1} parent=1 // pred_region
      _
    $region5: #{parallel_decoder_pallas.1} parent=1 // pred_fallthru
      _
    // Predicated region
    $region6: #{parallel_decoder_pallas.1} parent=1 // pred_check
      _
    $region7: #{parallel_decoder_pallas.1} parent=1 // pred_check_branch
      %15 = sbr.rel (0) target = $region9
    $region8: #{parallel_decoder_pallas.1} parent=1 // pred_region
      _
    $region9: #{parallel_decoder_pallas.1} parent=1 // pred_fallthru
      _
    // Predicated region
    $region10: #{parallel_decoder_pallas.1} parent=1 // pred_check
      _
    $region11: #{parallel_decoder_pallas.1} parent=1 // pred_check_branch
      %17 = sbr.rel (0) target = $region13
    $region12: #{parallel_decoder_pallas.1} parent=1 // pred_region
      _
    $region13: #{parallel_decoder_pallas.1} parent=1 // pred_fallthru
      _
    // Predicated region
    $region14: #{parallel_decoder_pallas.1} parent=1 // pred_check
      _
    $region15: #{parallel_decoder_pallas.1} parent=1 // pred_check_branch
      %19 = sbr.rel (0) target = $region17
    $region16: #{parallel_decoder_pallas.1} parent=1 // pred_region
      _
    $region17: #{parallel_decoder_pallas.1} parent=1 // pred_fallthru
      _
    // Predicated region
    $region18: #{parallel_decoder_pallas.1} parent=1 // pred_check
      _
    $region19: #{parallel_decoder_pallas.1} parent=1 // pred_check_branch
      %21 = sbr.rel (0) target = $region21
    $region20: #{parallel_decoder_pallas.1} parent=1 // pred_region
      _
    $region21: #{parallel_decoder_pallas.1} parent=1 // pred_fallthru
      _
    // Predicated region
    $region22: #{parallel_decoder_pallas.1} parent=1 // pred_check
      _
    $region23: #{parallel_decoder_pallas.1} parent=1 // pred_check_branch
      %23 = sbr.rel (0) target = $region25
    $region24: #{parallel_decoder_pallas.1} parent=1 // pred_region
      _
    $region25: #{parallel_decoder_pallas.1} parent=1 // pred_fallthru
      _
    %v24 = vld [vmem:[%s0] sm:$0xff]
    %v25 = vld [vmem:[%s1] sm:$0xff]
    %v26 = vld [vmem:[%s1 + $0x8] sm:$0xff]
    %v27 = vld [vmem:[%s1 + $0x10] sm:$0xff]
    %v28 = vld [vmem:[%s1 + $0x18] sm:$0xff]
    %v29 = vld [vmem:[%s1 + $0x20] sm:$0xff]
    %v30 = vld [vmem:[%s1 + $0x28] sm:$0xff]
    %v31 = vld [vmem:[%s1 + $0x30] sm:$0xff]
    %v32 = vld [vmem:[%s1 + $0x38] sm:$0xff]
    %v33 = vld [vmem:[%s1 + $0x40] sm:$0xff]
    %v34 = vld [vmem:[%s1 + $0x48] sm:$0xff]
    %v35 = vld [vmem:[%s1 + $0x50] sm:$0xff]
    %v36 = vld [vmem:[%s1 + $0x58] sm:$0xff]
    %v37 = vld [vmem:[%s1 + $0x60] sm:$0xff]
    %v38 = vld [vmem:[%s1 + $0x68] sm:$0xff]
    %v39 = vld [vmem:[%s1 + $0x70] sm:$0xff]
    %v40 = vld [vmem:[%s1 + $0x78] sm:$0xff]
    %v41 = vld [vmem:[%s1 + $0x80] sm:$0xff]
    %v42 = vld [vmem:[%s1 + $0x88] sm:$0xff]
    %v43 = vld [vmem:[%s1 + $0x90] sm:$0xff]
    %v44 = vld [vmem:[%s1 + $0x98] sm:$0xff]
    %v45 = vld [vmem:[%s1 + $0xa0] sm:$0xff]
    %v46 = vld [vmem:[%s1 + $0xa8] sm:$0xff]
    %v47 = vld [vmem:[%s1 + $0xb0] sm:$0xff]
    %v48 = vld [vmem:[%s1 + $0xb8] sm:$0xff]
    %v49 = vld [vmem:[%s1 + $0xc0] sm:$0xff]
    %v50 = vld [vmem:[%s1 + $0xc8] sm:$0xff]
    %v51 = vld [vmem:[%s1 + $0xd0] sm:$0xff]
    %v52 = vld [vmem:[%s1 + $0xd8] sm:$0xff]
    %v53 = vld [vmem:[%s1 + $0xe0] sm:$0xff]
    %v54 = vld [vmem:[%s1 + $0xe8] sm:$0xff]
    %v55 = vld [vmem:[%s1 + $0xf0] sm:$0xff]
    %v56 = vld [vmem:[%s1 + $0xf8] sm:$0xff]
    %v57 = vld [vmem:[%s1 + $0x100] sm:$0xff]
    %v58 = vld [vmem:[%s1 + $0x108] sm:$0xff]
    %v59 = vld [vmem:[%s1 + $0x110] sm:$0xff]
    %v60 = vld [vmem:[%s1 + $0x118] sm:$0xff]
    %v61 = vld [vmem:[%s1 + $0x120] sm:$0xff]
    %v62 = vld [vmem:[%s1 + $0x128] sm:$0xff]
    %v63 = vld [vmem:[%s1 + $0x130] sm:$0xff]
    %v64 = vld [vmem:[%s1 + $0x138] sm:$0xff]
    %v65 = vld [vmem:[%s1 + $0x140] sm:$0x7f]
    %v66 = vld [vmem:[%s1 + $0x148] sm:$0x7f]
    %v67 = vld [vmem:[%s1 + $0x150] sm:$0x7f]
    %v68 = vld [vmem:[%s1 + $0x158] sm:$0x7f]
    %v69 = vld [vmem:[%s1 + $0x160] sm:$0x7f]
    %v70 = vld [vmem:[%s1 + $0x168] sm:$0x7f]
    %v71 = vld [vmem:[%s1 + $0x170] sm:$0x7f]
    %v72 = vld [vmem:[%s1 + $0x178] sm:$0x7f]
    %v73 = vld [vmem:[%s1 + $0x180] sm:$0x7f]
    %v74 = vld [vmem:[%s1 + $0x188] sm:$0x7f]
    %v75 = vld [vmem:[%s1 + $0x190] sm:$0x7f]
    %v76 = vld [vmem:[%s1 + $0x198] sm:$0x7f]
    %v77 = vld [vmem:[%s1 + $0x1a0] sm:$0x7f]
    %v78 = vld [vmem:[%s1 + $0x1a8] sm:$0x7f]
    %v79 = vld [vmem:[%s1 + $0x1b0] sm:$0x7f]
    %v80 = vld [vmem:[%s1 + $0x1b8] sm:$0x7f]
    %v81 = vld [vmem:[%s1 + $0x1c0] sm:$0x7f]
    %v82 = vld [vmem:[%s1 + $0x1c8] sm:$0x7f]
    %v83 = vld [vmem:[%s1 + $0x1d0] sm:$0x7f]
    %v84 = vld [vmem:[%s1 + $0x1d8] sm:$0x7f]
    %vm85 = vcmask 187392
    %v87 = vsel %vm85, %v24, 0
    %vm89 = vcmask 1046528
    %v91 = vsel %vm89, %v65, 0
    %v94 = vsel %vm89, %v66, 0
    %v97 = vsel %vm89, %v67, 0
    %v100 = vsel %vm89, %v68, 0
    %v103 = vsel %vm89, %v69, 0
    %v106 = vsel %vm89, %v70, 0
    %v109 = vsel %vm89, %v71, 0
    %v112 = vsel %vm89, %v72, 0
    %v115 = vsel %vm89, %v73, 0
    %v118 = vsel %vm89, %v74, 0
    %v121 = vsel %vm89, %v75, 0
    %v124 = vsel %vm89, %v76, 0
    %v127 = vsel %vm89, %v77, 0
    %v130 = vsel %vm89, %v78, 0
    %v133 = vsel %vm89, %v79, 0
    %v136 = vsel %vm89, %v80, 0
    %v139 = vsel %vm89, %v81, 0
    %v142 = vsel %vm89, %v82, 0
    %v145 = vsel %vm89, %v83, 0
    %v148 = vsel %vm89, %v84, 0
    %150 = vmatprep.subr.mxu0 %v26
    %151 = vmatpush1.msra.mxu0 %v25
    %152 = vmatprep.subr.mxu0 %v46
    %153 = vmatpush1.msra.mxu0 %v45
    %154 = vmatprep.subr.mxu0 %v94
    %155 = vmatpush1.msra.mxu0 %v91
    %156 = vmatprep.subr.mxu0 0.0
    %157 = vmatpush1.msra.mxu0 0.0
    %158 = vmatprep.subr.mxu0 0.0
    %159 = vmatpush1.msra.mxu0 0.0
    %160 = vmatprep.subr.mxu0 0.0
    %161 = vmatpush1.msra.mxu0 0.0
    %162 = vmatprep.subr.mxu0 0.0
    %163 = vmatpush1.msra.mxu0 0.0
    %164 = vmatprep.subr.mxu0 0.0
    %165 = vmatpush1.msra.mxu0 0.0
    %166 = vmatprep.subr.mxu0 0.0
    %167 = vmatpush1.msra.mxu0 0.0
    %168 = vmatprep.subr.mxu0 0.0
    %169 = vmatpush1.msra.mxu0 0.0
    %170 = vmatprep.subr.mxu0 0.0
    %171 = vmatpush1.msra.mxu0 0.0
    %172 = vmatprep.subr.mxu0 0.0
    %173 = vmatpush1.msra.mxu0 0.0
    %174 = vmatprep.subr.mxu0 0.0
    %175 = vmatpush1.msra.mxu0 0.0
    %176 = vmatprep.subr.mxu0 0.0
    %177 = vmatpush1.msra.mxu0 0.0
    %178 = vmatprep.subr.mxu0 0.0
    %179 = vmatpush1.msra.mxu0 0.0
    %180 = vmatprep.subr.mxu0 0.0
    %181 = vmatpush1.msra.mxu0 0.0
    %182 = vmatprep.subr.mxu0 0.0
    %183 = vmatpush1.msra.mxu0 0.0
    %184 = vmatprep.subr.mxu0 0.0
    %185 = vmatpush1.msra.mxu0 0.0
    %186 = vmatprep.subr.mxu0 0.0
    %187 = vmatpush1.msra.mxu0 0.0
    %188 = vmatprep.subr.mxu0 0.0
    %189 = vmatpush1.msra.mxu0 0.0
    %190 = vmatprep.subr.mxu0 0.0
    %191 = vmatpush1.msra.mxu0 0.0
    %192 = vmatprep.subr.mxu0 0.0
    %193 = vmatpush1.msra.mxu0 0.0
    %194 = vmatprep.subr.mxu0 0.0
    %195 = vmatpush1.msra.mxu0 0.0
    %196 = vmatprep.subr.mxu0 0.0
    %197 = vmatpush1.msra.mxu0 0.0
    %198 = vmatprep.subr.mxu0 0.0
    %199 = vmatpush1.msra.mxu0 0.0
    %200 = vmatprep.subr.mxu0 0.0
    %201 = vmatpush1.msra.mxu0 0.0
    %202 = vmatprep.subr.mxu0 0.0
    %203 = vmatpush1.msra.mxu0 0.0
    %204 = vmatprep.subr.mxu0 0.0
    %205 = vmatpush1.msra.mxu0 0.0
    %206 = vmatprep.subr.mxu0 0.0
    %207 = vmatpush1.msra.mxu0 0.0
    %208 = vmatprep.subr.mxu0 0.0
    %209 = vmatpush1.msra.mxu0 0.0
    %210 = vmatprep.subr.mxu0 0.0
    %211 = vmatpush1.msra.mxu0 0.0
    %212 = vmatprep.subr.mxu0 0.0
    %213 = vmatpush1.msra.mxu0 0.0
    %214 = vmatprep.mubr.f32.mxu0 0.0
    %215 = vmatmul.mubr.f32.gmra.mrb[0].mxu0 %v87
    %v216 = vpop.f32.mrb[0].mxu0
    %v217 = vadd.f32 0.0, %v216
    %v218 = vpop.f32.mrb[0].mxu0
    %v219 = vadd.f32 0.0, %v218
    %220 = vdwg.mxu0
    %221 = vmatprep.subr.mxu0 %v28
    %222 = vmatpush1.msra.mxu0 %v27
    %223 = vmatprep.subr.mxu0 %v48
    %224 = vmatpush1.msra.mxu0 %v47
    %225 = vmatprep.subr.mxu0 %v100
    %226 = vmatpush1.msra.mxu0 %v97
    %227 = vmatprep.subr.mxu0 0.0
    %228 = vmatpush1.msra.mxu0 0.0
    %229 = vmatprep.subr.mxu0 0.0
    %230 = vmatpush1.msra.mxu0 0.0
    %231 = vmatprep.subr.mxu0 0.0
    %232 = vmatpush1.msra.mxu0 0.0
    %233 = vmatprep.subr.mxu0 0.0
    %234 = vmatpush1.msra.mxu0 0.0
    %235 = vmatprep.subr.mxu0 0.0
    %236 = vmatpush1.msra.mxu0 0.0
    %237 = vmatprep.subr.mxu0 0.0
    %238 = vmatpush1.msra.mxu0 0.0
    %239 = vmatprep.subr.mxu0 0.0
    %240 = vmatpush1.msra.mxu0 0.0
    %241 = vmatprep.subr.mxu0 0.0
    %242 = vmatpush1.msra.mxu0 0.0
    %243 = vmatprep.subr.mxu0 0.0
    %244 = vmatpush1.msra.mxu0 0.0
    %245 = vmatprep.subr.mxu0 0.0
    %246 = vmatpush1.msra.mxu0 0.0
    %247 = vmatprep.subr.mxu0 0.0
    %248 = vmatpush1.msra.mxu0 0.0
    %249 = vmatprep.subr.mxu0 0.0
    %250 = vmatpush1.msra.mxu0 0.0
    %251 = vmatprep.subr.mxu0 0.0
    %252 = vmatpush1.msra.mxu0 0.0
    %253 = vmatprep.subr.mxu0 0.0
    %254 = vmatpush1.msra.mxu0 0.0
    %255 = vmatprep.subr.mxu0 0.0
    %256 = vmatpush1.msra.mxu0 0.0
    %257 = vmatprep.subr.mxu0 0.0
    %258 = vmatpush1.msra.mxu0 0.0
    %259 = vmatprep.subr.mxu0 0.0
    %260 = vmatpush1.msra.mxu0 0.0
    %261 = vmatprep.subr.mxu0 0.0
    %262 = vmatpush1.msra.mxu0 0.0
    %263 = vmatprep.subr.mxu0 0.0
    %264 = vmatpush1.msra.mxu0 0.0
    %265 = vmatprep.subr.mxu0 0.0
    %266 = vmatpush1.msra.mxu0 0.0
    %267 = vmatprep.subr.mxu0 0.0
    %268 = vmatpush1.msra.mxu0 0.0
    %269 = vmatprep.subr.mxu0 0.0
    %270 = vmatpush1.msra.mxu0 0.0
    %271 = vmatprep.subr.mxu0 0.0
    %272 = vmatpush1.msra.mxu0 0.0
    %273 = vmatprep.subr.mxu0 0.0
    %274 = vmatpush1.msra.mxu0 0.0
    %275 = vmatprep.subr.mxu0 0.0
    %276 = vmatpush1.msra.mxu0 0.0
    %277 = vmatprep.subr.mxu0 0.0
    %278 = vmatpush1.msra.mxu0 0.0
    %279 = vmatprep.subr.mxu0 0.0
    %280 = vmatpush1.msra.mxu0 0.0
    %281 = vmatprep.subr.mxu0 0.0
    %282 = vmatpush1.msra.mxu0 0.0
    %283 = vmatprep.subr.mxu0 0.0
    %284 = vmatpush1.msra.mxu0 0.0
    %285 = vmatprep.mubr.f32.mxu0 0.0
    %286 = vmatmul.mubr.f32.gmra.mrb[0].mxu0 %v87
    %v287 = vpop.f32.mrb[0].mxu0
    %v288 = vadd.f32 0.0, %v287
    %v289 = vpop.f32.mrb[0].mxu0
    %v290 = vadd.f32 0.0, %v289
    %291 = vdwg.mxu0
    %292 = vmatprep.subr.mxu0 %v30
    %293 = vmatpush1.msra.mxu0 %v29
    %294 = vmatprep.subr.mxu0 %v50
    %295 = vmatpush1.msra.mxu0 %v49
    %296 = vmatprep.subr.mxu0 %v106
    %297 = vmatpush1.msra.mxu0 %v103
    %298 = vmatprep.subr.mxu0 0.0
    %299 = vmatpush1.msra.mxu0 0.0
    %300 = vmatprep.subr.mxu0 0.0
    %301 = vmatpush1.msra.mxu0 0.0
    %302 = vmatprep.subr.mxu0 0.0
    %303 = vmatpush1.msra.mxu0 0.0
    %304 = vmatprep.subr.mxu0 0.0
    %305 = vmatpush1.msra.mxu0 0.0
    %306 = vmatprep.subr.mxu0 0.0
    %307 = vmatpush1.msra.mxu0 0.0
    %308 = vmatprep.subr.mxu0 0.0
    %309 = vmatpush1.msra.mxu0 0.0
    %310 = vmatprep.subr.mxu0 0.0
    %311 = vmatpush1.msra.mxu0 0.0
    %312 = vmatprep.subr.mxu0 0.0
    %313 = vmatpush1.msra.mxu0 0.0
    %314 = vmatprep.subr.mxu0 0.0
    %315 = vmatpush1.msra.mxu0 0.0
    %316 = vmatprep.subr.mxu0 0.0
    %317 = vmatpush1.msra.mxu0 0.0
    %318 = vmatprep.subr.mxu0 0.0
    %319 = vmatpush1.msra.mxu0 0.0
    %320 = vmatprep.subr.mxu0 0.0
    %321 = vmatpush1.msra.mxu0 0.0
    %322 = vmatprep.subr.mxu0 0.0
    %323 = vmatpush1.msra.mxu0 0.0
    %324 = vmatprep.subr.mxu0 0.0
    %325 = vmatpush1.msra.mxu0 0.0
    %326 = vmatprep.subr.mxu0 0.0
    %327 = vmatpush1.msra.mxu0 0.0
    %328 = vmatprep.subr.mxu0 0.0
    %329 = vmatpush1.msra.mxu0 0.0
    %330 = vmatprep.subr.mxu0 0.0
    %331 = vmatpush1.msra.mxu0 0.0
    %332 = vmatprep.subr.mxu0 0.0
    %333 = vmatpush1.msra.mxu0 0.0
    %334 = vmatprep.subr.mxu0 0.0
    %335 = vmatpush1.msra.mxu0 0.0
    %336 = vmatprep.subr.mxu0 0.0
    %337 = vmatpush1.msra.mxu0 0.0
    %338 = vmatprep.subr.mxu0 0.0
    %339 = vmatpush1.msra.mxu0 0.0
    %340 = vmatprep.subr.mxu0 0.0
    %341 = vmatpush1.msra.mxu0 0.0
    %342 = vmatprep.subr.mxu0 0.0
    %343 = vmatpush1.msra.mxu0 0.0
    %344 = vmatprep.subr.mxu0 0.0
    %345 = vmatpush1.msra.mxu0 0.0
    %346 = vmatprep.subr.mxu0 0.0
    %347 = vmatpush1.msra.mxu0 0.0
    %348 = vmatprep.subr.mxu0 0.0
    %349 = vmatpush1.msra.mxu0 0.0
    %350 = vmatprep.subr.mxu0 0.0
    %351 = vmatpush1.msra.mxu0 0.0
    %352 = vmatprep.subr.mxu0 0.0
    %353 = vmatpush1.msra.mxu0 0.0
    %354 = vmatprep.subr.mxu0 0.0
    %355 = vmatpush1.msra.mxu0 0.0
    %356 = vmatprep.mubr.f32.mxu0 0.0
    %357 = vmatmul.mubr.f32.gmra.mrb[0].mxu0 %v87
    %v358 = vpop.f32.mrb[0].mxu0
    %v359 = vadd.f32 0.0, %v358
    %v360 = vpop.f32.mrb[0].mxu0
    %v361 = vadd.f32 0.0, %v360
    %362 = vdwg.mxu0
    %363 = vmatprep.subr.mxu0 %v32
    %364 = vmatpush1.msra.mxu0 %v31
    %365 = vmatprep.subr.mxu0 %v52
    %366 = vmatpush1.msra.mxu0 %v51
    %367 = vmatprep.subr.mxu0 %v112
    %368 = vmatpush1.msra.mxu0 %v109
    %369 = vmatprep.subr.mxu0 0.0
    %370 = vmatpush1.msra.mxu0 0.0
    %371 = vmatprep.subr.mxu0 0.0
    %372 = vmatpush1.msra.mxu0 0.0
    %373 = vmatprep.subr.mxu0 0.0
    %374 = vmatpush1.msra.mxu0 0.0
    %375 = vmatprep.subr.mxu0 0.0
    %376 = vmatpush1.msra.mxu0 0.0
    %377 = vmatprep.subr.mxu0 0.0
    %378 = vmatpush1.msra.mxu0 0.0
    %379 = vmatprep.subr.mxu0 0.0
    %380 = vmatpush1.msra.mxu0 0.0
    %381 = vmatprep.subr.mxu0 0.0
    %382 = vmatpush1.msra.mxu0 0.0
    %383 = vmatprep.subr.mxu0 0.0
    %384 = vmatpush1.msra.mxu0 0.0
    %385 = vmatprep.subr.mxu0 0.0
    %386 = vmatpush1.msra.mxu0 0.0
    %387 = vmatprep.subr.mxu0 0.0
    %388 = vmatpush1.msra.mxu0 0.0
    %389 = vmatprep.subr.mxu0 0.0
    %390 = vmatpush1.msra.mxu0 0.0
    %391 = vmatprep.subr.mxu0 0.0
    %392 = vmatpush1.msra.mxu0 0.0
    %393 = vmatprep.subr.mxu0 0.0
    %394 = vmatpush1.msra.mxu0 0.0
    %395 = vmatprep.subr.mxu0 0.0
    %396 = vmatpush1.msra.mxu0 0.0
    %397 = vmatprep.subr.mxu0 0.0
    %398 = vmatpush1.msra.mxu0 0.0
    %399 = vmatprep.subr.mxu0 0.0
    %400 = vmatpush1.msra.mxu0 0.0
    %401 = vmatprep.subr.mxu0 0.0
    %402 = vmatpush1.msra.mxu0 0.0
    %403 = vmatprep.subr.mxu0 0.0
    %404 = vmatpush1.msra.mxu0 0.0
    %405 = vmatprep.subr.mxu0 0.0
    %406 = vmatpush1.msra.mxu0 0.0
    %407 = vmatprep.subr.mxu0 0.0
    %408 = vmatpush1.msra.mxu0 0.0
    %409 = vmatprep.subr.mxu0 0.0
    %410 = vmatpush1.msra.mxu0 0.0
    %411 = vmatprep.subr.mxu0 0.0
    %412 = vmatpush1.msra.mxu0 0.0
    %413 = vmatprep.subr.mxu0 0.0
    %414 = vmatpush1.msra.mxu0 0.0
    %415 = vmatprep.subr.mxu0 0.0
    %416 = vmatpush1.msra.mxu0 0.0
    %417 = vmatprep.subr.mxu0 0.0
    %418 = vmatpush1.msra.mxu0 0.0
    %419 = vmatprep.subr.mxu0 0.0
    %420 = vmatpush1.msra.mxu0 0.0
    %421 = vmatprep.subr.mxu0 0.0
    %422 = vmatpush1.msra.mxu0 0.0
    %423 = vmatprep.subr.mxu0 0.0
    %424 = vmatpush1.msra.mxu0 0.0
    %425 = vmatprep.subr.mxu0 0.0
    %426 = vmatpush1.msra.mxu0 0.0
    %427 = vmatprep.mubr.f32.mxu0 0.0
    %428 = vmatmul.mubr.f32.gmra.mrb[0].mxu0 %v87
    %v429 = vpop.f32.mrb[0].mxu0
    %v430 = vadd.f32 0.0, %v429
    %v431 = vpop.f32.mrb[0].mxu0
    %v432 = vadd.f32 0.0, %v431
    %433 = vdwg.mxu0
    %434 = vmatprep.subr.mxu0 %v34
    %435 = vmatpush1.msra.mxu0 %v33
    %436 = vmatprep.subr.mxu0 %v54
    %437 = vmatpush1.msra.mxu0 %v53
    %438 = vmatprep.subr.mxu0 %v118
    %439 = vmatpush1.msra.mxu0 %v115
    %440 = vmatprep.subr.mxu0 0.0
    %441 = vmatpush1.msra.mxu0 0.0
    %442 = vmatprep.subr.mxu0 0.0
    %443 = vmatpush1.msra.mxu0 0.0
    %444 = vmatprep.subr.mxu0 0.0
    %445 = vmatpush1.msra.mxu0 0.0
    %446 = vmatprep.subr.mxu0 0.0
    %447 = vmatpush1.msra.mxu0 0.0
    %448 = vmatprep.subr.mxu0 0.0
    %449 = vmatpush1.msra.mxu0 0.0
    %450 = vmatprep.subr.mxu0 0.0
    %451 = vmatpush1.msra.mxu0 0.0
    %452 = vmatprep.subr.mxu0 0.0
    %453 = vmatpush1.msra.mxu0 0.0
    %454 = vmatprep.subr.mxu0 0.0
    %455 = vmatpush1.msra.mxu0 0.0
    %456 = vmatprep.subr.mxu0 0.0
    %457 = vmatpush1.msra.mxu0 0.0
    %458 = vmatprep.subr.mxu0 0.0
    %459 = vmatpush1.msra.mxu0 0.0
    %460 = vmatprep.subr.mxu0 0.0
    %461 = vmatpush1.msra.mxu0 0.0
    %462 = vmatprep.subr.mxu0 0.0
    %463 = vmatpush1.msra.mxu0 0.0
    %464 = vmatprep.subr.mxu0 0.0
    %465 = vmatpush1.msra.mxu0 0.0
    %466 = vmatprep.subr.mxu0 0.0
    %467 = vmatpush1.msra.mxu0 0.0
    %468 = vmatprep.subr.mxu0 0.0
    %469 = vmatpush1.msra.mxu0 0.0
    %470 = vmatprep.subr.mxu0 0.0
    %471 = vmatpush1.msra.mxu0 0.0
    %472 = vmatprep.subr.mxu0 0.0
    %473 = vmatpush1.msra.mxu0 0.0
    %474 = vmatprep.subr.mxu0 0.0
    %475 = vmatpush1.msra.mxu0 0.0
    %476 = vmatprep.subr.mxu0 0.0
    %477 = vmatpush1.msra.mxu0 0.0
    %478 = vmatprep.subr.mxu0 0.0
    %479 = vmatpush1.msra.mxu0 0.0
    %480 = vmatprep.subr.mxu0 0.0
    %481 = vmatpush1.msra.mxu0 0.0
    %482 = vmatprep.subr.mxu0 0.0
    %483 = vmatpush1.msra.mxu0 0.0
    %484 = vmatprep.subr.mxu0 0.0
    %485 = vmatpush1.msra.mxu0 0.0
    %486 = vmatprep.subr.mxu0 0.0
    %487 = vmatpush1.msra.mxu0 0.0
    %488 = vmatprep.subr.mxu0 0.0
    %489 = vmatpush1.msra.mxu0 0.0
    %490 = vmatprep.subr.mxu0 0.0
    %491 = vmatpush1.msra.mxu0 0.0
    %492 = vmatprep.subr.mxu0 0.0
    %493 = vmatpush1.msra.mxu0 0.0
    %494 = vmatprep.subr.mxu0 0.0
    %495 = vmatpush1.msra.mxu0 0.0
    %496 = vmatprep.subr.mxu0 0.0
    %497 = vmatpush1.msra.mxu0 0.0
    %498 = vmatprep.mubr.f32.mxu0 0.0
    %499 = vmatmul.mubr.f32.gmra.mrb[0].mxu0 %v87
    %v500 = vpop.f32.mrb[0].mxu0
    %v501 = vadd.f32 0.0, %v500
    %v502 = vpop.f32.mrb[0].mxu0
    %v503 = vadd.f32 0.0, %v502
    %504 = vdwg.mxu0
    %505 = vmatprep.subr.mxu0 %v36
    %506 = vmatpush1.msra.mxu0 %v35
    %507 = vmatprep.subr.mxu0 %v56
    %508 = vmatpush1.msra.mxu0 %v55
    %509 = vmatprep.subr.mxu0 %v124
    %510 = vmatpush1.msra.mxu0 %v121
    %511 = vmatprep.subr.mxu0 0.0
    %512 = vmatpush1.msra.mxu0 0.0
    %513 = vmatprep.subr.mxu0 0.0
    %514 = vmatpush1.msra.mxu0 0.0
    %515 = vmatprep.subr.mxu0 0.0
    %516 = vmatpush1.msra.mxu0 0.0
    %517 = vmatprep.subr.mxu0 0.0
    %518 = vmatpush1.msra.mxu0 0.0
    %519 = vmatprep.subr.mxu0 0.0
    %520 = vmatpush1.msra.mxu0 0.0
    %521 = vmatprep.subr.mxu0 0.0
    %522 = vmatpush1.msra.mxu0 0.0
    %523 = vmatprep.subr.mxu0 0.0
    %524 = vmatpush1.msra.mxu0 0.0
    %525 = vmatprep.subr.mxu0 0.0
    %526 = vmatpush1.msra.mxu0 0.0
    %527 = vmatprep.subr.mxu0 0.0
    %528 = vmatpush1.msra.mxu0 0.0
    %529 = vmatprep.subr.mxu0 0.0
    %530 = vmatpush1.msra.mxu0 0.0
    %531 = vmatprep.subr.mxu0 0.0
    %532 = vmatpush1.msra.mxu0 0.0
    %533 = vmatprep.subr.mxu0 0.0
    %534 = vmatpush1.msra.mxu0 0.0
    %535 = vmatprep.subr.mxu0 0.0
    %536 = vmatpush1.msra.mxu0 0.0
    %537 = vmatprep.subr.mxu0 0.0
    %538 = vmatpush1.msra.mxu0 0.0
    %539 = vmatprep.subr.mxu0 0.0
    %540 = vmatpush1.msra.mxu0 0.0
    %541 = vmatprep.subr.mxu0 0.0
    %542 = vmatpush1.msra.mxu0 0.0
    %543 = vmatprep.subr.mxu0 0.0
    %544 = vmatpush1.msra.mxu0 0.0
    %545 = vmatprep.subr.mxu0 0.0
    %546 = vmatpush1.msra.mxu0 0.0
    %547 = vmatprep.subr.mxu0 0.0
    %548 = vmatpush1.msra.mxu0 0.0
    %549 = vmatprep.subr.mxu0 0.0
    %550 = vmatpush1.msra.mxu0 0.0
    %551 = vmatprep.subr.mxu0 0.0
    %552 = vmatpush1.msra.mxu0 0.0
    %553 = vmatprep.subr.mxu0 0.0
    %554 = vmatpush1.msra.mxu0 0.0
    %555 = vmatprep.subr.mxu0 0.0
    %556 = vmatpush1.msra.mxu0 0.0
    %557 = vmatprep.subr.mxu0 0.0
    %558 = vmatpush1.msra.mxu0 0.0
    %559 = vmatprep.subr.mxu0 0.0
    %560 = vmatpush1.msra.mxu0 0.0
    %561 = vmatprep.subr.mxu0 0.0
    %562 = vmatpush1.msra.mxu0 0.0
    %563 = vmatprep.subr.mxu0 0.0
    %564 = vmatpush1.msra.mxu0 0.0
    %565 = vmatprep.subr.mxu0 0.0
    %566 = vmatpush1.msra.mxu0 0.0
    %567 = vmatprep.subr.mxu0 0.0
    %568 = vmatpush1.msra.mxu0 0.0
    %569 = vmatprep.mubr.f32.mxu0 0.0
    %570 = vmatmul.mubr.f32.gmra.mrb[0].mxu0 %v87
    %v571 = vpop.f32.mrb[0].mxu0
    %v572 = vadd.f32 0.0, %v571
    %v573 = vpop.f32.mrb[0].mxu0
    %v574 = vadd.f32 0.0, %v573
    %575 = vdwg.mxu0
    %576 = vmatprep.subr.mxu0 %v38
    %577 = vmatpush1.msra.mxu0 %v37
    %578 = vmatprep.subr.mxu0 %v58
    %579 = vmatpush1.msra.mxu0 %v57
    %580 = vmatprep.subr.mxu0 %v130
    %581 = vmatpush1.msra.mxu0 %v127
    %582 = vmatprep.subr.mxu0 0.0
    %583 = vmatpush1.msra.mxu0 0.0
    %584 = vmatprep.subr.mxu0 0.0
    %585 = vmatpush1.msra.mxu0 0.0
    %586 = vmatprep.subr.mxu0 0.0
    %587 = vmatpush1.msra.mxu0 0.0
    %588 = vmatprep.subr.mxu0 0.0
    %589 = vmatpush1.msra.mxu0 0.0
    %590 = vmatprep.subr.mxu0 0.0
    %591 = vmatpush1.msra.mxu0 0.0
    %592 = vmatprep.subr.mxu0 0.0
    %593 = vmatpush1.msra.mxu0 0.0
    %594 = vmatprep.subr.mxu0 0.0
    %595 = vmatpush1.msra.mxu0 0.0
    %596 = vmatprep.subr.mxu0 0.0
    %597 = vmatpush1.msra.mxu0 0.0
    %598 = vmatprep.subr.mxu0 0.0
    %599 = vmatpush1.msra.mxu0 0.0
    %600 = vmatprep.subr.mxu0 0.0
    %601 = vmatpush1.msra.mxu0 0.0
    %602 = vmatprep.subr.mxu0 0.0
    %603 = vmatpush1.msra.mxu0 0.0
    %604 = vmatprep.subr.mxu0 0.0
    %605 = vmatpush1.msra.mxu0 0.0
    %606 = vmatprep.subr.mxu0 0.0
    %607 = vmatpush1.msra.mxu0 0.0
    %608 = vmatprep.subr.mxu0 0.0
    %609 = vmatpush1.msra.mxu0 0.0
    %610 = vmatprep.subr.mxu0 0.0
    %611 = vmatpush1.msra.mxu0 0.0
    %612 = vmatprep.subr.mxu0 0.0
    %613 = vmatpush1.msra.mxu0 0.0
    %614 = vmatprep.subr.mxu0 0.0
    %615 = vmatpush1.msra.mxu0 0.0
    %616 = vmatprep.subr.mxu0 0.0
    %617 = vmatpush1.msra.mxu0 0.0
    %618 = vmatprep.subr.mxu0 0.0
    %619 = vmatpush1.msra.mxu0 0.0
    %620 = vmatprep.subr.mxu0 0.0
    %621 = vmatpush1.msra.mxu0 0.0
    %622 = vmatprep.subr.mxu0 0.0
    %623 = vmatpush1.msra.mxu0 0.0
    %624 = vmatprep.subr.mxu0 0.0
    %625 = vmatpush1.msra.mxu0 0.0
    %626 = vmatprep.subr.mxu0 0.0
    %627 = vmatpush1.msra.mxu0 0.0
    %628 = vmatprep.subr.mxu0 0.0
    %629 = vmatpush1.msra.mxu0 0.0
    %630 = vmatprep.subr.mxu0 0.0
    %631 = vmatpush1.msra.mxu0 0.0
    %632 = vmatprep.subr.mxu0 0.0
    %633 = vmatpush1.msra.mxu0 0.0
    %634 = vmatprep.subr.mxu0 0.0
    %635 = vmatpush1.msra.mxu0 0.0
    %636 = vmatprep.subr.mxu0 0.0
    %637 = vmatpush1.msra.mxu0 0.0
    %638 = vmatprep.subr.mxu0 0.0
    %639 = vmatpush1.msra.mxu0 0.0
    %640 = vmatprep.mubr.f32.mxu0 0.0
    %641 = vmatmul.mubr.f32.gmra.mrb[0].mxu0 %v87
    %v642 = vpop.f32.mrb[0].mxu0
    %v643 = vadd.f32 0.0, %v642
    %v644 = vpop.f32.mrb[0].mxu0
    %v645 = vadd.f32 0.0, %v644
    %646 = vdwg.mxu0
    %647 = vmatprep.subr.mxu0 %v40
    %648 = vmatpush1.msra.mxu0 %v39
    %649 = vmatprep.subr.mxu0 %v60
    %650 = vmatpush1.msra.mxu0 %v59
    %651 = vmatprep.subr.mxu0 %v136
    %652 = vmatpush1.msra.mxu0 %v133
    %653 = vmatprep.subr.mxu0 0.0
    %654 = vmatpush1.msra.mxu0 0.0
    %655 = vmatprep.subr.mxu0 0.0
    %656 = vmatpush1.msra.mxu0 0.0
    %657 = vmatprep.subr.mxu0 0.0
    %658 = vmatpush1.msra.mxu0 0.0
    %659 = vmatprep.subr.mxu0 0.0
    %660 = vmatpush1.msra.mxu0 0.0
    %661 = vmatprep.subr.mxu0 0.0
    %662 = vmatpush1.msra.mxu0 0.0
    %663 = vmatprep.subr.mxu0 0.0
    %664 = vmatpush1.msra.mxu0 0.0
    %665 = vmatprep.subr.mxu0 0.0
    %666 = vmatpush1.msra.mxu0 0.0
    %667 = vmatprep.subr.mxu0 0.0
    %668 = vmatpush1.msra.mxu0 0.0
    %669 = vmatprep.subr.mxu0 0.0
    %670 = vmatpush1.msra.mxu0 0.0
    %671 = vmatprep.subr.mxu0 0.0
    %672 = vmatpush1.msra.mxu0 0.0
    %673 = vmatprep.subr.mxu0 0.0
    %674 = vmatpush1.msra.mxu0 0.0
    %675 = vmatprep.subr.mxu0 0.0
    %676 = vmatpush1.msra.mxu0 0.0
    %677 = vmatprep.subr.mxu0 0.0
    %678 = vmatpush1.msra.mxu0 0.0
    %679 = vmatprep.subr.mxu0 0.0
    %680 = vmatpush1.msra.mxu0 0.0
    %681 = vmatprep.subr.mxu0 0.0
    %682 = vmatpush1.msra.mxu0 0.0
    %683 = vmatprep.subr.mxu0 0.0
    %684 = vmatpush1.msra.mxu0 0.0
    %685 = vmatprep.subr.mxu0 0.0
    %686 = vmatpush1.msra.mxu0 0.0
    %687 = vmatprep.subr.mxu0 0.0
    %688 = vmatpush1.msra.mxu0 0.0
    %689 = vmatprep.subr.mxu0 0.0
    %690 = vmatpush1.msra.mxu0 0.0
    %691 = vmatprep.subr.mxu0 0.0
    %692 = vmatpush1.msra.mxu0 0.0
    %693 = vmatprep.subr.mxu0 0.0
    %694 = vmatpush1.msra.mxu0 0.0
    %695 = vmatprep.subr.mxu0 0.0
    %696 = vmatpush1.msra.mxu0 0.0
    %697 = vmatprep.subr.mxu0 0.0
    %698 = vmatpush1.msra.mxu0 0.0
    %699 = vmatprep.subr.mxu0 0.0
    %700 = vmatpush1.msra.mxu0 0.0
    %701 = vmatprep.subr.mxu0 0.0
    %702 = vmatpush1.msra.mxu0 0.0
    %703 = vmatprep.subr.mxu0 0.0
    %704 = vmatpush1.msra.mxu0 0.0
    %705 = vmatprep.subr.mxu0 0.0
    %706 = vmatpush1.msra.mxu0 0.0
    %707 = vmatprep.subr.mxu0 0.0
    %708 = vmatpush1.msra.mxu0 0.0
    %709 = vmatprep.subr.mxu0 0.0
    %710 = vmatpush1.msra.mxu0 0.0
    %711 = vmatprep.mubr.f32.mxu0 0.0
    %712 = vmatmul.mubr.f32.gmra.mrb[0].mxu0 %v87
    %v713 = vpop.f32.mrb[0].mxu0
    %v714 = vadd.f32 0.0, %v713
    %v715 = vpop.f32.mrb[0].mxu0
    %v716 = vadd.f32 0.0, %v715
    %717 = vdwg.mxu0
    %718 = vmatprep.subr.mxu0 %v42
    %719 = vmatpush1.msra.mxu0 %v41
    %720 = vmatprep.subr.mxu0 %v62
    %721 = vmatpush1.msra.mxu0 %v61
    %722 = vmatprep.subr.mxu0 %v142
    %723 = vmatpush1.msra.mxu0 %v139
    %724 = vmatprep.subr.mxu0 0.0
    %725 = vmatpush1.msra.mxu0 0.0
    %726 = vmatprep.subr.mxu0 0.0
    %727 = vmatpush1.msra.mxu0 0.0
    %728 = vmatprep.subr.mxu0 0.0
    %729 = vmatpush1.msra.mxu0 0.0
    %730 = vmatprep.subr.mxu0 0.0
    %731 = vmatpush1.msra.mxu0 0.0
    %732 = vmatprep.subr.mxu0 0.0
    %733 = vmatpush1.msra.mxu0 0.0
    %734 = vmatprep.subr.mxu0 0.0
    %735 = vmatpush1.msra.mxu0 0.0
    %736 = vmatprep.subr.mxu0 0.0
    %737 = vmatpush1.msra.mxu0 0.0
    %738 = vmatprep.subr.mxu0 0.0
    %739 = vmatpush1.msra.mxu0 0.0
    %740 = vmatprep.subr.mxu0 0.0
    %741 = vmatpush1.msra.mxu0 0.0
    %742 = vmatprep.subr.mxu0 0.0
    %743 = vmatpush1.msra.mxu0 0.0
    %744 = vmatprep.subr.mxu0 0.0
    %745 = vmatpush1.msra.mxu0 0.0
    %746 = vmatprep.subr.mxu0 0.0
    %747 = vmatpush1.msra.mxu0 0.0
    %748 = vmatprep.subr.mxu0 0.0
    %749 = vmatpush1.msra.mxu0 0.0
    %750 = vmatprep.subr.mxu0 0.0
    %751 = vmatpush1.msra.mxu0 0.0
    %752 = vmatprep.subr.mxu0 0.0
    %753 = vmatpush1.msra.mxu0 0.0
    %754 = vmatprep.subr.mxu0 0.0
    %755 = vmatpush1.msra.mxu0 0.0
    %756 = vmatprep.subr.mxu0 0.0
    %757 = vmatpush1.msra.mxu0 0.0
    %758 = vmatprep.subr.mxu0 0.0
    %759 = vmatpush1.msra.mxu0 0.0
    %760 = vmatprep.subr.mxu0 0.0
    %761 = vmatpush1.msra.mxu0 0.0
    %762 = vmatprep.subr.mxu0 0.0
    %763 = vmatpush1.msra.mxu0 0.0
    %764 = vmatprep.subr.mxu0 0.0
    %765 = vmatpush1.msra.mxu0 0.0
    %766 = vmatprep.subr.mxu0 0.0
    %767 = vmatpush1.msra.mxu0 0.0
    %768 = vmatprep.subr.mxu0 0.0
    %769 = vmatpush1.msra.mxu0 0.0
    %770 = vmatprep.subr.mxu0 0.0
    %771 = vmatpush1.msra.mxu0 0.0
    %772 = vmatprep.subr.mxu0 0.0
    %773 = vmatpush1.msra.mxu0 0.0
    %774 = vmatprep.subr.mxu0 0.0
    %775 = vmatpush1.msra.mxu0 0.0
    %776 = vmatprep.subr.mxu0 0.0
    %777 = vmatpush1.msra.mxu0 0.0
    %778 = vmatprep.subr.mxu0 0.0
    %779 = vmatpush1.msra.mxu0 0.0
    %780 = vmatprep.subr.mxu0 0.0
    %781 = vmatpush1.msra.mxu0 0.0
    %782 = vmatprep.mubr.f32.mxu0 0.0
    %783 = vmatmul.mubr.f32.gmra.mrb[0].mxu0 %v87
    %v784 = vpop.f32.mrb[0].mxu0
    %v785 = vadd.f32 0.0, %v784
    %v786 = vpop.f32.mrb[0].mxu0
    %v787 = vadd.f32 0.0, %v786
    %788 = vdwg.mxu0
    %789 = vmatprep.subr.mxu0 %v44
    %790 = vmatpush1.msra.mxu0 %v43
    %791 = vmatprep.subr.mxu0 %v64
    %792 = vmatpush1.msra.mxu0 %v63
    %793 = vmatprep.subr.mxu0 %v148
    %794 = vmatpush1.msra.mxu0 %v145
    %795 = vmatprep.subr.mxu0 0.0
    %796 = vmatpush1.msra.mxu0 0.0
    %797 = vmatprep.subr.mxu0 0.0
    %798 = vmatpush1.msra.mxu0 0.0
    %799 = vmatprep.subr.mxu0 0.0
    %800 = vmatpush1.msra.mxu0 0.0
    %801 = vmatprep.subr.mxu0 0.0
    %802 = vmatpush1.msra.mxu0 0.0
    %803 = vmatprep.subr.mxu0 0.0
    %804 = vmatpush1.msra.mxu0 0.0
    %805 = vmatprep.subr.mxu0 0.0
    %806 = vmatpush1.msra.mxu0 0.0
    %807 = vmatprep.subr.mxu0 0.0
    %808 = vmatpush1.msra.mxu0 0.0
    %809 = vmatprep.subr.mxu0 0.0
    %810 = vmatpush1.msra.mxu0 0.0
    %811 = vmatprep.subr.mxu0 0.0
    %812 = vmatpush1.msra.mxu0 0.0
    %813 = vmatprep.subr.mxu0 0.0
    %814 = vmatpush1.msra.mxu0 0.0
    %815 = vmatprep.subr.mxu0 0.0
    %816 = vmatpush1.msra.mxu0 0.0
    %817 = vmatprep.subr.mxu0 0.0
    %818 = vmatpush1.msra.mxu0 0.0
    %819 = vmatprep.subr.mxu0 0.0
    %820 = vmatpush1.msra.mxu0 0.0
    %821 = vmatprep.subr.mxu0 0.0
    %822 = vmatpush1.msra.mxu0 0.0
    %823 = vmatprep.subr.mxu0 0.0
    %824 = vmatpush1.msra.mxu0 0.0
    %825 = vmatprep.subr.mxu0 0.0
    %826 = vmatpush1.msra.mxu0 0.0
    %827 = vmatprep.subr.mxu0 0.0
    %828 = vmatpush1.msra.mxu0 0.0
    %829 = vmatprep.subr.mxu0 0.0
    %830 = vmatpush1.msra.mxu0 0.0
    %831 = vmatprep.subr.mxu0 0.0
    %832 = vmatpush1.msra.mxu0 0.0
    %833 = vmatprep.subr.mxu0 0.0
    %834 = vmatpush1.msra.mxu0 0.0
    %835 = vmatprep.subr.mxu0 0.0
    %836 = vmatpush1.msra.mxu0 0.0
    %837 = vmatprep.subr.mxu0 0.0
    %838 = vmatpush1.msra.mxu0 0.0
    %839 = vmatprep.subr.mxu0 0.0
    %840 = vmatpush1.msra.mxu0 0.0
    %841 = vmatprep.subr.mxu0 0.0
    %842 = vmatpush1.msra.mxu0 0.0
    %843 = vmatprep.subr.mxu0 0.0
    %844 = vmatpush1.msra.mxu0 0.0
    %845 = vmatprep.subr.mxu0 0.0
    %846 = vmatpush1.msra.mxu0 0.0
    %847 = vmatprep.subr.mxu0 0.0
    %848 = vmatpush1.msra.mxu0 0.0
    %849 = vmatprep.subr.mxu0 0.0
    %850 = vmatpush1.msra.mxu0 0.0
    %851 = vmatprep.subr.mxu0 0.0
    %852 = vmatpush1.msra.mxu0 0.0
    %853 = vmatprep.mubr.f32.mxu0 0.0
    %854 = vmatmul.mubr.f32.gmra.mrb[0].mxu0 %v87
    %v855 = vpop.f32.mrb[0].mxu0
    %v856 = vadd.f32 0.0, %v855
    %v857 = vpop.f32.mrb[0].mxu0
    %v858 = vadd.f32 0.0, %v857
    %859 = vdwg.mxu0
    %v860 = vmul.f32 %v217, 0.01
    %v861 = vmul.f32 %v219, 0.01
    %v862 = vmul.f32 %v288, 0.01
    %v863 = vmul.f32 %v290, 0.01
    %v864 = vmul.f32 %v359, 0.01
    %v865 = vmul.f32 %v361, 0.01
    %v866 = vmul.f32 %v430, 0.01
    %v867 = vmul.f32 %v432, 0.01
    %v868 = vmul.f32 %v501, 0.01
    %v869 = vmul.f32 %v503, 0.01
    %v870 = vmul.f32 %v572, 0.01
    %v871 = vmul.f32 %v574, 0.01
    %v872 = vmul.f32 %v643, 0.01
    %v873 = vmul.f32 %v645, 0.01
    %v874 = vmul.f32 %v714, 0.01
    %v875 = vmul.f32 %v716, 0.01
    %v876 = vmul.f32 %v785, 0.01
    %v877 = vmul.f32 %v787, 0.01
    %v878 = vmul.f32 %v856, 0.01
    %v879 = vmul.f32 %v858, 0.01
    %v880 = vmax.f32 %v217, %v860
    %v881 = vmax.f32 %v219, %v861
    %v882 = vmax.f32 %v288, %v862
    %v883 = vmax.f32 %v290, %v863
    %v884 = vmax.f32 %v359, %v864
    %v885 = vmax.f32 %v361, %v865
    %v886 = vmax.f32 %v430, %v866
    %v887 = vmax.f32 %v432, %v867
    %v888 = vmax.f32 %v501, %v868
    %v889 = vmax.f32 %v503, %v869
    %v890 = vmax.f32 %v572, %v870
    %v891 = vmax.f32 %v574, %v871
    %v892 = vmax.f32 %v643, %v872
    %v893 = vmax.f32 %v645, %v873
    %v894 = vmax.f32 %v714, %v874
    %v895 = vmax.f32 %v716, %v875
    %v896 = vmax.f32 %v785, %v876
    %v897 = vmax.f32 %v787, %v877
    %v898 = vmax.f32 %v856, %v878
    %v899 = vmax.f32 %v858, %v879
    %v900 = vld [vmem:[%s3] ss:$8 sm:$0x3]
    %s901 = scalar_lea.vmem %s3, 1
    %v902 = vld [vmem:[%s901] ss:$8 sm:$0x3]
    %s903 = scalar_lea.vmem %s3, 2
    %v904 = vld [vmem:[%s903] ss:$8 sm:$0x3]
    %s905 = scalar_lea.vmem %s3, 3
    %v906 = vld [vmem:[%s905] ss:$8 sm:$0x3]
    %s907 = scalar_lea.vmem %s3, 4
    %v908 = vld [vmem:[%s907] ss:$8 sm:$0x3]
    %s909 = scalar_lea.vmem %s3, 5
    %v910 = vld [vmem:[%s909] ss:$8 sm:$0x3]
    %s911 = scalar_lea.vmem %s3, 6
    %v912 = vld [vmem:[%s911] ss:$8 sm:$0x3]
    %s913 = scalar_lea.vmem %s3, 7
    %v914 = vld [vmem:[%s913] ss:$8 sm:$0x3]
    %s915 = scalar_lea.vmem %s3, 16
    %v916 = vld [vmem:[%s915] ss:$8 sm:$0x3]
    %s917 = scalar_lea.vmem %s3, 17
    %v918 = vld [vmem:[%s917] ss:$8 sm:$0x3]
    %v919 = vld [vmem:[%s2] ss:$8 sm:$0x3]
    %v921 = vlaneseq
    %v922 = vshrl.u32 %v921, 7
    %v923 = vsub.s32 0, %v922
    %v924 = vrot.slane %v919, %v923
    %v925 = vlaneseq
    %v926 = vshrl.u32 %v925, 7
    %v927 = vsub.s32 1, %v926
    %v928 = vrot.slane %v919, %v927
    %v931 = vmul.f32 %v880, %v924
    %v932 = vmul.f32 %v881, %v928
    %v934 = vlaneseq
    %v935 = vshrl.u32 %v934, 7
    %v936 = vsub.s32 0, %v935
    %v937 = vrot.slane %v900, %v936
    %v938 = vlaneseq
    %v939 = vshrl.u32 %v938, 7
    %v940 = vsub.s32 1, %v939
    %v941 = vrot.slane %v900, %v940
    %v944 = vadd.f32 %v937, %v931
    %v945 = vadd.f32 %v941, %v932
    %s946 = scalar_lea.vmem %s2, 1
    %v947 = vld [vmem:[%s946] ss:$8 sm:$0x3]
    %v949 = vlaneseq
    %v950 = vshrl.u32 %v949, 7
    %v951 = vsub.s32 0, %v950
    %v952 = vrot.slane %v947, %v951
    %v953 = vlaneseq
    %v954 = vshrl.u32 %v953, 7
    %v955 = vsub.s32 1, %v954
    %v956 = vrot.slane %v947, %v955
    %v959 = vmul.f32 %v880, %v952
    %v960 = vmul.f32 %v881, %v956
    %v962 = vlaneseq
    %v963 = vshrl.u32 %v962, 7
    %v964 = vsub.s32 0, %v963
    %v965 = vrot.slane %v902, %v964
    %v966 = vlaneseq
    %v967 = vshrl.u32 %v966, 7
    %v968 = vsub.s32 1, %v967
    %v969 = vrot.slane %v902, %v968
    %v972 = vadd.f32 %v965, %v959
    %v973 = vadd.f32 %v969, %v960
    %s974 = scalar_lea.vmem %s2, 2
    %v975 = vld [vmem:[%s974] ss:$8 sm:$0x3]
    %v977 = vlaneseq
    %v978 = vshrl.u32 %v977, 7
    %v979 = vsub.s32 0, %v978
    %v980 = vrot.slane %v975, %v979
    %v981 = vlaneseq
    %v982 = vshrl.u32 %v981, 7
    %v983 = vsub.s32 1, %v982
    %v984 = vrot.slane %v975, %v983
    %v987 = vmul.f32 %v880, %v980
    %v988 = vmul.f32 %v881, %v984
    %v990 = vlaneseq
    %v991 = vshrl.u32 %v990, 7
    %v992 = vsub.s32 0, %v991
    %v993 = vrot.slane %v904, %v992
    %v994 = vlaneseq
    %v995 = vshrl.u32 %v994, 7
    %v996 = vsub.s32 1, %v995
    %v997 = vrot.slane %v904, %v996
    %v1000 = vadd.f32 %v993, %v987
    %v1001 = vadd.f32 %v997, %v988
    %s1002 = scalar_lea.vmem %s2, 3
    %v1003 = vld [vmem:[%s1002] ss:$8 sm:$0x3]
    %v1005 = vlaneseq
    %v1006 = vshrl.u32 %v1005, 7
    %v1007 = vsub.s32 0, %v1006
    %v1008 = vrot.slane %v1003, %v1007
    %v1009 = vlaneseq
    %v1010 = vshrl.u32 %v1009, 7
    %v1011 = vsub.s32 1, %v1010
    %v1012 = vrot.slane %v1003, %v1011
    %v1015 = vmul.f32 %v880, %v1008
    %v1016 = vmul.f32 %v881, %v1012
    %v1018 = vlaneseq
    %v1019 = vshrl.u32 %v1018, 7
    %v1020 = vsub.s32 0, %v1019
    %v1021 = vrot.slane %v906, %v1020
    %v1022 = vlaneseq
    %v1023 = vshrl.u32 %v1022, 7
    %v1024 = vsub.s32 1, %v1023
    %v1025 = vrot.slane %v906, %v1024
    %v1028 = vadd.f32 %v1021, %v1015
    %v1029 = vadd.f32 %v1025, %v1016
    %s1030 = scalar_lea.vmem %s2, 4
    %v1031 = vld [vmem:[%s1030] ss:$8 sm:$0x3]
    %v1033 = vlaneseq
    %v1034 = vshrl.u32 %v1033, 7
    %v1035 = vsub.s32 0, %v1034
    %v1036 = vrot.slane %v1031, %v1035
    %v1037 = vlaneseq
    %v1038 = vshrl.u32 %v1037, 7
    %v1039 = vsub.s32 1, %v1038
    %v1040 = vrot.slane %v1031, %v1039
    %v1043 = vmul.f32 %v880, %v1036
    %v1044 = vmul.f32 %v881, %v1040
    %v1046 = vlaneseq
    %v1047 = vshrl.u32 %v1046, 7
    %v1048 = vsub.s32 0, %v1047
    %v1049 = vrot.slane %v908, %v1048
    %v1050 = vlaneseq
    %v1051 = vshrl.u32 %v1050, 7
    %v1052 = vsub.s32 1, %v1051
    %v1053 = vrot.slane %v908, %v1052
    %v1056 = vadd.f32 %v1049, %v1043
    %v1057 = vadd.f32 %v1053, %v1044
    %s1058 = scalar_lea.vmem %s2, 5
    %v1059 = vld [vmem:[%s1058] ss:$8 sm:$0x3]
    %v1061 = vlaneseq
    %v1062 = vshrl.u32 %v1061, 7
    %v1063 = vsub.s32 0, %v1062
    %v1064 = vrot.slane %v1059, %v1063
    %v1065 = vlaneseq
    %v1066 = vshrl.u32 %v1065, 7
    %v1067 = vsub.s32 1, %v1066
    %v1068 = vrot.slane %v1059, %v1067
    %v1071 = vmul.f32 %v880, %v1064
    %v1072 = vmul.f32 %v881, %v1068
    %v1074 = vlaneseq
    %v1075 = vshrl.u32 %v1074, 7
    %v1076 = vsub.s32 0, %v1075
    %v1077 = vrot.slane %v910, %v1076
    %v1078 = vlaneseq
    %v1079 = vshrl.u32 %v1078, 7
    %v1080 = vsub.s32 1, %v1079
    %v1081 = vrot.slane %v910, %v1080
    %v1084 = vadd.f32 %v1077, %v1071
    %v1085 = vadd.f32 %v1081, %v1072
    %s1086 = scalar_lea.vmem %s2, 6
    %v1087 = vld [vmem:[%s1086] ss:$8 sm:$0x3]
    %v1089 = vlaneseq
    %v1090 = vshrl.u32 %v1089, 7
    %v1091 = vsub.s32 0, %v1090
    %v1092 = vrot.slane %v1087, %v1091
    %v1093 = vlaneseq
    %v1094 = vshrl.u32 %v1093, 7
    %v1095 = vsub.s32 1, %v1094
    %v1096 = vrot.slane %v1087, %v1095
    %v1099 = vmul.f32 %v880, %v1092
    %v1100 = vmul.f32 %v881, %v1096
    %v1102 = vlaneseq
    %v1103 = vshrl.u32 %v1102, 7
    %v1104 = vsub.s32 0, %v1103
    %v1105 = vrot.slane %v912, %v1104
    %v1106 = vlaneseq
    %v1107 = vshrl.u32 %v1106, 7
    %v1108 = vsub.s32 1, %v1107
    %v1109 = vrot.slane %v912, %v1108
    %v1112 = vadd.f32 %v1105, %v1099
    %v1113 = vadd.f32 %v1109, %v1100
    %s1114 = scalar_lea.vmem %s2, 7
    %v1115 = vld [vmem:[%s1114] ss:$8 sm:$0x3]
    %v1117 = vlaneseq
    %v1118 = vshrl.u32 %v1117, 7
    %v1119 = vsub.s32 0, %v1118
    %v1120 = vrot.slane %v1115, %v1119
    %v1121 = vlaneseq
    %v1122 = vshrl.u32 %v1121, 7
    %v1123 = vsub.s32 1, %v1122
    %v1124 = vrot.slane %v1115, %v1123
    %v1127 = vmul.f32 %v880, %v1120
    %v1128 = vmul.f32 %v881, %v1124
    %v1130 = vlaneseq
    %v1131 = vshrl.u32 %v1130, 7
    %v1132 = vsub.s32 0, %v1131
    %v1133 = vrot.slane %v914, %v1132
    %v1134 = vlaneseq
    %v1135 = vshrl.u32 %v1134, 7
    %v1136 = vsub.s32 1, %v1135
    %v1137 = vrot.slane %v914, %v1136
    %v1140 = vadd.f32 %v1133, %v1127
    %v1141 = vadd.f32 %v1137, %v1128
    %s1142 = scalar_lea.vmem %s2, 16
    %v1143 = vld [vmem:[%s1142] ss:$8 sm:$0x3]
    %v1145 = vlaneseq
    %v1146 = vshrl.u32 %v1145, 7
    %v1147 = vsub.s32 0, %v1146
    %v1148 = vrot.slane %v1143, %v1147
    %v1149 = vlaneseq
    %v1150 = vshrl.u32 %v1149, 7
    %v1151 = vsub.s32 1, %v1150
    %v1152 = vrot.slane %v1143, %v1151
    %v1155 = vmul.f32 %v880, %v1148
    %v1156 = vmul.f32 %v881, %v1152
    %v1158 = vlaneseq
    %v1159 = vshrl.u32 %v1158, 7
    %v1160 = vsub.s32 0, %v1159
    %v1161 = vrot.slane %v916, %v1160
    %v1162 = vlaneseq
    %v1163 = vshrl.u32 %v1162, 7
    %v1164 = vsub.s32 1, %v1163
    %v1165 = vrot.slane %v916, %v1164
    %v1168 = vadd.f32 %v1161, %v1155
    %v1169 = vadd.f32 %v1165, %v1156
    %s1170 = scalar_lea.vmem %s2, 17
    %v1171 = vld [vmem:[%s1170] ss:$8 sm:$0x3]
    %v1173 = vlaneseq
    %v1174 = vshrl.u32 %v1173, 7
    %v1175 = vsub.s32 0, %v1174
    %v1176 = vrot.slane %v1171, %v1175
    %v1177 = vlaneseq
    %v1178 = vshrl.u32 %v1177, 7
    %v1179 = vsub.s32 1, %v1178
    %v1180 = vrot.slane %v1171, %v1179
    %v1183 = vmul.f32 %v880, %v1176
    %v1184 = vmul.f32 %v881, %v1180
    %v1186 = vlaneseq
    %v1187 = vshrl.u32 %v1186, 7
    %v1188 = vsub.s32 0, %v1187
    %v1189 = vrot.slane %v918, %v1188
    %v1190 = vlaneseq
    %v1191 = vshrl.u32 %v1190, 7
    %v1192 = vsub.s32 1, %v1191
    %v1193 = vrot.slane %v918, %v1192
    %v1196 = vadd.f32 %v1189, %v1183
    %v1197 = vadd.f32 %v1193, %v1184
    %s1198 = scalar_lea.vmem %s2, 18
    %v1199 = vld [vmem:[%s1198] ss:$8 sm:$0x3]
    %v1201 = vlaneseq
    %v1202 = vshrl.u32 %v1201, 7
    %v1203 = vsub.s32 0, %v1202
    %v1204 = vrot.slane %v1199, %v1203
    %v1205 = vlaneseq
    %v1206 = vshrl.u32 %v1205, 7
    %v1207 = vsub.s32 1, %v1206
    %v1208 = vrot.slane %v1199, %v1207
    %v1211 = vmul.f32 %v882, %v1204
    %v1212 = vmul.f32 %v883, %v1208
    %v1213 = vadd.f32 %v944, %v1211
    %v1214 = vadd.f32 %v945, %v1212
    %s1215 = scalar_lea.vmem %s2, 19
    %v1216 = vld [vmem:[%s1215] ss:$8 sm:$0x3]
    %v1218 = vlaneseq
    %v1219 = vshrl.u32 %v1218, 7
    %v1220 = vsub.s32 0, %v1219
    %v1221 = vrot.slane %v1216, %v1220
    %v1222 = vlaneseq
    %v1223 = vshrl.u32 %v1222, 7
    %v1224 = vsub.s32 1, %v1223
    %v1225 = vrot.slane %v1216, %v1224
    %v1228 = vmul.f32 %v882, %v1221
    %v1229 = vmul.f32 %v883, %v1225
    %v1230 = vadd.f32 %v972, %v1228
    %v1231 = vadd.f32 %v973, %v1229
    %s1232 = scalar_lea.vmem %s2, 20
    %v1233 = vld [vmem:[%s1232] ss:$8 sm:$0x3]
    %v1235 = vlaneseq
    %v1236 = vshrl.u32 %v1235, 7
    %v1237 = vsub.s32 0, %v1236
    %v1238 = vrot.slane %v1233, %v1237
    %v1239 = vlaneseq
    %v1240 = vshrl.u32 %v1239, 7
    %v1241 = vsub.s32 1, %v1240
    %v1242 = vrot.slane %v1233, %v1241
    %v1245 = vmul.f32 %v882, %v1238
    %v1246 = vmul.f32 %v883, %v1242
    %v1247 = vadd.f32 %v1000, %v1245
    %v1248 = vadd.f32 %v1001, %v1246
    %s1249 = scalar_lea.vmem %s2, 21
    %v1250 = vld [vmem:[%s1249] ss:$8 sm:$0x3]
    %v1252 = vlaneseq
    %v1253 = vshrl.u32 %v1252, 7
    %v1254 = vsub.s32 0, %v1253
    %v1255 = vrot.slane %v1250, %v1254
    %v1256 = vlaneseq
    %v1257 = vshrl.u32 %v1256, 7
    %v1258 = vsub.s32 1, %v1257
    %v1259 = vrot.slane %v1250, %v1258
    %v1262 = vmul.f32 %v882, %v1255
    %v1263 = vmul.f32 %v883, %v1259
    %v1264 = vadd.f32 %v1028, %v1262
    %v1265 = vadd.f32 %v1029, %v1263
    %s1266 = scalar_lea.vmem %s2, 22
    %v1267 = vld [vmem:[%s1266] ss:$8 sm:$0x3]
    %v1269 = vlaneseq
    %v1270 = vshrl.u32 %v1269, 7
    %v1271 = vsub.s32 0, %v1270
    %v1272 = vrot.slane %v1267, %v1271
    %v1273 = vlaneseq
    %v1274 = vshrl.u32 %v1273, 7
    %v1275 = vsub.s32 1, %v1274
    %v1276 = vrot.slane %v1267, %v1275
    %v1279 = vmul.f32 %v882, %v1272
    %v1280 = vmul.f32 %v883, %v1276
    %v1281 = vadd.f32 %v1056, %v1279
    %v1282 = vadd.f32 %v1057, %v1280
    %s1283 = scalar_lea.vmem %s2, 23
    %v1284 = vld [vmem:[%s1283] ss:$8 sm:$0x3]
    %v1286 = vlaneseq
    %v1287 = vshrl.u32 %v1286, 7
    %v1288 = vsub.s32 0, %v1287
    %v1289 = vrot.slane %v1284, %v1288
    %v1290 = vlaneseq
    %v1291 = vshrl.u32 %v1290, 7
    %v1292 = vsub.s32 1, %v1291
    %v1293 = vrot.slane %v1284, %v1292
    %v1296 = vmul.f32 %v882, %v1289
    %v1297 = vmul.f32 %v883, %v1293
    %v1298 = vadd.f32 %v1084, %v1296
    %v1299 = vadd.f32 %v1085, %v1297
    %s1300 = scalar_lea.vmem %s2, 32
    %v1301 = vld [vmem:[%s1300] ss:$8 sm:$0x3]
    %v1303 = vlaneseq
    %v1304 = vshrl.u32 %v1303, 7
    %v1305 = vsub.s32 0, %v1304
    %v1306 = vrot.slane %v1301, %v1305
    %v1307 = vlaneseq
    %v1308 = vshrl.u32 %v1307, 7
    %v1309 = vsub.s32 1, %v1308
    %v1310 = vrot.slane %v1301, %v1309
    %v1313 = vmul.f32 %v882, %v1306
    %v1314 = vmul.f32 %v883, %v1310
    %v1315 = vadd.f32 %v1112, %v1313
    %v1316 = vadd.f32 %v1113, %v1314
    %s1317 = scalar_lea.vmem %s2, 33
    %v1318 = vld [vmem:[%s1317] ss:$8 sm:$0x3]
    %v1320 = vlaneseq
    %v1321 = vshrl.u32 %v1320, 7
    %v1322 = vsub.s32 0, %v1321
    %v1323 = vrot.slane %v1318, %v1322
    %v1324 = vlaneseq
    %v1325 = vshrl.u32 %v1324, 7
    %v1326 = vsub.s32 1, %v1325
    %v1327 = vrot.slane %v1318, %v1326
    %v1330 = vmul.f32 %v882, %v1323
    %v1331 = vmul.f32 %v883, %v1327
    %v1332 = vadd.f32 %v1140, %v1330
    %v1333 = vadd.f32 %v1141, %v1331
    %s1334 = scalar_lea.vmem %s2, 34
    %v1335 = vld [vmem:[%s1334] ss:$8 sm:$0x3]
    %v1337 = vlaneseq
    %v1338 = vshrl.u32 %v1337, 7
    %v1339 = vsub.s32 0, %v1338
    %v1340 = vrot.slane %v1335, %v1339
    %v1341 = vlaneseq
    %v1342 = vshrl.u32 %v1341, 7
    %v1343 = vsub.s32 1, %v1342
    %v1344 = vrot.slane %v1335, %v1343
    %v1347 = vmul.f32 %v882, %v1340
    %v1348 = vmul.f32 %v883, %v1344
    %v1349 = vadd.f32 %v1168, %v1347
    %v1350 = vadd.f32 %v1169, %v1348
    %s1351 = scalar_lea.vmem %s2, 35
    %v1352 = vld [vmem:[%s1351] ss:$8 sm:$0x3]
    %v1354 = vlaneseq
    %v1355 = vshrl.u32 %v1354, 7
    %v1356 = vsub.s32 0, %v1355
    %v1357 = vrot.slane %v1352, %v1356
    %v1358 = vlaneseq
    %v1359 = vshrl.u32 %v1358, 7
    %v1360 = vsub.s32 1, %v1359
    %v1361 = vrot.slane %v1352, %v1360
    %v1364 = vmul.f32 %v882, %v1357
    %v1365 = vmul.f32 %v883, %v1361
    %v1366 = vadd.f32 %v1196, %v1364
    %v1367 = vadd.f32 %v1197, %v1365
    %s1368 = scalar_lea.vmem %s2, 36
    %v1369 = vld [vmem:[%s1368] ss:$8 sm:$0x3]
    %v1371 = vlaneseq
    %v1372 = vshrl.u32 %v1371, 7
    %v1373 = vsub.s32 0, %v1372
    %v1374 = vrot.slane %v1369, %v1373
    %v1375 = vlaneseq
    %v1376 = vshrl.u32 %v1375, 7
    %v1377 = vsub.s32 1, %v1376
    %v1378 = vrot.slane %v1369, %v1377
    %v1381 = vmul.f32 %v884, %v1374
    %v1382 = vmul.f32 %v885, %v1378
    %v1383 = vadd.f32 %v1213, %v1381
    %v1384 = vadd.f32 %v1214, %v1382
    %s1385 = scalar_lea.vmem %s2, 37
    %v1386 = vld [vmem:[%s1385] ss:$8 sm:$0x3]
    %v1388 = vlaneseq
    %v1389 = vshrl.u32 %v1388, 7
    %v1390 = vsub.s32 0, %v1389
    %v1391 = vrot.slane %v1386, %v1390
    %v1392 = vlaneseq
    %v1393 = vshrl.u32 %v1392, 7
    %v1394 = vsub.s32 1, %v1393
    %v1395 = vrot.slane %v1386, %v1394
    %v1398 = vmul.f32 %v884, %v1391
    %v1399 = vmul.f32 %v885, %v1395
    %v1400 = vadd.f32 %v1230, %v1398
    %v1401 = vadd.f32 %v1231, %v1399
    %s1402 = scalar_lea.vmem %s2, 38
    %v1403 = vld [vmem:[%s1402] ss:$8 sm:$0x3]
    %v1405 = vlaneseq
    %v1406 = vshrl.u32 %v1405, 7
    %v1407 = vsub.s32 0, %v1406
    %v1408 = vrot.slane %v1403, %v1407
    %v1409 = vlaneseq
    %v1410 = vshrl.u32 %v1409, 7
    %v1411 = vsub.s32 1, %v1410
    %v1412 = vrot.slane %v1403, %v1411
    %v1415 = vmul.f32 %v884, %v1408
    %v1416 = vmul.f32 %v885, %v1412
    %v1417 = vadd.f32 %v1247, %v1415
    %v1418 = vadd.f32 %v1248, %v1416
    %s1419 = scalar_lea.vmem %s2, 39
    %v1420 = vld [vmem:[%s1419] ss:$8 sm:$0x3]
    %v1422 = vlaneseq
    %v1423 = vshrl.u32 %v1422, 7
    %v1424 = vsub.s32 0, %v1423
    %v1425 = vrot.slane %v1420, %v1424
    %v1426 = vlaneseq
    %v1427 = vshrl.u32 %v1426, 7
    %v1428 = vsub.s32 1, %v1427
    %v1429 = vrot.slane %v1420, %v1428
    %v1432 = vmul.f32 %v884, %v1425
    %v1433 = vmul.f32 %v885, %v1429
    %v1434 = vadd.f32 %v1264, %v1432
    %v1435 = vadd.f32 %v1265, %v1433
    %s1436 = scalar_lea.vmem %s2, 48
    %v1437 = vld [vmem:[%s1436] ss:$8 sm:$0x3]
    %v1439 = vlaneseq
    %v1440 = vshrl.u32 %v1439, 7
    %v1441 = vsub.s32 0, %v1440
    %v1442 = vrot.slane %v1437, %v1441
    %v1443 = vlaneseq
    %v1444 = vshrl.u32 %v1443, 7
    %v1445 = vsub.s32 1, %v1444
    %v1446 = vrot.slane %v1437, %v1445
    %v1449 = vmul.f32 %v884, %v1442
    %v1450 = vmul.f32 %v885, %v1446
    %v1451 = vadd.f32 %v1281, %v1449
    %v1452 = vadd.f32 %v1282, %v1450
    %s1453 = scalar_lea.vmem %s2, 49
    %v1454 = vld [vmem:[%s1453] ss:$8 sm:$0x3]
    %v1456 = vlaneseq
    %v1457 = vshrl.u32 %v1456, 7
    %v1458 = vsub.s32 0, %v1457
    %v1459 = vrot.slane %v1454, %v1458
    %v1460 = vlaneseq
    %v1461 = vshrl.u32 %v1460, 7
    %v1462 = vsub.s32 1, %v1461
    %v1463 = vrot.slane %v1454, %v1462
    %v1466 = vmul.f32 %v884, %v1459
    %v1467 = vmul.f32 %v885, %v1463
    %v1468 = vadd.f32 %v1298, %v1466
    %v1469 = vadd.f32 %v1299, %v1467
    %s1470 = scalar_lea.vmem %s2, 50
    %v1471 = vld [vmem:[%s1470] ss:$8 sm:$0x3]
    %v1473 = vlaneseq
    %v1474 = vshrl.u32 %v1473, 7
    %v1475 = vsub.s32 0, %v1474
    %v1476 = vrot.slane %v1471, %v1475
    %v1477 = vlaneseq
    %v1478 = vshrl.u32 %v1477, 7
    %v1479 = vsub.s32 1, %v1478
    %v1480 = vrot.slane %v1471, %v1479
    %v1483 = vmul.f32 %v884, %v1476
    %v1484 = vmul.f32 %v885, %v1480
    %v1485 = vadd.f32 %v1315, %v1483
    %v1486 = vadd.f32 %v1316, %v1484
    %s1487 = scalar_lea.vmem %s2, 51
    %v1488 = vld [vmem:[%s1487] ss:$8 sm:$0x3]
    %v1490 = vlaneseq
    %v1491 = vshrl.u32 %v1490, 7
    %v1492 = vsub.s32 0, %v1491
    %v1493 = vrot.slane %v1488, %v1492
    %v1494 = vlaneseq
    %v1495 = vshrl.u32 %v1494, 7
    %v1496 = vsub.s32 1, %v1495
    %v1497 = vrot.slane %v1488, %v1496
    %v1500 = vmul.f32 %v884, %v1493
    %v1501 = vmul.f32 %v885, %v1497
    %v1502 = vadd.f32 %v1332, %v1500
    %v1503 = vadd.f32 %v1333, %v1501
    %s1504 = scalar_lea.vmem %s2, 52
    %v1505 = vld [vmem:[%s1504] ss:$8 sm:$0x3]
    %v1507 = vlaneseq
    %v1508 = vshrl.u32 %v1507, 7
    %v1509 = vsub.s32 0, %v1508
    %v1510 = vrot.slane %v1505, %v1509
    %v1511 = vlaneseq
    %v1512 = vshrl.u32 %v1511, 7
    %v1513 = vsub.s32 1, %v1512
    %v1514 = vrot.slane %v1505, %v1513
    %v1517 = vmul.f32 %v884, %v1510
    %v1518 = vmul.f32 %v885, %v1514
    %v1519 = vadd.f32 %v1349, %v1517
    %v1520 = vadd.f32 %v1350, %v1518
    %s1521 = scalar_lea.vmem %s2, 53
    %v1522 = vld [vmem:[%s1521] ss:$8 sm:$0x3]
    %v1524 = vlaneseq
    %v1525 = vshrl.u32 %v1524, 7
    %v1526 = vsub.s32 0, %v1525
    %v1527 = vrot.slane %v1522, %v1526
    %v1528 = vlaneseq
    %v1529 = vshrl.u32 %v1528, 7
    %v1530 = vsub.s32 1, %v1529
    %v1531 = vrot.slane %v1522, %v1530
    %v1534 = vmul.f32 %v884, %v1527
    %v1535 = vmul.f32 %v885, %v1531
    %v1536 = vadd.f32 %v1366, %v1534
    %v1537 = vadd.f32 %v1367, %v1535
    %s1538 = scalar_lea.vmem %s2, 54
    %v1539 = vld [vmem:[%s1538] ss:$8 sm:$0x3]
    %v1541 = vlaneseq
    %v1542 = vshrl.u32 %v1541, 7
    %v1543 = vsub.s32 0, %v1542
    %v1544 = vrot.slane %v1539, %v1543
    %v1545 = vlaneseq
    %v1546 = vshrl.u32 %v1545, 7
    %v1547 = vsub.s32 1, %v1546
    %v1548 = vrot.slane %v1539, %v1547
    %v1551 = vmul.f32 %v886, %v1544
    %v1552 = vmul.f32 %v887, %v1548
    %v1553 = vadd.f32 %v1383, %v1551
    %v1554 = vadd.f32 %v1384, %v1552
    %s1555 = scalar_lea.vmem %s2, 55
    %v1556 = vld [vmem:[%s1555] ss:$8 sm:$0x3]
    %v1558 = vlaneseq
    %v1559 = vshrl.u32 %v1558, 7
    %v1560 = vsub.s32 0, %v1559
    %v1561 = vrot.slane %v1556, %v1560
    %v1562 = vlaneseq
    %v1563 = vshrl.u32 %v1562, 7
    %v1564 = vsub.s32 1, %v1563
    %v1565 = vrot.slane %v1556, %v1564
    %v1568 = vmul.f32 %v886, %v1561
    %v1569 = vmul.f32 %v887, %v1565
    %v1570 = vadd.f32 %v1400, %v1568
    %v1571 = vadd.f32 %v1401, %v1569
    %s1572 = scalar_lea.vmem %s2, 64
    %v1573 = vld [vmem:[%s1572] ss:$8 sm:$0x3]
    %v1575 = vlaneseq
    %v1576 = vshrl.u32 %v1575, 7
    %v1577 = vsub.s32 0, %v1576
    %v1578 = vrot.slane %v1573, %v1577
    %v1579 = vlaneseq
    %v1580 = vshrl.u32 %v1579, 7
    %v1581 = vsub.s32 1, %v1580
    %v1582 = vrot.slane %v1573, %v1581
    %v1585 = vmul.f32 %v886, %v1578
    %v1586 = vmul.f32 %v887, %v1582
    %v1587 = vadd.f32 %v1417, %v1585
    %v1588 = vadd.f32 %v1418, %v1586
    %s1589 = scalar_lea.vmem %s2, 65
    %v1590 = vld [vmem:[%s1589] ss:$8 sm:$0x3]
    %v1592 = vlaneseq
    %v1593 = vshrl.u32 %v1592, 7
    %v1594 = vsub.s32 0, %v1593
    %v1595 = vrot.slane %v1590, %v1594
    %v1596 = vlaneseq
    %v1597 = vshrl.u32 %v1596, 7
    %v1598 = vsub.s32 1, %v1597
    %v1599 = vrot.slane %v1590, %v1598
    %v1602 = vmul.f32 %v886, %v1595
    %v1603 = vmul.f32 %v887, %v1599
    %v1604 = vadd.f32 %v1434, %v1602
    %v1605 = vadd.f32 %v1435, %v1603
    %s1606 = scalar_lea.vmem %s2, 66
    %v1607 = vld [vmem:[%s1606] ss:$8 sm:$0x3]
    %v1609 = vlaneseq
    %v1610 = vshrl.u32 %v1609, 7
    %v1611 = vsub.s32 0, %v1610
    %v1612 = vrot.slane %v1607, %v1611
    %v1613 = vlaneseq
    %v1614 = vshrl.u32 %v1613, 7
    %v1615 = vsub.s32 1, %v1614
    %v1616 = vrot.slane %v1607, %v1615
    %v1619 = vmul.f32 %v886, %v1612
    %v1620 = vmul.f32 %v887, %v1616
    %v1621 = vadd.f32 %v1451, %v1619
    %v1622 = vadd.f32 %v1452, %v1620
    %s1623 = scalar_lea.vmem %s2, 67
    %v1624 = vld [vmem:[%s1623] ss:$8 sm:$0x3]
    %v1626 = vlaneseq
    %v1627 = vshrl.u32 %v1626, 7
    %v1628 = vsub.s32 0, %v1627
    %v1629 = vrot.slane %v1624, %v1628
    %v1630 = vlaneseq
    %v1631 = vshrl.u32 %v1630, 7
    %v1632 = vsub.s32 1, %v1631
    %v1633 = vrot.slane %v1624, %v1632
    %v1636 = vmul.f32 %v886, %v1629
    %v1637 = vmul.f32 %v887, %v1633
    %v1638 = vadd.f32 %v1468, %v1636
    %v1639 = vadd.f32 %v1469, %v1637
    %s1640 = scalar_lea.vmem %s2, 68
    %v1641 = vld [vmem:[%s1640] ss:$8 sm:$0x3]
    %v1643 = vlaneseq
    %v1644 = vshrl.u32 %v1643, 7
    %v1645 = vsub.s32 0, %v1644
    %v1646 = vrot.slane %v1641, %v1645
    %v1647 = vlaneseq
    %v1648 = vshrl.u32 %v1647, 7
    %v1649 = vsub.s32 1, %v1648
    %v1650 = vrot.slane %v1641, %v1649
    %v1653 = vmul.f32 %v886, %v1646
    %v1654 = vmul.f32 %v887, %v1650
    %v1655 = vadd.f32 %v1485, %v1653
    %v1656 = vadd.f32 %v1486, %v1654
    %s1657 = scalar_lea.vmem %s2, 69
    %v1658 = vld [vmem:[%s1657] ss:$8 sm:$0x3]
    %v1660 = vlaneseq
    %v1661 = vshrl.u32 %v1660, 7
    %v1662 = vsub.s32 0, %v1661
    %v1663 = vrot.slane %v1658, %v1662
    %v1664 = vlaneseq
    %v1665 = vshrl.u32 %v1664, 7
    %v1666 = vsub.s32 1, %v1665
    %v1667 = vrot.slane %v1658, %v1666
    %v1670 = vmul.f32 %v886, %v1663
    %v1671 = vmul.f32 %v887, %v1667
    %v1672 = vadd.f32 %v1502, %v1670
    %v1673 = vadd.f32 %v1503, %v1671
    %s1674 = scalar_lea.vmem %s2, 70
    %v1675 = vld [vmem:[%s1674] ss:$8 sm:$0x3]
    %v1677 = vlaneseq
    %v1678 = vshrl.u32 %v1677, 7
    %v1679 = vsub.s32 0, %v1678
    %v1680 = vrot.slane %v1675, %v1679
    %v1681 = vlaneseq
    %v1682 = vshrl.u32 %v1681, 7
    %v1683 = vsub.s32 1, %v1682
    %v1684 = vrot.slane %v1675, %v1683
    %v1687 = vmul.f32 %v886, %v1680
    %v1688 = vmul.f32 %v887, %v1684
    %v1689 = vadd.f32 %v1519, %v1687
    %v1690 = vadd.f32 %v1520, %v1688
    %s1691 = scalar_lea.vmem %s2, 71
    %v1692 = vld [vmem:[%s1691] ss:$8 sm:$0x3]
    %v1694 = vlaneseq
    %v1695 = vshrl.u32 %v1694, 7
    %v1696 = vsub.s32 0, %v1695
    %v1697 = vrot.slane %v1692, %v1696
    %v1698 = vlaneseq
    %v1699 = vshrl.u32 %v1698, 7
    %v1700 = vsub.s32 1, %v1699
    %v1701 = vrot.slane %v1692, %v1700
    %v1704 = vmul.f32 %v886, %v1697
    %v1705 = vmul.f32 %v887, %v1701
    %v1706 = vadd.f32 %v1536, %v1704
    %v1707 = vadd.f32 %v1537, %v1705
    %s1708 = scalar_lea.vmem %s2, 80
    %v1709 = vld [vmem:[%s1708] ss:$8 sm:$0x3]
    %v1711 = vlaneseq
    %v1712 = vshrl.u32 %v1711, 7
    %v1713 = vsub.s32 0, %v1712
    %v1714 = vrot.slane %v1709, %v1713
    %v1715 = vlaneseq
    %v1716 = vshrl.u32 %v1715, 7
    %v1717 = vsub.s32 1, %v1716
    %v1718 = vrot.slane %v1709, %v1717
    %v1721 = vmul.f32 %v888, %v1714
    %v1722 = vmul.f32 %v889, %v1718
    %v1723 = vadd.f32 %v1553, %v1721
    %v1724 = vadd.f32 %v1554, %v1722
    %s1725 = scalar_lea.vmem %s2, 81
    %v1726 = vld [vmem:[%s1725] ss:$8 sm:$0x3]
    %v1728 = vlaneseq
    %v1729 = vshrl.u32 %v1728, 7
    %v1730 = vsub.s32 0, %v1729
    %v1731 = vrot.slane %v1726, %v1730
    %v1732 = vlaneseq
    %v1733 = vshrl.u32 %v1732, 7
    %v1734 = vsub.s32 1, %v1733
    %v1735 = vrot.slane %v1726, %v1734
    %v1738 = vmul.f32 %v888, %v1731
    %v1739 = vmul.f32 %v889, %v1735
    %v1740 = vadd.f32 %v1570, %v1738
    %v1741 = vadd.f32 %v1571, %v1739
    %s1742 = scalar_lea.vmem %s2, 82
    %v1743 = vld [vmem:[%s1742] ss:$8 sm:$0x3]
    %v1745 = vlaneseq
    %v1746 = vshrl.u32 %v1745, 7
    %v1747 = vsub.s32 0, %v1746
    %v1748 = vrot.slane %v1743, %v1747
    %v1749 = vlaneseq
    %v1750 = vshrl.u32 %v1749, 7
    %v1751 = vsub.s32 1, %v1750
    %v1752 = vrot.slane %v1743, %v1751
    %v1755 = vmul.f32 %v888, %v1748
    %v1756 = vmul.f32 %v889, %v1752
    %v1757 = vadd.f32 %v1587, %v1755
    %v1758 = vadd.f32 %v1588, %v1756
    %s1759 = scalar_lea.vmem %s2, 83
    %v1760 = vld [vmem:[%s1759] ss:$8 sm:$0x3]
    %v1762 = vlaneseq
    %v1763 = vshrl.u32 %v1762, 7
    %v1764 = vsub.s32 0, %v1763
    %v1765 = vrot.slane %v1760, %v1764
    %v1766 = vlaneseq
    %v1767 = vshrl.u32 %v1766, 7
    %v1768 = vsub.s32 1, %v1767
    %v1769 = vrot.slane %v1760, %v1768
    %v1772 = vmul.f32 %v888, %v1765
    %v1773 = vmul.f32 %v889, %v1769
    %v1774 = vadd.f32 %v1604, %v1772
    %v1775 = vadd.f32 %v1605, %v1773
    %s1776 = scalar_lea.vmem %s2, 84
    %v1777 = vld [vmem:[%s1776] ss:$8 sm:$0x3]
    %v1779 = vlaneseq
    %v1780 = vshrl.u32 %v1779, 7
    %v1781 = vsub.s32 0, %v1780
    %v1782 = vrot.slane %v1777, %v1781
    %v1783 = vlaneseq
    %v1784 = vshrl.u32 %v1783, 7
    %v1785 = vsub.s32 1, %v1784
    %v1786 = vrot.slane %v1777, %v1785
    %v1789 = vmul.f32 %v888, %v1782
    %v1790 = vmul.f32 %v889, %v1786
    %v1791 = vadd.f32 %v1621, %v1789
    %v1792 = vadd.f32 %v1622, %v1790
    %s1793 = scalar_lea.vmem %s2, 85
    %v1794 = vld [vmem:[%s1793] ss:$8 sm:$0x3]
    %v1796 = vlaneseq
    %v1797 = vshrl.u32 %v1796, 7
    %v1798 = vsub.s32 0, %v1797
    %v1799 = vrot.slane %v1794, %v1798
    %v1800 = vlaneseq
    %v1801 = vshrl.u32 %v1800, 7
    %v1802 = vsub.s32 1, %v1801
    %v1803 = vrot.slane %v1794, %v1802
    %v1806 = vmul.f32 %v888, %v1799
    %v1807 = vmul.f32 %v889, %v1803
    %v1808 = vadd.f32 %v1638, %v1806
    %v1809 = vadd.f32 %v1639, %v1807
    %s1810 = scalar_lea.vmem %s2, 86
    %v1811 = vld [vmem:[%s1810] ss:$8 sm:$0x3]
    %v1813 = vlaneseq
    %v1814 = vshrl.u32 %v1813, 7
    %v1815 = vsub.s32 0, %v1814
    %v1816 = vrot.slane %v1811, %v1815
    %v1817 = vlaneseq
    %v1818 = vshrl.u32 %v1817, 7
    %v1819 = vsub.s32 1, %v1818
    %v1820 = vrot.slane %v1811, %v1819
    %v1823 = vmul.f32 %v888, %v1816
    %v1824 = vmul.f32 %v889, %v1820
    %v1825 = vadd.f32 %v1655, %v1823
    %v1826 = vadd.f32 %v1656, %v1824
    %s1827 = scalar_lea.vmem %s2, 87
    %v1828 = vld [vmem:[%s1827] ss:$8 sm:$0x3]
    %v1830 = vlaneseq
    %v1831 = vshrl.u32 %v1830, 7
    %v1832 = vsub.s32 0, %v1831
    %v1833 = vrot.slane %v1828, %v1832
    %v1834 = vlaneseq
    %v1835 = vshrl.u32 %v1834, 7
    %v1836 = vsub.s32 1, %v1835
    %v1837 = vrot.slane %v1828, %v1836
    %v1840 = vmul.f32 %v888, %v1833
    %v1841 = vmul.f32 %v889, %v1837
    %v1842 = vadd.f32 %v1672, %v1840
    %v1843 = vadd.f32 %v1673, %v1841
    %s1844 = scalar_lea.vmem %s2, 96
    %v1845 = vld [vmem:[%s1844] ss:$8 sm:$0x3]
    %v1847 = vlaneseq
    %v1848 = vshrl.u32 %v1847, 7
    %v1849 = vsub.s32 0, %v1848
    %v1850 = vrot.slane %v1845, %v1849
    %v1851 = vlaneseq
    %v1852 = vshrl.u32 %v1851, 7
    %v1853 = vsub.s32 1, %v1852
    %v1854 = vrot.slane %v1845, %v1853
    %v1857 = vmul.f32 %v888, %v1850
    %v1858 = vmul.f32 %v889, %v1854
    %v1859 = vadd.f32 %v1689, %v1857
    %v1860 = vadd.f32 %v1690, %v1858
    %s1861 = scalar_lea.vmem %s2, 97
    %v1862 = vld [vmem:[%s1861] ss:$8 sm:$0x3]
    %v1864 = vlaneseq
    %v1865 = vshrl.u32 %v1864, 7
    %v1866 = vsub.s32 0, %v1865
    %v1867 = vrot.slane %v1862, %v1866
    %v1868 = vlaneseq
    %v1869 = vshrl.u32 %v1868, 7
    %v1870 = vsub.s32 1, %v1869
    %v1871 = vrot.slane %v1862, %v1870
    %v1874 = vmul.f32 %v888, %v1867
    %v1875 = vmul.f32 %v889, %v1871
    %v1876 = vadd.f32 %v1706, %v1874
    %v1877 = vadd.f32 %v1707, %v1875
    %s1878 = scalar_lea.vmem %s2, 98
    %v1879 = vld [vmem:[%s1878] ss:$8 sm:$0x3]
    %v1881 = vlaneseq
    %v1882 = vshrl.u32 %v1881, 7
    %v1883 = vsub.s32 0, %v1882
    %v1884 = vrot.slane %v1879, %v1883
    %v1885 = vlaneseq
    %v1886 = vshrl.u32 %v1885, 7
    %v1887 = vsub.s32 1, %v1886
    %v1888 = vrot.slane %v1879, %v1887
    %v1891 = vmul.f32 %v890, %v1884
    %v1892 = vmul.f32 %v891, %v1888
    %v1893 = vadd.f32 %v1723, %v1891
    %v1894 = vadd.f32 %v1724, %v1892
    %s1895 = scalar_lea.vmem %s2, 99
    %v1896 = vld [vmem:[%s1895] ss:$8 sm:$0x3]
    %v1898 = vlaneseq
    %v1899 = vshrl.u32 %v1898, 7
    %v1900 = vsub.s32 0, %v1899
    %v1901 = vrot.slane %v1896, %v1900
    %v1902 = vlaneseq
    %v1903 = vshrl.u32 %v1902, 7
    %v1904 = vsub.s32 1, %v1903
    %v1905 = vrot.slane %v1896, %v1904
    %v1908 = vmul.f32 %v890, %v1901
    %v1909 = vmul.f32 %v891, %v1905
    %v1910 = vadd.f32 %v1740, %v1908
    %v1911 = vadd.f32 %v1741, %v1909
    %s1912 = scalar_lea.vmem %s2, 100
    %v1913 = vld [vmem:[%s1912] ss:$8 sm:$0x3]
    %v1915 = vlaneseq
    %v1916 = vshrl.u32 %v1915, 7
    %v1917 = vsub.s32 0, %v1916
    %v1918 = vrot.slane %v1913, %v1917
    %v1919 = vlaneseq
    %v1920 = vshrl.u32 %v1919, 7
    %v1921 = vsub.s32 1, %v1920
    %v1922 = vrot.slane %v1913, %v1921
    %v1925 = vmul.f32 %v890, %v1918
    %v1926 = vmul.f32 %v891, %v1922
    %v1927 = vadd.f32 %v1757, %v1925
    %v1928 = vadd.f32 %v1758, %v1926
    %s1929 = scalar_lea.vmem %s2, 101
    %v1930 = vld [vmem:[%s1929] ss:$8 sm:$0x3]
    %v1932 = vlaneseq
    %v1933 = vshrl.u32 %v1932, 7
    %v1934 = vsub.s32 0, %v1933
    %v1935 = vrot.slane %v1930, %v1934
    %v1936 = vlaneseq
    %v1937 = vshrl.u32 %v1936, 7
    %v1938 = vsub.s32 1, %v1937
    %v1939 = vrot.slane %v1930, %v1938
    %v1942 = vmul.f32 %v890, %v1935
    %v1943 = vmul.f32 %v891, %v1939
    %v1944 = vadd.f32 %v1774, %v1942
    %v1945 = vadd.f32 %v1775, %v1943
    %s1946 = scalar_lea.vmem %s2, 102
    %v1947 = vld [vmem:[%s1946] ss:$8 sm:$0x3]
    %v1949 = vlaneseq
    %v1950 = vshrl.u32 %v1949, 7
    %v1951 = vsub.s32 0, %v1950
    %v1952 = vrot.slane %v1947, %v1951
    %v1953 = vlaneseq
    %v1954 = vshrl.u32 %v1953, 7
    %v1955 = vsub.s32 1, %v1954
    %v1956 = vrot.slane %v1947, %v1955
    %v1959 = vmul.f32 %v890, %v1952
    %v1960 = vmul.f32 %v891, %v1956
    %v1961 = vadd.f32 %v1791, %v1959
    %v1962 = vadd.f32 %v1792, %v1960
    %s1963 = scalar_lea.vmem %s2, 103
    %v1964 = vld [vmem:[%s1963] ss:$8 sm:$0x3]
    %v1966 = vlaneseq
    %v1967 = vshrl.u32 %v1966, 7
    %v1968 = vsub.s32 0, %v1967
    %v1969 = vrot.slane %v1964, %v1968
    %v1970 = vlaneseq
    %v1971 = vshrl.u32 %v1970, 7
    %v1972 = vsub.s32 1, %v1971
    %v1973 = vrot.slane %v1964, %v1972
    %v1976 = vmul.f32 %v890, %v1969
    %v1977 = vmul.f32 %v891, %v1973
    %v1978 = vadd.f32 %v1808, %v1976
    %v1979 = vadd.f32 %v1809, %v1977
    %s1980 = scalar_lea.vmem %s2, 112
    %v1981 = vld [vmem:[%s1980] ss:$8 sm:$0x3]
    %v1983 = vlaneseq
    %v1984 = vshrl.u32 %v1983, 7
    %v1985 = vsub.s32 0, %v1984
    %v1986 = vrot.slane %v1981, %v1985
    %v1987 = vlaneseq
    %v1988 = vshrl.u32 %v1987, 7
    %v1989 = vsub.s32 1, %v1988
    %v1990 = vrot.slane %v1981, %v1989
    %v1993 = vmul.f32 %v890, %v1986
    %v1994 = vmul.f32 %v891, %v1990
    %v1995 = vadd.f32 %v1825, %v1993
    %v1996 = vadd.f32 %v1826, %v1994
    %s1997 = scalar_lea.vmem %s2, 113
    %v1998 = vld [vmem:[%s1997] ss:$8 sm:$0x3]
    %v2000 = vlaneseq
    %v2001 = vshrl.u32 %v2000, 7
    %v2002 = vsub.s32 0, %v2001
    %v2003 = vrot.slane %v1998, %v2002
    %v2004 = vlaneseq
    %v2005 = vshrl.u32 %v2004, 7
    %v2006 = vsub.s32 1, %v2005
    %v2007 = vrot.slane %v1998, %v2006
    %v2010 = vmul.f32 %v890, %v2003
    %v2011 = vmul.f32 %v891, %v2007
    %v2012 = vadd.f32 %v1842, %v2010
    %v2013 = vadd.f32 %v1843, %v2011
    %s2014 = scalar_lea.vmem %s2, 114
    %v2015 = vld [vmem:[%s2014] ss:$8 sm:$0x3]
    %v2017 = vlaneseq
    %v2018 = vshrl.u32 %v2017, 7
    %v2019 = vsub.s32 0, %v2018
    %v2020 = vrot.slane %v2015, %v2019
    %v2021 = vlaneseq
    %v2022 = vshrl.u32 %v2021, 7
    %v2023 = vsub.s32 1, %v2022
    %v2024 = vrot.slane %v2015, %v2023
    %v2027 = vmul.f32 %v890, %v2020
    %v2028 = vmul.f32 %v891, %v2024
    %v2029 = vadd.f32 %v1859, %v2027
    %v2030 = vadd.f32 %v1860, %v2028
    %s2031 = scalar_lea.vmem %s2, 115
    %v2032 = vld [vmem:[%s2031] ss:$8 sm:$0x3]
    %v2034 = vlaneseq
    %v2035 = vshrl.u32 %v2034, 7
    %v2036 = vsub.s32 0, %v2035
    %v2037 = vrot.slane %v2032, %v2036
    %v2038 = vlaneseq
    %v2039 = vshrl.u32 %v2038, 7
    %v2040 = vsub.s32 1, %v2039
    %v2041 = vrot.slane %v2032, %v2040
    %v2044 = vmul.f32 %v890, %v2037
    %v2045 = vmul.f32 %v891, %v2041
    %v2046 = vadd.f32 %v1876, %v2044
    %v2047 = vadd.f32 %v1877, %v2045
    %s2048 = scalar_lea.vmem %s2, 116
    %v2049 = vld [vmem:[%s2048] ss:$8 sm:$0x3]
    %v2051 = vlaneseq
    %v2052 = vshrl.u32 %v2051, 7
    %v2053 = vsub.s32 0, %v2052
    %v2054 = vrot.slane %v2049, %v2053
    %v2055 = vlaneseq
    %v2056 = vshrl.u32 %v2055, 7
    %v2057 = vsub.s32 1, %v2056
    %v2058 = vrot.slane %v2049, %v2057
    %v2061 = vmul.f32 %v892, %v2054
    %v2062 = vmul.f32 %v893, %v2058
    %v2063 = vadd.f32 %v1893, %v2061
    %v2064 = vadd.f32 %v1894, %v2062
    %s2065 = scalar_lea.vmem %s2, 117
    %v2066 = vld [vmem:[%s2065] ss:$8 sm:$0x3]
    %v2068 = vlaneseq
    %v2069 = vshrl.u32 %v2068, 7
    %v2070 = vsub.s32 0, %v2069
    %v2071 = vrot.slane %v2066, %v2070
    %v2072 = vlaneseq
    %v2073 = vshrl.u32 %v2072, 7
    %v2074 = vsub.s32 1, %v2073
    %v2075 = vrot.slane %v2066, %v2074
    %v2078 = vmul.f32 %v892, %v2071
    %v2079 = vmul.f32 %v893, %v2075
    %v2080 = vadd.f32 %v1910, %v2078
    %v2081 = vadd.f32 %v1911, %v2079
    %s2082 = scalar_lea.vmem %s2, 118
    %v2083 = vld [vmem:[%s2082] ss:$8 sm:$0x3]
    %v2085 = vlaneseq
    %v2086 = vshrl.u32 %v2085, 7
    %v2087 = vsub.s32 0, %v2086
    %v2088 = vrot.slane %v2083, %v2087
    %v2089 = vlaneseq
    %v2090 = vshrl.u32 %v2089, 7
    %v2091 = vsub.s32 1, %v2090
    %v2092 = vrot.slane %v2083, %v2091
    %v2095 = vmul.f32 %v892, %v2088
    %v2096 = vmul.f32 %v893, %v2092
    %v2097 = vadd.f32 %v1927, %v2095
    %v2098 = vadd.f32 %v1928, %v2096
    %s2099 = scalar_lea.vmem %s2, 119
    %v2100 = vld [vmem:[%s2099] ss:$8 sm:$0x3]
    %v2102 = vlaneseq
    %v2103 = vshrl.u32 %v2102, 7
    %v2104 = vsub.s32 0, %v2103
    %v2105 = vrot.slane %v2100, %v2104
    %v2106 = vlaneseq
    %v2107 = vshrl.u32 %v2106, 7
    %v2108 = vsub.s32 1, %v2107
    %v2109 = vrot.slane %v2100, %v2108
    %v2112 = vmul.f32 %v892, %v2105
    %v2113 = vmul.f32 %v893, %v2109
    %v2114 = vadd.f32 %v1944, %v2112
    %v2115 = vadd.f32 %v1945, %v2113
    %s2116 = scalar_lea.vmem %s2, 128
    %v2117 = vld [vmem:[%s2116] ss:$8 sm:$0x3]
    %v2119 = vlaneseq
    %v2120 = vshrl.u32 %v2119, 7
    %v2121 = vsub.s32 0, %v2120
    %v2122 = vrot.slane %v2117, %v2121
    %v2123 = vlaneseq
    %v2124 = vshrl.u32 %v2123, 7
    %v2125 = vsub.s32 1, %v2124
    %v2126 = vrot.slane %v2117, %v2125
    %v2129 = vmul.f32 %v892, %v2122
    %v2130 = vmul.f32 %v893, %v2126
    %v2131 = vadd.f32 %v1961, %v2129
    %v2132 = vadd.f32 %v1962, %v2130
    %s2133 = scalar_lea.vmem %s2, 129
    %v2134 = vld [vmem:[%s2133] ss:$8 sm:$0x3]
    %v2136 = vlaneseq
    %v2137 = vshrl.u32 %v2136, 7
    %v2138 = vsub.s32 0, %v2137
    %v2139 = vrot.slane %v2134, %v2138
    %v2140 = vlaneseq
    %v2141 = vshrl.u32 %v2140, 7
    %v2142 = vsub.s32 1, %v2141
    %v2143 = vrot.slane %v2134, %v2142
    %v2146 = vmul.f32 %v892, %v2139
    %v2147 = vmul.f32 %v893, %v2143
    %v2148 = vadd.f32 %v1978, %v2146
    %v2149 = vadd.f32 %v1979, %v2147
    %s2150 = scalar_lea.vmem %s2, 130
    %v2151 = vld [vmem:[%s2150] ss:$8 sm:$0x3]
    %v2153 = vlaneseq
    %v2154 = vshrl.u32 %v2153, 7
    %v2155 = vsub.s32 0, %v2154
    %v2156 = vrot.slane %v2151, %v2155
    %v2157 = vlaneseq
    %v2158 = vshrl.u32 %v2157, 7
    %v2159 = vsub.s32 1, %v2158
    %v2160 = vrot.slane %v2151, %v2159
    %v2163 = vmul.f32 %v892, %v2156
    %v2164 = vmul.f32 %v893, %v2160
    %v2165 = vadd.f32 %v1995, %v2163
    %v2166 = vadd.f32 %v1996, %v2164
    %s2167 = scalar_lea.vmem %s2, 131
    %v2168 = vld [vmem:[%s2167] ss:$8 sm:$0x3]
    %v2170 = vlaneseq
    %v2171 = vshrl.u32 %v2170, 7
    %v2172 = vsub.s32 0, %v2171
    %v2173 = vrot.slane %v2168, %v2172
    %v2174 = vlaneseq
    %v2175 = vshrl.u32 %v2174, 7
    %v2176 = vsub.s32 1, %v2175
    %v2177 = vrot.slane %v2168, %v2176
    %v2180 = vmul.f32 %v892, %v2173
    %v2181 = vmul.f32 %v893, %v2177
    %v2182 = vadd.f32 %v2012, %v2180
    %v2183 = vadd.f32 %v2013, %v2181
    %s2184 = scalar_lea.vmem %s2, 132
    %v2185 = vld [vmem:[%s2184] ss:$8 sm:$0x3]
    %v2187 = vlaneseq
    %v2188 = vshrl.u32 %v2187, 7
    %v2189 = vsub.s32 0, %v2188
    %v2190 = vrot.slane %v2185, %v2189
    %v2191 = vlaneseq
    %v2192 = vshrl.u32 %v2191, 7
    %v2193 = vsub.s32 1, %v2192
    %v2194 = vrot.slane %v2185, %v2193
    %v2197 = vmul.f32 %v892, %v2190
    %v2198 = vmul.f32 %v893, %v2194
    %v2199 = vadd.f32 %v2029, %v2197
    %v2200 = vadd.f32 %v2030, %v2198
    %s2201 = scalar_lea.vmem %s2, 133
    %v2202 = vld [vmem:[%s2201] ss:$8 sm:$0x3]
    %v2204 = vlaneseq
    %v2205 = vshrl.u32 %v2204, 7
    %v2206 = vsub.s32 0, %v2205
    %v2207 = vrot.slane %v2202, %v2206
    %v2208 = vlaneseq
    %v2209 = vshrl.u32 %v2208, 7
    %v2210 = vsub.s32 1, %v2209
    %v2211 = vrot.slane %v2202, %v2210
    %v2214 = vmul.f32 %v892, %v2207
    %v2215 = vmul.f32 %v893, %v2211
    %v2216 = vadd.f32 %v2046, %v2214
    %v2217 = vadd.f32 %v2047, %v2215
    %s2218 = scalar_lea.vmem %s2, 134
    %v2219 = vld [vmem:[%s2218] ss:$8 sm:$0x3]
    %v2221 = vlaneseq
    %v2222 = vshrl.u32 %v2221, 7
    %v2223 = vsub.s32 0, %v2222
    %v2224 = vrot.slane %v2219, %v2223
    %v2225 = vlaneseq
    %v2226 = vshrl.u32 %v2225, 7
    %v2227 = vsub.s32 1, %v2226
    %v2228 = vrot.slane %v2219, %v2227
    %v2231 = vmul.f32 %v894, %v2224
    %v2232 = vmul.f32 %v895, %v2228
    %v2233 = vadd.f32 %v2063, %v2231
    %v2234 = vadd.f32 %v2064, %v2232
    %s2235 = scalar_lea.vmem %s2, 135
    %v2236 = vld [vmem:[%s2235] ss:$8 sm:$0x3]
    %v2238 = vlaneseq
    %v2239 = vshrl.u32 %v2238, 7
    %v2240 = vsub.s32 0, %v2239
    %v2241 = vrot.slane %v2236, %v2240
    %v2242 = vlaneseq
    %v2243 = vshrl.u32 %v2242, 7
    %v2244 = vsub.s32 1, %v2243
    %v2245 = vrot.slane %v2236, %v2244
    %v2248 = vmul.f32 %v894, %v2241
    %v2249 = vmul.f32 %v895, %v2245
    %v2250 = vadd.f32 %v2080, %v2248
    %v2251 = vadd.f32 %v2081, %v2249
    %s2252 = scalar_lea.vmem %s2, 144
    %v2253 = vld [vmem:[%s2252] ss:$8 sm:$0x3]
    %v2255 = vlaneseq
    %v2256 = vshrl.u32 %v2255, 7
    %v2257 = vsub.s32 0, %v2256
    %v2258 = vrot.slane %v2253, %v2257
    %v2259 = vlaneseq
    %v2260 = vshrl.u32 %v2259, 7
    %v2261 = vsub.s32 1, %v2260
    %v2262 = vrot.slane %v2253, %v2261
    %v2265 = vmul.f32 %v894, %v2258
    %v2266 = vmul.f32 %v895, %v2262
    %v2267 = vadd.f32 %v2097, %v2265
    %v2268 = vadd.f32 %v2098, %v2266
    %s2269 = scalar_lea.vmem %s2, 145
    %v2270 = vld [vmem:[%s2269] ss:$8 sm:$0x3]
    %v2272 = vlaneseq
    %v2273 = vshrl.u32 %v2272, 7
    %v2274 = vsub.s32 0, %v2273
    %v2275 = vrot.slane %v2270, %v2274
    %v2276 = vlaneseq
    %v2277 = vshrl.u32 %v2276, 7
    %v2278 = vsub.s32 1, %v2277
    %v2279 = vrot.slane %v2270, %v2278
    %v2282 = vmul.f32 %v894, %v2275
    %v2283 = vmul.f32 %v895, %v2279
    %v2284 = vadd.f32 %v2114, %v2282
    %v2285 = vadd.f32 %v2115, %v2283
    %s2286 = scalar_lea.vmem %s2, 146
    %v2287 = vld [vmem:[%s2286] ss:$8 sm:$0x3]
    %v2289 = vlaneseq
    %v2290 = vshrl.u32 %v2289, 7
    %v2291 = vsub.s32 0, %v2290
    %v2292 = vrot.slane %v2287, %v2291
    %v2293 = vlaneseq
    %v2294 = vshrl.u32 %v2293, 7
    %v2295 = vsub.s32 1, %v2294
    %v2296 = vrot.slane %v2287, %v2295
    %v2299 = vmul.f32 %v894, %v2292
    %v2300 = vmul.f32 %v895, %v2296
    %v2301 = vadd.f32 %v2131, %v2299
    %v2302 = vadd.f32 %v2132, %v2300
    %s2303 = scalar_lea.vmem %s2, 147
    %v2304 = vld [vmem:[%s2303] ss:$8 sm:$0x3]
    %v2306 = vlaneseq
    %v2307 = vshrl.u32 %v2306, 7
    %v2308 = vsub.s32 0, %v2307
    %v2309 = vrot.slane %v2304, %v2308
    %v2310 = vlaneseq
    %v2311 = vshrl.u32 %v2310, 7
    %v2312 = vsub.s32 1, %v2311
    %v2313 = vrot.slane %v2304, %v2312
    %v2316 = vmul.f32 %v894, %v2309
    %v2317 = vmul.f32 %v895, %v2313
    %v2318 = vadd.f32 %v2148, %v2316
    %v2319 = vadd.f32 %v2149, %v2317
    %s2320 = scalar_lea.vmem %s2, 148
    %v2321 = vld [vmem:[%s2320] ss:$8 sm:$0x3]
    %v2323 = vlaneseq
    %v2324 = vshrl.u32 %v2323, 7
    %v2325 = vsub.s32 0, %v2324
    %v2326 = vrot.slane %v2321, %v2325
    %v2327 = vlaneseq
    %v2328 = vshrl.u32 %v2327, 7
    %v2329 = vsub.s32 1, %v2328
    %v2330 = vrot.slane %v2321, %v2329
    %v2333 = vmul.f32 %v894, %v2326
    %v2334 = vmul.f32 %v895, %v2330
    %v2335 = vadd.f32 %v2165, %v2333
    %v2336 = vadd.f32 %v2166, %v2334
    %s2337 = scalar_lea.vmem %s2, 149
    %v2338 = vld [vmem:[%s2337] ss:$8 sm:$0x3]
    %v2340 = vlaneseq
    %v2341 = vshrl.u32 %v2340, 7
    %v2342 = vsub.s32 0, %v2341
    %v2343 = vrot.slane %v2338, %v2342
    %v2344 = vlaneseq
    %v2345 = vshrl.u32 %v2344, 7
    %v2346 = vsub.s32 1, %v2345
    %v2347 = vrot.slane %v2338, %v2346
    %v2350 = vmul.f32 %v894, %v2343
    %v2351 = vmul.f32 %v895, %v2347
    %v2352 = vadd.f32 %v2182, %v2350
    %v2353 = vadd.f32 %v2183, %v2351
    %s2354 = scalar_lea.vmem %s2, 150
    %v2355 = vld [vmem:[%s2354] ss:$8 sm:$0x3]
    %v2357 = vlaneseq
    %v2358 = vshrl.u32 %v2357, 7
    %v2359 = vsub.s32 0, %v2358
    %v2360 = vrot.slane %v2355, %v2359
    %v2361 = vlaneseq
    %v2362 = vshrl.u32 %v2361, 7
    %v2363 = vsub.s32 1, %v2362
    %v2364 = vrot.slane %v2355, %v2363
    %v2367 = vmul.f32 %v894, %v2360
    %v2368 = vmul.f32 %v895, %v2364
    %v2369 = vadd.f32 %v2199, %v2367
    %v2370 = vadd.f32 %v2200, %v2368
    %s2371 = scalar_lea.vmem %s2, 151
    %v2372 = vld [vmem:[%s2371] ss:$8 sm:$0x3]
    %v2374 = vlaneseq
    %v2375 = vshrl.u32 %v2374, 7
    %v2376 = vsub.s32 0, %v2375
    %v2377 = vrot.slane %v2372, %v2376
    %v2378 = vlaneseq
    %v2379 = vshrl.u32 %v2378, 7
    %v2380 = vsub.s32 1, %v2379
    %v2381 = vrot.slane %v2372, %v2380
    %v2384 = vmul.f32 %v894, %v2377
    %v2385 = vmul.f32 %v895, %v2381
    %v2386 = vadd.f32 %v2216, %v2384
    %v2387 = vadd.f32 %v2217, %v2385
    %s2388 = scalar_lea.vmem %s2, 160
    %v2389 = vld [vmem:[%s2388] ss:$8 sm:$0x3]
    %v2391 = vlaneseq
    %v2392 = vshrl.u32 %v2391, 7
    %v2393 = vsub.s32 0, %v2392
    %v2394 = vrot.slane %v2389, %v2393
    %v2395 = vlaneseq
    %v2396 = vshrl.u32 %v2395, 7
    %v2397 = vsub.s32 1, %v2396
    %v2398 = vrot.slane %v2389, %v2397
    %v2401 = vmul.f32 %v896, %v2394
    %v2402 = vmul.f32 %v897, %v2398
    %v2403 = vadd.f32 %v2233, %v2401
    %v2404 = vadd.f32 %v2234, %v2402
    %s2405 = scalar_lea.vmem %s2, 161
    %v2406 = vld [vmem:[%s2405] ss:$8 sm:$0x3]
    %v2408 = vlaneseq
    %v2409 = vshrl.u32 %v2408, 7
    %v2410 = vsub.s32 0, %v2409
    %v2411 = vrot.slane %v2406, %v2410
    %v2412 = vlaneseq
    %v2413 = vshrl.u32 %v2412, 7
    %v2414 = vsub.s32 1, %v2413
    %v2415 = vrot.slane %v2406, %v2414
    %v2418 = vmul.f32 %v896, %v2411
    %v2419 = vmul.f32 %v897, %v2415
    %v2420 = vadd.f32 %v2250, %v2418
    %v2421 = vadd.f32 %v2251, %v2419
    %s2422 = scalar_lea.vmem %s2, 162
    %v2423 = vld [vmem:[%s2422] ss:$8 sm:$0x3]
    %v2425 = vlaneseq
    %v2426 = vshrl.u32 %v2425, 7
    %v2427 = vsub.s32 0, %v2426
    %v2428 = vrot.slane %v2423, %v2427
    %v2429 = vlaneseq
    %v2430 = vshrl.u32 %v2429, 7
    %v2431 = vsub.s32 1, %v2430
    %v2432 = vrot.slane %v2423, %v2431
    %v2435 = vmul.f32 %v896, %v2428
    %v2436 = vmul.f32 %v897, %v2432
    %v2437 = vadd.f32 %v2267, %v2435
    %v2438 = vadd.f32 %v2268, %v2436
    %s2439 = scalar_lea.vmem %s2, 163
    %v2440 = vld [vmem:[%s2439] ss:$8 sm:$0x3]
    %v2442 = vlaneseq
    %v2443 = vshrl.u32 %v2442, 7
    %v2444 = vsub.s32 0, %v2443
    %v2445 = vrot.slane %v2440, %v2444
    %v2446 = vlaneseq
    %v2447 = vshrl.u32 %v2446, 7
    %v2448 = vsub.s32 1, %v2447
    %v2449 = vrot.slane %v2440, %v2448
    %v2452 = vmul.f32 %v896, %v2445
    %v2453 = vmul.f32 %v897, %v2449
    %v2454 = vadd.f32 %v2284, %v2452
    %v2455 = vadd.f32 %v2285, %v2453
    %s2456 = scalar_lea.vmem %s2, 164
    %v2457 = vld [vmem:[%s2456] ss:$8 sm:$0x3]
    %v2459 = vlaneseq
    %v2460 = vshrl.u32 %v2459, 7
    %v2461 = vsub.s32 0, %v2460
    %v2462 = vrot.slane %v2457, %v2461
    %v2463 = vlaneseq
    %v2464 = vshrl.u32 %v2463, 7
    %v2465 = vsub.s32 1, %v2464
    %v2466 = vrot.slane %v2457, %v2465
    %v2469 = vmul.f32 %v896, %v2462
    %v2470 = vmul.f32 %v897, %v2466
    %v2471 = vadd.f32 %v2301, %v2469
    %v2472 = vadd.f32 %v2302, %v2470
    %s2473 = scalar_lea.vmem %s2, 165
    %v2474 = vld [vmem:[%s2473] ss:$8 sm:$0x3]
    %v2476 = vlaneseq
    %v2477 = vshrl.u32 %v2476, 7
    %v2478 = vsub.s32 0, %v2477
    %v2479 = vrot.slane %v2474, %v2478
    %v2480 = vlaneseq
    %v2481 = vshrl.u32 %v2480, 7
    %v2482 = vsub.s32 1, %v2481
    %v2483 = vrot.slane %v2474, %v2482
    %v2486 = vmul.f32 %v896, %v2479
    %v2487 = vmul.f32 %v897, %v2483
    %v2488 = vadd.f32 %v2318, %v2486
    %v2489 = vadd.f32 %v2319, %v2487
    %s2490 = scalar_lea.vmem %s2, 166
    %v2491 = vld [vmem:[%s2490] ss:$8 sm:$0x3]
    %v2493 = vlaneseq
    %v2494 = vshrl.u32 %v2493, 7
    %v2495 = vsub.s32 0, %v2494
    %v2496 = vrot.slane %v2491, %v2495
    %v2497 = vlaneseq
    %v2498 = vshrl.u32 %v2497, 7
    %v2499 = vsub.s32 1, %v2498
    %v2500 = vrot.slane %v2491, %v2499
    %v2503 = vmul.f32 %v896, %v2496
    %v2504 = vmul.f32 %v897, %v2500
    %v2505 = vadd.f32 %v2335, %v2503
    %v2506 = vadd.f32 %v2336, %v2504
    %s2507 = scalar_lea.vmem %s2, 167
    %v2508 = vld [vmem:[%s2507] ss:$8 sm:$0x3]
    %v2510 = vlaneseq
    %v2511 = vshrl.u32 %v2510, 7
    %v2512 = vsub.s32 0, %v2511
    %v2513 = vrot.slane %v2508, %v2512
    %v2514 = vlaneseq
    %v2515 = vshrl.u32 %v2514, 7
    %v2516 = vsub.s32 1, %v2515
    %v2517 = vrot.slane %v2508, %v2516
    %v2520 = vmul.f32 %v896, %v2513
    %v2521 = vmul.f32 %v897, %v2517
    %v2522 = vadd.f32 %v2352, %v2520
    %v2523 = vadd.f32 %v2353, %v2521
    %s2524 = scalar_lea.vmem %s2, 176
    %v2525 = vld [vmem:[%s2524] ss:$8 sm:$0x3]
    %v2527 = vlaneseq
    %v2528 = vshrl.u32 %v2527, 7
    %v2529 = vsub.s32 0, %v2528
    %v2530 = vrot.slane %v2525, %v2529
    %v2531 = vlaneseq
    %v2532 = vshrl.u32 %v2531, 7
    %v2533 = vsub.s32 1, %v2532
    %v2534 = vrot.slane %v2525, %v2533
    %v2537 = vmul.f32 %v896, %v2530
    %v2538 = vmul.f32 %v897, %v2534
    %v2539 = vadd.f32 %v2369, %v2537
    %v2540 = vadd.f32 %v2370, %v2538
    %s2541 = scalar_lea.vmem %s2, 177
    %v2542 = vld [vmem:[%s2541] ss:$8 sm:$0x3]
    %v2544 = vlaneseq
    %v2545 = vshrl.u32 %v2544, 7
    %v2546 = vsub.s32 0, %v2545
    %v2547 = vrot.slane %v2542, %v2546
    %v2548 = vlaneseq
    %v2549 = vshrl.u32 %v2548, 7
    %v2550 = vsub.s32 1, %v2549
    %v2551 = vrot.slane %v2542, %v2550
    %v2554 = vmul.f32 %v896, %v2547
    %v2555 = vmul.f32 %v897, %v2551
    %v2556 = vadd.f32 %v2386, %v2554
    %v2557 = vadd.f32 %v2387, %v2555
    %s2558 = scalar_lea.vmem %s2, 178
    %v2559 = vld [vmem:[%s2558] ss:$8 sm:$0x3]
    %v2561 = vlaneseq
    %v2562 = vshrl.u32 %v2561, 7
    %v2563 = vsub.s32 0, %v2562
    %v2564 = vrot.slane %v2559, %v2563
    %v2565 = vlaneseq
    %v2566 = vshrl.u32 %v2565, 7
    %v2567 = vsub.s32 1, %v2566
    %v2568 = vrot.slane %v2559, %v2567
    %v2571 = vmul.f32 %v898, %v2564
    %v2572 = vmul.f32 %v899, %v2568
    %v2573 = vadd.f32 %v2403, %v2571
    %v2574 = vadd.f32 %v2404, %v2572
    %s2575 = scalar_lea.vmem %s2, 179
    %v2576 = vld [vmem:[%s2575] ss:$8 sm:$0x3]
    %v2578 = vlaneseq
    %v2579 = vshrl.u32 %v2578, 7
    %v2580 = vsub.s32 0, %v2579
    %v2581 = vrot.slane %v2576, %v2580
    %v2582 = vlaneseq
    %v2583 = vshrl.u32 %v2582, 7
    %v2584 = vsub.s32 1, %v2583
    %v2585 = vrot.slane %v2576, %v2584
    %v2588 = vmul.f32 %v898, %v2581
    %v2589 = vmul.f32 %v899, %v2585
    %v2590 = vadd.f32 %v2420, %v2588
    %v2591 = vadd.f32 %v2421, %v2589
    %s2592 = scalar_lea.vmem %s2, 180
    %v2593 = vld [vmem:[%s2592] ss:$8 sm:$0x3]
    %v2595 = vlaneseq
    %v2596 = vshrl.u32 %v2595, 7
    %v2597 = vsub.s32 0, %v2596
    %v2598 = vrot.slane %v2593, %v2597
    %v2599 = vlaneseq
    %v2600 = vshrl.u32 %v2599, 7
    %v2601 = vsub.s32 1, %v2600
    %v2602 = vrot.slane %v2593, %v2601
    %v2605 = vmul.f32 %v898, %v2598
    %v2606 = vmul.f32 %v899, %v2602
    %v2607 = vadd.f32 %v2437, %v2605
    %v2608 = vadd.f32 %v2438, %v2606
    %s2609 = scalar_lea.vmem %s2, 181
    %v2610 = vld [vmem:[%s2609] ss:$8 sm:$0x3]
    %v2612 = vlaneseq
    %v2613 = vshrl.u32 %v2612, 7
    %v2614 = vsub.s32 0, %v2613
    %v2615 = vrot.slane %v2610, %v2614
    %v2616 = vlaneseq
    %v2617 = vshrl.u32 %v2616, 7
    %v2618 = vsub.s32 1, %v2617
    %v2619 = vrot.slane %v2610, %v2618
    %v2622 = vmul.f32 %v898, %v2615
    %v2623 = vmul.f32 %v899, %v2619
    %v2624 = vadd.f32 %v2454, %v2622
    %v2625 = vadd.f32 %v2455, %v2623
    %s2626 = scalar_lea.vmem %s2, 182
    %v2627 = vld [vmem:[%s2626] ss:$8 sm:$0x3]
    %v2629 = vlaneseq
    %v2630 = vshrl.u32 %v2629, 7
    %v2631 = vsub.s32 0, %v2630
    %v2632 = vrot.slane %v2627, %v2631
    %v2633 = vlaneseq
    %v2634 = vshrl.u32 %v2633, 7
    %v2635 = vsub.s32 1, %v2634
    %v2636 = vrot.slane %v2627, %v2635
    %v2639 = vmul.f32 %v898, %v2632
    %v2640 = vmul.f32 %v899, %v2636
    %v2641 = vadd.f32 %v2471, %v2639
    %v2642 = vadd.f32 %v2472, %v2640
    %s2643 = scalar_lea.vmem %s2, 183
    %v2644 = vld [vmem:[%s2643] ss:$8 sm:$0x3]
    %v2646 = vlaneseq
    %v2647 = vshrl.u32 %v2646, 7
    %v2648 = vsub.s32 0, %v2647
    %v2649 = vrot.slane %v2644, %v2648
    %v2650 = vlaneseq
    %v2651 = vshrl.u32 %v2650, 7
    %v2652 = vsub.s32 1, %v2651
    %v2653 = vrot.slane %v2644, %v2652
    %v2656 = vmul.f32 %v898, %v2649
    %v2657 = vmul.f32 %v899, %v2653
    %v2658 = vadd.f32 %v2488, %v2656
    %v2659 = vadd.f32 %v2489, %v2657
    %s2660 = scalar_lea.vmem %s2, 192
    %v2661 = vld [vmem:[%s2660] ss:$8 sm:$0x3]
    %v2663 = vlaneseq
    %v2664 = vshrl.u32 %v2663, 7
    %v2665 = vsub.s32 0, %v2664
    %v2666 = vrot.slane %v2661, %v2665
    %v2667 = vlaneseq
    %v2668 = vshrl.u32 %v2667, 7
    %v2669 = vsub.s32 1, %v2668
    %v2670 = vrot.slane %v2661, %v2669
    %v2673 = vmul.f32 %v898, %v2666
    %v2674 = vmul.f32 %v899, %v2670
    %v2675 = vadd.f32 %v2505, %v2673
    %v2676 = vadd.f32 %v2506, %v2674
    %s2677 = scalar_lea.vmem %s2, 193
    %v2678 = vld [vmem:[%s2677] ss:$8 sm:$0x3]
    %v2680 = vlaneseq
    %v2681 = vshrl.u32 %v2680, 7
    %v2682 = vsub.s32 0, %v2681
    %v2683 = vrot.slane %v2678, %v2682
    %v2684 = vlaneseq
    %v2685 = vshrl.u32 %v2684, 7
    %v2686 = vsub.s32 1, %v2685
    %v2687 = vrot.slane %v2678, %v2686
    %v2690 = vmul.f32 %v898, %v2683
    %v2691 = vmul.f32 %v899, %v2687
    %v2692 = vadd.f32 %v2522, %v2690
    %v2693 = vadd.f32 %v2523, %v2691
    %s2694 = scalar_lea.vmem %s2, 194
    %v2695 = vld [vmem:[%s2694] ss:$8 sm:$0x3]
    %v2697 = vlaneseq
    %v2698 = vshrl.u32 %v2697, 7
    %v2699 = vsub.s32 0, %v2698
    %v2700 = vrot.slane %v2695, %v2699
    %v2701 = vlaneseq
    %v2702 = vshrl.u32 %v2701, 7
    %v2703 = vsub.s32 1, %v2702
    %v2704 = vrot.slane %v2695, %v2703
    %v2707 = vmul.f32 %v898, %v2700
    %v2708 = vmul.f32 %v899, %v2704
    %v2709 = vadd.f32 %v2539, %v2707
    %v2710 = vadd.f32 %v2540, %v2708
    %s2711 = scalar_lea.vmem %s2, 195
    %v2712 = vld [vmem:[%s2711] ss:$8 sm:$0x3]
    %v2714 = vlaneseq
    %v2715 = vshrl.u32 %v2714, 7
    %v2716 = vsub.s32 0, %v2715
    %v2717 = vrot.slane %v2712, %v2716
    %v2718 = vlaneseq
    %v2719 = vshrl.u32 %v2718, 7
    %v2720 = vsub.s32 1, %v2719
    %v2721 = vrot.slane %v2712, %v2720
    %v2724 = vmul.f32 %v898, %v2717
    %v2725 = vmul.f32 %v899, %v2721
    %v2726 = vadd.f32 %v2556, %v2724
    %v2727 = vadd.f32 %v2557, %v2725
    %v2728 = vmul.f32 %v2573, 0.01
    %v2729 = vmul.f32 %v2574, 0.01
    %v2730 = vmax.f32 %v2573, %v2728
    %v2731 = vmax.f32 %v2574, %v2729
    %v2732 = vmul.f32 %v2590, 0.01
    %v2733 = vmul.f32 %v2591, 0.01
    %v2734 = vmax.f32 %v2590, %v2732
    %v2735 = vmax.f32 %v2591, %v2733
    %v2736 = vmul.f32 %v2607, 0.01
    %v2737 = vmul.f32 %v2608, 0.01
    %v2738 = vmax.f32 %v2607, %v2736
    %v2739 = vmax.f32 %v2608, %v2737
    %v2740 = vmul.f32 %v2624, 0.01
    %v2741 = vmul.f32 %v2625, 0.01
    %v2742 = vmax.f32 %v2624, %v2740
    %v2743 = vmax.f32 %v2625, %v2741
    %v2744 = vmul.f32 %v2641, 0.01
    %v2745 = vmul.f32 %v2642, 0.01
    %v2746 = vmax.f32 %v2641, %v2744
    %v2747 = vmax.f32 %v2642, %v2745
    %v2748 = vmul.f32 %v2658, 0.01
    %v2749 = vmul.f32 %v2659, 0.01
    %v2750 = vmax.f32 %v2658, %v2748
    %v2751 = vmax.f32 %v2659, %v2749
    %v2752 = vmul.f32 %v2675, 0.01
    %v2753 = vmul.f32 %v2676, 0.01
    %v2754 = vmax.f32 %v2675, %v2752
    %v2755 = vmax.f32 %v2676, %v2753
    %v2756 = vmul.f32 %v2692, 0.01
    %v2757 = vmul.f32 %v2693, 0.01
    %v2758 = vmax.f32 %v2692, %v2756
    %v2759 = vmax.f32 %v2693, %v2757
    %v2760 = vmul.f32 %v2709, 0.01
    %v2761 = vmul.f32 %v2710, 0.01
    %v2762 = vmax.f32 %v2709, %v2760
    %v2763 = vmax.f32 %v2710, %v2761
    %v2764 = vmul.f32 %v2726, 0.01
    %v2765 = vmul.f32 %v2727, 0.01
    %v2766 = vmax.f32 %v2726, %v2764
    %v2767 = vmax.f32 %v2727, %v2765
    %v2768 = vld [vmem:[%s5] sm:$0x3]
    %v2769 = vld [vmem:[%s4] ss:$8 sm:$0x3]
    %v2771 = vlaneseq
    %v2772 = vshrl.u32 %v2771, 7
    %v2773 = vsub.s32 0, %v2772
    %v2774 = vrot.slane %v2769, %v2773
    %v2775 = vlaneseq
    %v2776 = vshrl.u32 %v2775, 7
    %v2777 = vsub.s32 1, %v2776
    %v2778 = vrot.slane %v2769, %v2777
    %v2781 = vmul.f32 %v2730, %v2774
    %v2782 = vmul.f32 %v2731, %v2778
    %v2784 = vlaneseq
    %v2785 = vshrl.u32 %v2784, 7
    %v2786 = vsub.s32 0, %v2785
    %v2787 = vrot.slane %v2768, %v2786
    %v2788 = vlaneseq
    %v2789 = vshrl.u32 %v2788, 7
    %v2790 = vsub.s32 1, %v2789
    %v2791 = vrot.slane %v2768, %v2790
    %v2794 = vadd.f32 %v2787, %v2781
    %v2795 = vadd.f32 %v2791, %v2782
    %s2796 = scalar_lea.vmem %s4, 1
    %v2797 = vld [vmem:[%s2796] ss:$8 sm:$0x3]
    %v2799 = vlaneseq
    %v2800 = vshrl.u32 %v2799, 7
    %v2801 = vsub.s32 0, %v2800
    %v2802 = vrot.slane %v2797, %v2801
    %v2803 = vlaneseq
    %v2804 = vshrl.u32 %v2803, 7
    %v2805 = vsub.s32 1, %v2804
    %v2806 = vrot.slane %v2797, %v2805
    %v2809 = vmul.f32 %v2734, %v2802
    %v2810 = vmul.f32 %v2735, %v2806
    %v2811 = vadd.f32 %v2794, %v2809
    %v2812 = vadd.f32 %v2795, %v2810
    %s2813 = scalar_lea.vmem %s4, 2
    %v2814 = vld [vmem:[%s2813] ss:$8 sm:$0x3]
    %v2816 = vlaneseq
    %v2817 = vshrl.u32 %v2816, 7
    %v2818 = vsub.s32 0, %v2817
    %v2819 = vrot.slane %v2814, %v2818
    %v2820 = vlaneseq
    %v2821 = vshrl.u32 %v2820, 7
    %v2822 = vsub.s32 1, %v2821
    %v2823 = vrot.slane %v2814, %v2822
    %v2826 = vmul.f32 %v2738, %v2819
    %v2827 = vmul.f32 %v2739, %v2823
    %v2828 = vadd.f32 %v2811, %v2826
    %v2829 = vadd.f32 %v2812, %v2827
    %s2830 = scalar_lea.vmem %s4, 3
    %v2831 = vld [vmem:[%s2830] ss:$8 sm:$0x3]
    %v2833 = vlaneseq
    %v2834 = vshrl.u32 %v2833, 7
    %v2835 = vsub.s32 0, %v2834
    %v2836 = vrot.slane %v2831, %v2835
    %v2837 = vlaneseq
    %v2838 = vshrl.u32 %v2837, 7
    %v2839 = vsub.s32 1, %v2838
    %v2840 = vrot.slane %v2831, %v2839
    %v2843 = vmul.f32 %v2742, %v2836
    %v2844 = vmul.f32 %v2743, %v2840
    %v2845 = vadd.f32 %v2828, %v2843
    %v2846 = vadd.f32 %v2829, %v2844
    %s2847 = scalar_lea.vmem %s4, 4
    %v2848 = vld [vmem:[%s2847] ss:$8 sm:$0x3]
    %v2850 = vlaneseq
    %v2851 = vshrl.u32 %v2850, 7
    %v2852 = vsub.s32 0, %v2851
    %v2853 = vrot.slane %v2848, %v2852
    %v2854 = vlaneseq
    %v2855 = vshrl.u32 %v2854, 7
    %v2856 = vsub.s32 1, %v2855
    %v2857 = vrot.slane %v2848, %v2856
    %v2860 = vmul.f32 %v2746, %v2853
    %v2861 = vmul.f32 %v2747, %v2857
    %v2862 = vadd.f32 %v2845, %v2860
    %v2863 = vadd.f32 %v2846, %v2861
    %s2864 = scalar_lea.vmem %s4, 5
    %v2865 = vld [vmem:[%s2864] ss:$8 sm:$0x3]
    %v2867 = vlaneseq
    %v2868 = vshrl.u32 %v2867, 7
    %v2869 = vsub.s32 0, %v2868
    %v2870 = vrot.slane %v2865, %v2869
    %v2871 = vlaneseq
    %v2872 = vshrl.u32 %v2871, 7
    %v2873 = vsub.s32 1, %v2872
    %v2874 = vrot.slane %v2865, %v2873
    %v2877 = vmul.f32 %v2750, %v2870
    %v2878 = vmul.f32 %v2751, %v2874
    %v2879 = vadd.f32 %v2862, %v2877
    %v2880 = vadd.f32 %v2863, %v2878
    %s2881 = scalar_lea.vmem %s4, 6
    %v2882 = vld [vmem:[%s2881] ss:$8 sm:$0x3]
    %v2884 = vlaneseq
    %v2885 = vshrl.u32 %v2884, 7
    %v2886 = vsub.s32 0, %v2885
    %v2887 = vrot.slane %v2882, %v2886
    %v2888 = vlaneseq
    %v2889 = vshrl.u32 %v2888, 7
    %v2890 = vsub.s32 1, %v2889
    %v2891 = vrot.slane %v2882, %v2890
    %v2894 = vmul.f32 %v2754, %v2887
    %v2895 = vmul.f32 %v2755, %v2891
    %v2896 = vadd.f32 %v2879, %v2894
    %v2897 = vadd.f32 %v2880, %v2895
    %s2898 = scalar_lea.vmem %s4, 7
    %v2899 = vld [vmem:[%s2898] ss:$8 sm:$0x3]
    %v2901 = vlaneseq
    %v2902 = vshrl.u32 %v2901, 7
    %v2903 = vsub.s32 0, %v2902
    %v2904 = vrot.slane %v2899, %v2903
    %v2905 = vlaneseq
    %v2906 = vshrl.u32 %v2905, 7
    %v2907 = vsub.s32 1, %v2906
    %v2908 = vrot.slane %v2899, %v2907
    %v2911 = vmul.f32 %v2758, %v2904
    %v2912 = vmul.f32 %v2759, %v2908
    %v2913 = vadd.f32 %v2896, %v2911
    %v2914 = vadd.f32 %v2897, %v2912
    %s2915 = scalar_lea.vmem %s4, 16
    %v2916 = vld [vmem:[%s2915] ss:$8 sm:$0x3]
    %v2918 = vlaneseq
    %v2919 = vshrl.u32 %v2918, 7
    %v2920 = vsub.s32 0, %v2919
    %v2921 = vrot.slane %v2916, %v2920
    %v2922 = vlaneseq
    %v2923 = vshrl.u32 %v2922, 7
    %v2924 = vsub.s32 1, %v2923
    %v2925 = vrot.slane %v2916, %v2924
    %v2928 = vmul.f32 %v2762, %v2921
    %v2929 = vmul.f32 %v2763, %v2925
    %v2930 = vadd.f32 %v2913, %v2928
    %v2931 = vadd.f32 %v2914, %v2929
    %s2932 = scalar_lea.vmem %s4, 17
    %v2933 = vld [vmem:[%s2932] ss:$8 sm:$0x3]
    %v2935 = vlaneseq
    %v2936 = vshrl.u32 %v2935, 7
    %v2937 = vsub.s32 0, %v2936
    %v2938 = vrot.slane %v2933, %v2937
    %v2939 = vlaneseq
    %v2940 = vshrl.u32 %v2939, 7
    %v2941 = vsub.s32 1, %v2940
    %v2942 = vrot.slane %v2933, %v2941
    %v2945 = vmul.f32 %v2766, %v2938
    %v2946 = vmul.f32 %v2767, %v2942
    %v2947 = vadd.f32 %v2930, %v2945
    %v2948 = vadd.f32 %v2931, %v2946
    %2949 = vst [vmem:[#allocation2] sm:$0xff] %v2947
    %2950 = vst [vmem:[#allocation2 + $0x8] sm:$0xff] %v2948
    // Predicated region
    $region26: #{parallel_decoder_pallas.1} parent=1 // pred_check
      _
    $region27: #{parallel_decoder_pallas.1} parent=1 // pred_check_branch
      %2952 = sbr.rel (0) target = $region29
    $region28: #{parallel_decoder_pallas.1} parent=1 // pred_region
      %s2954 = ssub.s32 256, 256
      %2955 = vsyncadd [#allocation3], %s2954
      %s2957 = sshll.u32 [#allocation2], 4
      %s2958 = int_to_ptr.vmem [resolvable:$true] %s2957
      %2960 = dma.vmem_to_hbm [thread:$0]  %s2958, 256, %s6, [#allocation3]
    $region29: #{parallel_decoder_pallas.1} parent=1 // pred_fallthru
      _
    // Predicated region
    $region30: #{parallel_decoder_pallas.1} parent=1 // pred_check
      _
    $region31: #{parallel_decoder_pallas.1} parent=1 // pred_check_branch
      %2962 = sbr.rel (0) target = $region33
    $region32: #{parallel_decoder_pallas.1} parent=1 // pred_region
      %2963 = dma.done [#allocation3], 256
    $region33: #{parallel_decoder_pallas.1} parent=1 // pred_fallthru
      _
    %2964 = vsyncpa [#allocation3], 1

</llo_original>
